<compile_context>
chip_gen: v7x
topology: tpu7x:2x2x1
jax: 0.10.0
libtpu: 0.0.40
codegen_flags: <defaults>
</compile_context>

<pallas_src>
import jax
import jax.numpy as jnp
from jax.experimental import pallas as pl
from jax.experimental.pallas import tpu as pltpu

H = 64     # LSTM hidden size
HP = 128   # per-gate padded width (full lane group)
BP = 8     # padded batch rows (full sublane group)


def cnn_lstm_kernel(x_ref, sp_ref, sn_ref, w1_ref, b1_ref, w2_ref, b2_ref,
                    wih_ref, whh_ref, bg_ref, wfc1_ref, bfc1_ref, wfc2_ref,
                    bfc2_ref, out_ref):
    N = x_ref.shape[0]          # L * BP  (time-major padded rows, r = t*BP + b)
    L = N // BP
    B = out_ref.shape[0]        # real batch

    x = x_ref[...]              # (N, 1)
    sp = sp_ref[...]            # (N, N): row r picks row r-BP (time t-1), zeros at t=0
    sn = sn_ref[...]            # (N, N): row r picks row r+BP (time t+1), zeros at t=L-1

    # ---- Conv1d(1 -> 64, k=3, pad=1) + ReLU, all timesteps at once ----
    x_prev = jnp.dot(sp, x, preferred_element_type=jnp.float32)
    x_next = jnp.dot(sn, x, preferred_element_type=jnp.float32)
    w1 = w1_ref[...]            # (3, 64) taps [t-1 | t | t+1]
    h1 = jnp.maximum(x_prev * w1[0:1, :] + x * w1[1:2, :] + x_next * w1[2:3, :]
                     + b1_ref[...], 0.0)                              # (N, 64)

    # ---- Conv1d(64 -> 32, k=3, pad=1) + ReLU ----
    h1_prev = jnp.dot(sp, h1, preferred_element_type=jnp.float32)
    h1_next = jnp.dot(sn, h1, preferred_element_type=jnp.float32)
    h2 = (jnp.dot(h1_prev, w2_ref[0], preferred_element_type=jnp.float32)
          + jnp.dot(h1,     w2_ref[1], preferred_element_type=jnp.float32)
          + jnp.dot(h1_next, w2_ref[2], preferred_element_type=jnp.float32)
          + b2_ref[...])
    h2 = jnp.maximum(h2, 0.0)                                         # (N, 32)

    # ---- LSTM input projection hoisted for every timestep (single matmul).
    #      b_ih + b_hh folded in; each gate sits in its own 128-lane slab. ----
    gi_all = (jnp.dot(h2, wih_ref[...], preferred_element_type=jnp.float32)
              + bg_ref[...])                                          # (N, 4*HP)

    # ---- LSTM recurrence: statically unrolled; only h @ W_hh is serial. ----
    whh = whh_ref[...]                                                # (HP, 4*HP)
    h = jnp.zeros((BP, HP), jnp.float32)
    c = jnp.zeros((BP, HP), jnp.float32)
    for t in range(L):
        gates = gi_all[t * BP:(t + 1) * BP, :] + jnp.dot(
            h, whh, preferred_element_type=jnp.float32)               # (BP, 4*HP)
        i_g = jax.nn.sigmoid(gates[:, 0 * HP:1 * HP])
        f_g = jax.nn.sigmoid(gates[:, 1 * HP:2 * HP])
        g_g = jnp.tanh(gates[:, 2 * HP:3 * HP])
        o_g = jax.nn.sigmoid(gates[:, 3 * HP:4 * HP])
        c = f_g * c + i_g * g_g
        h = o_g * jnp.tanh(c)

    # Dropout(p=0.3) is identity at inference time (eval mode).
    # ---- Linear(64 -> 32) + ReLU (zero-padded to 128 lanes) ----
    z1 = jnp.maximum(jnp.dot(h, wfc1_ref[...], preferred_element_type=jnp.float32)
                     + bfc1_ref[...], 0.0)                            # (BP, HP)
    # ---- Linear(32 -> 1) as VPU multiply + lane reduction ----
    y = jnp.sum(z1 * wfc2_ref[...], axis=-1, keepdims=True) + bfc2_ref[...]  # (BP, 1)
    out_ref[...] = y[:B, :]


def cnn_lstm_forward(x_b1l, packed):
    B, _, L = x_b1l.shape
    # batch_first (B,1,L) -> time-major rows r = t*BP + b, batch padded to BP sublanes.
    x_lb = jnp.transpose(x_b1l[:, 0, :], (1, 0))                      # (L, B)
    x_rows = jnp.zeros((L, BP), jnp.float32).at[:, :B].set(x_lb).reshape(L * BP, 1)
    vm = pl.BlockSpec(memory_space=pltpu.MemorySpace.VMEM)
    # TODO(synk): for large batch, tile B over a grid with dimension_semantics=("parallel",)
    # (v7x has 2 TensorCores) and time-chunk x via BlockSpec / emit_pipeline to respect
    # v7x's 64 MiB VMEM; at B=2 / L=16 a single program with everything VMEM-resident is best.
    return pl.pallas_call(
        cnn_lstm_kernel,
        out_shape=jax.ShapeDtypeStruct((B, 1), jnp.float32),
        in_specs=[vm] * 14,
        out_specs=vm,
    )(x_rows, packed['sp'], packed['sn'], packed['w1'], packed['b1'],
      packed['w2'], packed['b2'], packed['wih'], packed['whh'], packed['bg'],
      packed['wfc1'], packed['bfc1'], packed['wfc2'], packed['bfc2'])


def pack_params(raw, L):
    """Re-layout PyTorch-style parameters into the kernel's padded layout."""
    N = L * BP
    w1_taps = jnp.transpose(raw['conv1_w'][:, 0, :], (1, 0))          # (3, 64)
    b1 = raw['conv1_b'].reshape(1, -1)                                # (1, 64)
    w2_taps = jnp.transpose(raw['conv2_w'], (2, 1, 0))                # (3, 64, 32)
    b2 = raw['conv2_b'].reshape(1, -1)                                # (1, 32)

    def gate_pad_weight(w, in_dim, in_pad):
        out = jnp.zeros((in_pad, 4 * HP), jnp.float32)
        for g in range(4):                                            # torch order i,f,g,o
            out = out.at[:in_dim, g * HP:g * HP + H].set(w[g * H:(g + 1) * H, :].T)
        return out

    wih_p = gate_pad_weight(raw['w_ih'], 32, 32)                      # (32, 512)
    whh_p = gate_pad_weight(raw['w_hh'], H, HP)                       # (128, 512)
    b_sum = raw['b_ih'] + raw['b_hh']
    bg = jnp.zeros((1, 4 * HP), jnp.float32)
    for g in range(4):
        bg = bg.at[0, g * HP:g * HP + H].set(b_sum[g * H:(g + 1) * H])

    wfc1_p = jnp.zeros((HP, HP), jnp.float32).at[:H, :32].set(raw['fc1_w'].T)
    bfc1_p = jnp.zeros((1, HP), jnp.float32).at[0, :32].set(raw['fc1_b'])
    wfc2_p = jnp.zeros((1, HP), jnp.float32).at[0, :32].set(raw['fc2_w'][0])
    bfc2 = raw['fc2_b'].reshape(1, 1)

    sp = jnp.eye(N, k=-BP, dtype=jnp.float32)   # pick time t-1, zero-pad at t=0
    sn = jnp.eye(N, k=BP, dtype=jnp.float32)    # pick time t+1, zero-pad at t=L-1
    return dict(sp=sp, sn=sn, w1=w1_taps, b1=b1, w2=w2_taps, b2=b2,
                wih=wih_p, whh=whh_p, bg=bg, wfc1=wfc1_p, bfc1=bfc1_p,
                wfc2=wfc2_p, bfc2=bfc2)


def init_raw_params(key):
    """Deterministic params in PyTorch layout (uniform(-1/sqrt(fan), 1/sqrt(fan)))."""
    ks = jax.random.split(key, 12)

    def u(k, shape, fan_in):
        b = float(fan_in) ** -0.5
        return jax.random.uniform(k, shape, jnp.float32, -b, b)

    return {
        'conv1_w': u(ks[0], (64, 1, 3), 3),
        'conv1_b': u(ks[1], (64,), 3),
        'conv2_w': u(ks[2], (32, 64, 3), 64 * 3),
        'conv2_b': u(ks[3], (32,), 64 * 3),
        'w_ih':    u(ks[4], (4 * H, 32), H),
        'w_hh':    u(ks[5], (4 * H, H), H),
        'b_ih':    u(ks[6], (4 * H,), H),
        'b_hh':    u(ks[7], (4 * H,), H),
        'fc1_w':   u(ks[8], (32, H), H),
        'fc1_b':   u(ks[9], (32,), H),
        'fc2_w':   u(ks[10], (1, 32), 32),
        'fc2_b':   u(ks[11], (1,), 32),
    }


def reference_forward(x, raw):
    """Pure-JAX reference of the PyTorch forward (eval mode) for verification."""
    B, _, L = x.shape

    def conv1d(xi, w, b):          # xi (B,Cin,L), w (Cout,Cin,3), pad=1
        xp = jnp.pad(xi, ((0, 0), (0, 0), (1, 1)))
        out = b[None, :, None]
        for k in range(3):
            out = out + jnp.einsum('bil,oi->bol', xp[:, :, k:k + L], w[:, :, k])
        return out

    h1 = jax.nn.relu(conv1d(x, raw['conv1_w'], raw['conv1_b']))       # (B,64,L)
    h2 = jax.nn.relu(conv1d(h1, raw['conv2_w'], raw['conv2_b']))      # (B,32,L)
    seq = jnp.transpose(h2, (0, 2, 1))                                # (B,L,32)

    h = jnp.zeros((B, H), jnp.float32)
    c = jnp.zeros((B, H), jnp.float32)
    for t in range(L):
        gates = (seq[:, t, :] @ raw['w_ih'].T + raw['b_ih']
                 + h @ raw['w_hh'].T + raw['b_hh'])                   # (B, 4H)
        i = jax.nn.sigmoid(gates[:, 0 * H:1 * H])
        f = jax.nn.sigmoid(gates[:, 1 * H:2 * H])
        g = jnp.tanh(gates[:, 2 * H:3 * H])
        o = jax.nn.sigmoid(gates[:, 3 * H:4 * H])
        c = f * c + i * g
        h = o * jnp.tanh(c)

    z = jax.nn.relu(h @ raw['fc1_w'].T + raw['fc1_b'])
    return z @ raw['fc2_w'].T + raw['fc2_b']


if __name__ == "__main__":
    B, L = 2, 16   # batch, sequence length (the Conv1d/LSTM time axis)
    key = jax.random.PRNGKey(0)
    kx, kp = jax.random.split(key)
    x = jax.random.normal(kx, (B, 1, L), jnp.float32)

    raw = init_raw_params(kp)
    packed = pack_params(raw, L)

    out = jax.block_until_ready(cnn_lstm_forward(x, packed))
    ref = jax.block_until_ready(reference_forward(x, raw))

    assert out.shape == (B, 1)
    assert jnp.allclose(out, ref, atol=1e-4, rtol=1e-4), (out, ref)
    print("KERNEL_OK")
</pallas_src>

<mosaic_0001>
module attributes {stable_mosaic.version = 11 : i64} {
  func.func @cnn_lstm_kernel(%arg0: memref<128x1xf32, #tpu.memory_space<vmem>>, %arg1: memref<128x128xf32, #tpu.memory_space<vmem>>, %arg2: memref<128x128xf32, #tpu.memory_space<vmem>>, %arg3: memref<3x64xf32, #tpu.memory_space<vmem>>, %arg4: memref<1x64xf32, #tpu.memory_space<vmem>>, %arg5: memref<3x64x32xf32, #tpu.memory_space<vmem>>, %arg6: memref<1x32xf32, #tpu.memory_space<vmem>>, %arg7: memref<32x512xf32, #tpu.memory_space<vmem>>, %arg8: memref<128x512xf32, #tpu.memory_space<vmem>>, %arg9: memref<1x512xf32, #tpu.memory_space<vmem>>, %arg10: memref<128x128xf32, #tpu.memory_space<vmem>>, %arg11: memref<1x128xf32, #tpu.memory_space<vmem>>, %arg12: memref<1x128xf32, #tpu.memory_space<vmem>>, %arg13: memref<1x1xf32, #tpu.memory_space<vmem>>, %arg14: memref<2x1xf32, #tpu.memory_space<vmem>>) attributes {dimension_semantics = [], scalar_prefetch = 0 : i64, scratch_operands = 0 : i64, tpu.core_type = #tpu.core_type<tc>} {
    %c0 = arith.constant 0 : index
    %c0_0 = arith.constant 0 : index
    %0 = vector.load %arg0[%c0, %c0_0] : memref<128x1xf32, #tpu.memory_space<vmem>>, vector<128x1xf32>
    %c0_1 = arith.constant 0 : index
    %c0_2 = arith.constant 0 : index
    %1 = vector.load %arg1[%c0_1, %c0_2] : memref<128x128xf32, #tpu.memory_space<vmem>>, vector<128x128xf32>
    %c0_3 = arith.constant 0 : index
    %c0_4 = arith.constant 0 : index
    %2 = vector.load %arg2[%c0_3, %c0_4] : memref<128x128xf32, #tpu.memory_space<vmem>>, vector<128x128xf32>
    %cst = arith.constant dense<0.000000e+00> : vector<128x1xf32>
    %3 = tpu.matmul %1, %0, %cst {dimension_numbers = #tpu.dot_dimension_numbers<[1], [0], [0], [1], [0, 0, 1, 1], [], []>} : vector<128x128xf32>, vector<128x1xf32>, vector<128x1xf32> -> vector<128x1xf32>
    %cst_5 = arith.constant dense<0.000000e+00> : vector<128x1xf32>
    %4 = tpu.matmul %2, %0, %cst_5 {dimension_numbers = #tpu.dot_dimension_numbers<[1], [0], [0], [1], [0, 0, 1, 1], [], []>} : vector<128x128xf32>, vector<128x1xf32>, vector<128x1xf32> -> vector<128x1xf32>
    %c0_6 = arith.constant 0 : index
    %c0_7 = arith.constant 0 : index
    %5 = vector.load %arg3[%c0_6, %c0_7] : memref<3x64xf32, #tpu.memory_space<vmem>>, vector<3x64xf32>
    %6 = vector.extract_strided_slice %5 {offsets = [0, 0], sizes = [1, 64], strides = [1, 1]} : vector<3x64xf32> to vector<1x64xf32>
    %7 = vector.broadcast %3 : vector<128x1xf32> to vector<128x64xf32>
    %8 = vector.broadcast %6 : vector<1x64xf32> to vector<128x64xf32>
    %9 = arith.mulf %7, %8 : vector<128x64xf32>
    %10 = vector.extract_strided_slice %5 {offsets = [1, 0], sizes = [1, 64], strides = [1, 1]} : vector<3x64xf32> to vector<1x64xf32>
    %11 = vector.broadcast %0 : vector<128x1xf32> to vector<128x64xf32>
    %12 = vector.broadcast %10 : vector<1x64xf32> to vector<128x64xf32>
    %13 = arith.mulf %11, %12 : vector<128x64xf32>
    %14 = arith.addf %9, %13 : vector<128x64xf32>
    %15 = vector.extract_strided_slice %5 {offsets = [2, 0], sizes = [1, 64], strides = [1, 1]} : vector<3x64xf32> to vector<1x64xf32>
    %16 = vector.broadcast %4 : vector<128x1xf32> to vector<128x64xf32>
    %17 = vector.broadcast %15 : vector<1x64xf32> to vector<128x64xf32>
    %18 = arith.mulf %16, %17 : vector<128x64xf32>
    %19 = arith.addf %14, %18 : vector<128x64xf32>
    %c0_8 = arith.constant 0 : index
    %c0_9 = arith.constant 0 : index
    %20 = vector.load %arg4[%c0_8, %c0_9] : memref<1x64xf32, #tpu.memory_space<vmem>>, vector<1x64xf32>
    %21 = vector.broadcast %20 : vector<1x64xf32> to vector<128x64xf32>
    %22 = arith.addf %19, %21 : vector<128x64xf32>
    %cst_10 = arith.constant 0.000000e+00 : f32
    %23 = vector.broadcast %cst_10 : f32 to vector<128x64xf32>
    %24 = arith.maximumf %22, %23 : vector<128x64xf32>
    %cst_11 = arith.constant dense<0.000000e+00> : vector<128x64xf32>
    %25 = tpu.matmul %1, %24, %cst_11 {dimension_numbers = #tpu.dot_dimension_numbers<[1], [0], [0], [1], [0, 0, 1, 1], [], []>} : vector<128x128xf32>, vector<128x64xf32>, vector<128x64xf32> -> vector<128x64xf32>
    %cst_12 = arith.constant dense<0.000000e+00> : vector<128x64xf32>
    %26 = tpu.matmul %2, %24, %cst_12 {dimension_numbers = #tpu.dot_dimension_numbers<[1], [0], [0], [1], [0, 0, 1, 1], [], []>} : vector<128x128xf32>, vector<128x64xf32>, vector<128x64xf32> -> vector<128x64xf32>
    %c0_13 = arith.constant 0 : index
    %c0_14 = arith.constant 0 : index
    %c0_15 = arith.constant 0 : index
    %27 = vector.load %arg5[%c0_13, %c0_14, %c0_15] : memref<3x64x32xf32, #tpu.memory_space<vmem>>, vector<1x64x32xf32>
    %28 = vector.shape_cast %27 : vector<1x64x32xf32> to vector<64x32xf32>
    %cst_16 = arith.constant dense<0.000000e+00> : vector<128x32xf32>
    %29 = tpu.matmul %25, %28, %cst_16 {dimension_numbers = #tpu.dot_dimension_numbers<[1], [0], [0], [1], [0, 0, 1, 1], [], []>} : vector<128x64xf32>, vector<64x32xf32>, vector<128x32xf32> -> vector<128x32xf32>
    %c1 = arith.constant 1 : index
    %c0_17 = arith.constant 0 : index
    %c0_18 = arith.constant 0 : index
    %30 = vector.load %arg5[%c1, %c0_17, %c0_18] : memref<3x64x32xf32, #tpu.memory_space<vmem>>, vector<1x64x32xf32>
    %31 = vector.shape_cast %30 : vector<1x64x32xf32> to vector<64x32xf32>
    %cst_19 = arith.constant dense<0.000000e+00> : vector<128x32xf32>
    %32 = tpu.matmul %24, %31, %cst_19 {dimension_numbers = #tpu.dot_dimension_numbers<[1], [0], [0], [1], [0, 0, 1, 1], [], []>} : vector<128x64xf32>, vector<64x32xf32>, vector<128x32xf32> -> vector<128x32xf32>
    %33 = arith.addf %29, %32 : vector<128x32xf32>
    %c2 = arith.constant 2 : index
    %c0_20 = arith.constant 0 : index
    %c0_21 = arith.constant 0 : index
    %34 = vector.load %arg5[%c2, %c0_20, %c0_21] : memref<3x64x32xf32, #tpu.memory_space<vmem>>, vector<1x64x32xf32>
    %35 = vector.shape_cast %34 : vector<1x64x32xf32> to vector<64x32xf32>
    %cst_22 = arith.constant dense<0.000000e+00> : vector<128x32xf32>
    %36 = tpu.matmul %26, %35, %cst_22 {dimension_numbers = #tpu.dot_dimension_numbers<[1], [0], [0], [1], [0, 0, 1, 1], [], []>} : vector<128x64xf32>, vector<64x32xf32>, vector<128x32xf32> -> vector<128x32xf32>
    %37 = arith.addf %33, %36 : vector<128x32xf32>
    %c0_23 = arith.constant 0 : index
    %c0_24 = arith.constant 0 : index
    %38 = vector.load %arg6[%c0_23, %c0_24] : memref<1x32xf32, #tpu.memory_space<vmem>>, vector<1x32xf32>
    %39 = vector.broadcast %38 : vector<1x32xf32> to vector<128x32xf32>
    %40 = arith.addf %37, %39 : vector<128x32xf32>
    %cst_25 = arith.constant 0.000000e+00 : f32
    %41 = vector.broadcast %cst_25 : f32 to vector<128x32xf32>
    %42 = arith.maximumf %40, %41 : vector<128x32xf32>
    %c0_26 = arith.constant 0 : index
    %c0_27 = arith.constant 0 : index
    %43 = vector.load %arg7[%c0_26, %c0_27] : memref<32x512xf32, #tpu.memory_space<vmem>>, vector<32x512xf32>
    %cst_28 = arith.constant dense<0.000000e+00> : vector<128x512xf32>
    %44 = tpu.matmul %42, %43, %cst_28 {dimension_numbers = #tpu.dot_dimension_numbers<[1], [0], [0], [1], [0, 0, 1, 1], [], []>} : vector<128x32xf32>, vector<32x512xf32>, vector<128x512xf32> -> vector<128x512xf32>
    %c0_29 = arith.constant 0 : index
    %c0_30 = arith.constant 0 : index
    %45 = vector.load %arg9[%c0_29, %c0_30] : memref<1x512xf32, #tpu.memory_space<vmem>>, vector<1x512xf32>
    %46 = vector.broadcast %45 : vector<1x512xf32> to vector<128x512xf32>
    %47 = arith.addf %44, %46 : vector<128x512xf32>
    %c0_31 = arith.constant 0 : index
    %c0_32 = arith.constant 0 : index
    %48 = vector.load %arg8[%c0_31, %c0_32] : memref<128x512xf32, #tpu.memory_space<vmem>>, vector<128x512xf32>
    %cst_33 = arith.constant 0.000000e+00 : f32
    %49 = vector.broadcast %cst_33 : f32 to vector<8x128xf32>
    %cst_34 = arith.constant 0.000000e+00 : f32
    %50 = vector.broadcast %cst_34 : f32 to vector<8x128xf32>
    %51 = vector.extract_strided_slice %47 {offsets = [0, 0], sizes = [8, 512], strides = [1, 1]} : vector<128x512xf32> to vector<8x512xf32>
    %cst_35 = arith.constant dense<0.000000e+00> : vector<8x512xf32>
    %52 = tpu.matmul %49, %48, %cst_35 {dimension_numbers = #tpu.dot_dimension_numbers<[1], [0], [0], [1], [0, 0, 1, 1], [], []>} : vector<8x128xf32>, vector<128x512xf32>, vector<8x512xf32> -> vector<8x512xf32>
    %53 = arith.addf %51, %52 : vector<8x512xf32>
    %54 = vector.extract_strided_slice %53 {offsets = [0, 0], sizes = [8, 128], strides = [1, 1]} : vector<8x512xf32> to vector<8x128xf32>
    %55 = arith.negf %54 : vector<8x128xf32>
    %56 = math.exp %55 : vector<8x128xf32>
    %cst_36 = arith.constant 1.000000e+00 : f32
    %57 = vector.broadcast %cst_36 : f32 to vector<8x128xf32>
    %58 = arith.addf %57, %56 : vector<8x128xf32>
    %59 = arith.divf %57, %58 : vector<8x128xf32>
    %60 = vector.extract_strided_slice %53 {offsets = [0, 128], sizes = [8, 128], strides = [1, 1]} : vector<8x512xf32> to vector<8x128xf32>
    %61 = arith.negf %60 : vector<8x128xf32>
    %62 = math.exp %61 : vector<8x128xf32>
    %cst_37 = arith.constant 1.000000e+00 : f32
    %63 = vector.broadcast %cst_37 : f32 to vector<8x128xf32>
    %64 = arith.addf %63, %62 : vector<8x128xf32>
    %65 = arith.divf %63, %64 : vector<8x128xf32>
    %66 = vector.extract_strided_slice %53 {offsets = [0, 256], sizes = [8, 128], strides = [1, 1]} : vector<8x512xf32> to vector<8x128xf32>
    %67 = math.tanh %66 : vector<8x128xf32>
    %68 = vector.extract_strided_slice %53 {offsets = [0, 384], sizes = [8, 128], strides = [1, 1]} : vector<8x512xf32> to vector<8x128xf32>
    %69 = arith.negf %68 : vector<8x128xf32>
    %70 = math.exp %69 : vector<8x128xf32>
    %cst_38 = arith.constant 1.000000e+00 : f32
    %71 = vector.broadcast %cst_38 : f32 to vector<8x128xf32>
    %72 = arith.addf %71, %70 : vector<8x128xf32>
    %73 = arith.divf %71, %72 : vector<8x128xf32>
    %74 = arith.mulf %65, %50 : vector<8x128xf32>
    %75 = arith.mulf %59, %67 : vector<8x128xf32>
    %76 = arith.addf %74, %75 : vector<8x128xf32>
    %77 = math.tanh %76 : vector<8x128xf32>
    %78 = arith.mulf %73, %77 : vector<8x128xf32>
    %79 = vector.extract_strided_slice %47 {offsets = [8, 0], sizes = [8, 512], strides = [1, 1]} : vector<128x512xf32> to vector<8x512xf32>
    %cst_39 = arith.constant dense<0.000000e+00> : vector<8x512xf32>
    %80 = tpu.matmul %78, %48, %cst_39 {dimension_numbers = #tpu.dot_dimension_numbers<[1], [0], [0], [1], [0, 0, 1, 1], [], []>} : vector<8x128xf32>, vector<128x512xf32>, vector<8x512xf32> -> vector<8x512xf32>
    %81 = arith.addf %79, %80 : vector<8x512xf32>
    %82 = vector.extract_strided_slice %81 {offsets = [0, 0], sizes = [8, 128], strides = [1, 1]} : vector<8x512xf32> to vector<8x128xf32>
    %83 = arith.negf %82 : vector<8x128xf32>
    %84 = math.exp %83 : vector<8x128xf32>
    %cst_40 = arith.constant 1.000000e+00 : f32
    %85 = vector.broadcast %cst_40 : f32 to vector<8x128xf32>
    %86 = arith.addf %85, %84 : vector<8x128xf32>
    %87 = arith.divf %85, %86 : vector<8x128xf32>
    %88 = vector.extract_strided_slice %81 {offsets = [0, 128], sizes = [8, 128], strides = [1, 1]} : vector<8x512xf32> to vector<8x128xf32>
    %89 = arith.negf %88 : vector<8x128xf32>
    %90 = math.exp %89 : vector<8x128xf32>
    %cst_41 = arith.constant 1.000000e+00 : f32
    %91 = vector.broadcast %cst_41 : f32 to vector<8x128xf32>
    %92 = arith.addf %91, %90 : vector<8x128xf32>
    %93 = arith.divf %91, %92 : vector<8x128xf32>
    %94 = vector.extract_strided_slice %81 {offsets = [0, 256], sizes = [8, 128], strides = [1, 1]} : vector<8x512xf32> to vector<8x128xf32>
    %95 = math.tanh %94 : vector<8x128xf32>
    %96 = vector.extract_strided_slice %81 {offsets = [0, 384], sizes = [8, 128], strides = [1, 1]} : vector<8x512xf32> to vector<8x128xf32>
    %97 = arith.negf %96 : vector<8x128xf32>
    %98 = math.exp %97 : vector<8x128xf32>
    %cst_42 = arith.constant 1.000000e+00 : f32
    %99 = vector.broadcast %cst_42 : f32 to vector<8x128xf32>
    %100 = arith.addf %99, %98 : vector<8x128xf32>
    %101 = arith.divf %99, %100 : vector<8x128xf32>
    %102 = arith.mulf %93, %76 : vector<8x128xf32>
    %103 = arith.mulf %87, %95 : vector<8x128xf32>
    %104 = arith.addf %102, %103 : vector<8x128xf32>
    %105 = math.tanh %104 : vector<8x128xf32>
    %106 = arith.mulf %101, %105 : vector<8x128xf32>
    %107 = vector.extract_strided_slice %47 {offsets = [16, 0], sizes = [8, 512], strides = [1, 1]} : vector<128x512xf32> to vector<8x512xf32>
    %cst_43 = arith.constant dense<0.000000e+00> : vector<8x512xf32>
    %108 = tpu.matmul %106, %48, %cst_43 {dimension_numbers = #tpu.dot_dimension_numbers<[1], [0], [0], [1], [0, 0, 1, 1], [], []>} : vector<8x128xf32>, vector<128x512xf32>, vector<8x512xf32> -> vector<8x512xf32>
    %109 = arith.addf %107, %108 : vector<8x512xf32>
    %110 = vector.extract_strided_slice %109 {offsets = [0, 0], sizes = [8, 128], strides = [1, 1]} : vector<8x512xf32> to vector<8x128xf32>
    %111 = arith.negf %110 : vector<8x128xf32>
    %112 = math.exp %111 : vector<8x128xf32>
    %cst_44 = arith.constant 1.000000e+00 : f32
    %113 = vector.broadcast %cst_44 : f32 to vector<8x128xf32>
    %114 = arith.addf %113, %112 : vector<8x128xf32>
    %115 = arith.divf %113, %114 : vector<8x128xf32>
    %116 = vector.extract_strided_slice %109 {offsets = [0, 128], sizes = [8, 128], strides = [1, 1]} : vector<8x512xf32> to vector<8x128xf32>
    %117 = arith.negf %116 : vector<8x128xf32>
    %118 = math.exp %117 : vector<8x128xf32>
    %cst_45 = arith.constant 1.000000e+00 : f32
    %119 = vector.broadcast %cst_45 : f32 to vector<8x128xf32>
    %120 = arith.addf %119, %118 : vector<8x128xf32>
    %121 = arith.divf %119, %120 : vector<8x128xf32>
    %122 = vector.extract_strided_slice %109 {offsets = [0, 256], sizes = [8, 128], strides = [1, 1]} : vector<8x512xf32> to vector<8x128xf32>
    %123 = math.tanh %122 : vector<8x128xf32>
    %124 = vector.extract_strided_slice %109 {offsets = [0, 384], sizes = [8, 128], strides = [1, 1]} : vector<8x512xf32> to vector<8x128xf32>
    %125 = arith.negf %124 : vector<8x128xf32>
    %126 = math.exp %125 : vector<8x128xf32>
    %cst_46 = arith.constant 1.000000e+00 : f32
    %127 = vector.broadcast %cst_46 : f32 to vector<8x128xf32>
    %128 = arith.addf %127, %126 : vector<8x128xf32>
    %129 = arith.divf %127, %128 : vector<8x128xf32>
    %130 = arith.mulf %121, %104 : vector<8x128xf32>
    %131 = arith.mulf %115, %123 : vector<8x128xf32>
    %132 = arith.addf %130, %131 : vector<8x128xf32>
    %133 = math.tanh %132 : vector<8x128xf32>
    %134 = arith.mulf %129, %133 : vector<8x128xf32>
    %135 = vector.extract_strided_slice %47 {offsets = [24, 0], sizes = [8, 512], strides = [1, 1]} : vector<128x512xf32> to vector<8x512xf32>
    %cst_47 = arith.constant dense<0.000000e+00> : vector<8x512xf32>
    %136 = tpu.matmul %134, %48, %cst_47 {dimension_numbers = #tpu.dot_dimension_numbers<[1], [0], [0], [1], [0, 0, 1, 1], [], []>} : vector<8x128xf32>, vector<128x512xf32>, vector<8x512xf32> -> vector<8x512xf32>
    %137 = arith.addf %135, %136 : vector<8x512xf32>
    %138 = vector.extract_strided_slice %137 {offsets = [0, 0], sizes = [8, 128], strides = [1, 1]} : vector<8x512xf32> to vector<8x128xf32>
    %139 = arith.negf %138 : vector<8x128xf32>
    %140 = math.exp %139 : vector<8x128xf32>
    %cst_48 = arith.constant 1.000000e+00 : f32
    %141 = vector.broadcast %cst_48 : f32 to vector<8x128xf32>
    %142 = arith.addf %141, %140 : vector<8x128xf32>
    %143 = arith.divf %141, %142 : vector<8x128xf32>
    %144 = vector.extract_strided_slice %137 {offsets = [0, 128], sizes = [8, 128], strides = [1, 1]} : vector<8x512xf32> to vector<8x128xf32>
    %145 = arith.negf %144 : vector<8x128xf32>
    %146 = math.exp %145 : vector<8x128xf32>
    %cst_49 = arith.constant 1.000000e+00 : f32
    %147 = vector.broadcast %cst_49 : f32 to vector<8x128xf32>
    %148 = arith.addf %147, %146 : vector<8x128xf32>
    %149 = arith.divf %147, %148 : vector<8x128xf32>
    %150 = vector.extract_strided_slice %137 {offsets = [0, 256], sizes = [8, 128], strides = [1, 1]} : vector<8x512xf32> to vector<8x128xf32>
    %151 = math.tanh %150 : vector<8x128xf32>
    %152 = vector.extract_strided_slice %137 {offsets = [0, 384], sizes = [8, 128], strides = [1, 1]} : vector<8x512xf32> to vector<8x128xf32>
    %153 = arith.negf %152 : vector<8x128xf32>
    %154 = math.exp %153 : vector<8x128xf32>
    %cst_50 = arith.constant 1.000000e+00 : f32
    %155 = vector.broadcast %cst_50 : f32 to vector<8x128xf32>
    %156 = arith.addf %155, %154 : vector<8x128xf32>
    %157 = arith.divf %155, %156 : vector<8x128xf32>
    %158 = arith.mulf %149, %132 : vector<8x128xf32>
    %159 = arith.mulf %143, %151 : vector<8x128xf32>
    %160 = arith.addf %158, %159 : vector<8x128xf32>
    %161 = math.tanh %160 : vector<8x128xf32>
    %162 = arith.mulf %157, %161 : vector<8x128xf32>
    %163 = vector.extract_strided_slice %47 {offsets = [32, 0], sizes = [8, 512], strides = [1, 1]} : vector<128x512xf32> to vector<8x512xf32>
    %cst_51 = arith.constant dense<0.000000e+00> : vector<8x512xf32>
    %164 = tpu.matmul %162, %48, %cst_51 {dimension_numbers = #tpu.dot_dimension_numbers<[1], [0], [0], [1], [0, 0, 1, 1], [], []>} : vector<8x128xf32>, vector<128x512xf32>, vector<8x512xf32> -> vector<8x512xf32>
    %165 = arith.addf %163, %164 : vector<8x512xf32>
    %166 = vector.extract_strided_slice %165 {offsets = [0, 0], sizes = [8, 128], strides = [1, 1]} : vector<8x512xf32> to vector<8x128xf32>
    %167 = arith.negf %166 : vector<8x128xf32>
    %168 = math.exp %167 : vector<8x128xf32>
    %cst_52 = arith.constant 1.000000e+00 : f32
    %169 = vector.broadcast %cst_52 : f32 to vector<8x128xf32>
    %170 = arith.addf %169, %168 : vector<8x128xf32>
    %171 = arith.divf %169, %170 : vector<8x128xf32>
    %172 = vector.extract_strided_slice %165 {offsets = [0, 128], sizes = [8, 128], strides = [1, 1]} : vector<8x512xf32> to vector<8x128xf32>
    %173 = arith.negf %172 : vector<8x128xf32>
    %174 = math.exp %173 : vector<8x128xf32>
    %cst_53 = arith.constant 1.000000e+00 : f32
    %175 = vector.broadcast %cst_53 : f32 to vector<8x128xf32>
    %176 = arith.addf %175, %174 : vector<8x128xf32>
    %177 = arith.divf %175, %176 : vector<8x128xf32>
    %178 = vector.extract_strided_slice %165 {offsets = [0, 256], sizes = [8, 128], strides = [1, 1]} : vector<8x512xf32> to vector<8x128xf32>
    %179 = math.tanh %178 : vector<8x128xf32>
    %180 = vector.extract_strided_slice %165 {offsets = [0, 384], sizes = [8, 128], strides = [1, 1]} : vector<8x512xf32> to vector<8x128xf32>
    %181 = arith.negf %180 : vector<8x128xf32>
    %182 = math.exp %181 : vector<8x128xf32>
    %cst_54 = arith.constant 1.000000e+00 : f32
    %183 = vector.broadcast %cst_54 : f32 to vector<8x128xf32>
    %184 = arith.addf %183, %182 : vector<8x128xf32>
    %185 = arith.divf %183, %184 : vector<8x128xf32>
    %186 = arith.mulf %177, %160 : vector<8x128xf32>
    %187 = arith.mulf %171, %179 : vector<8x128xf32>
    %188 = arith.addf %186, %187 : vector<8x128xf32>
    %189 = math.tanh %188 : vector<8x128xf32>
    %190 = arith.mulf %185, %189 : vector<8x128xf32>
    %191 = vector.extract_strided_slice %47 {offsets = [40, 0], sizes = [8, 512], strides = [1, 1]} : vector<128x512xf32> to vector<8x512xf32>
    %cst_55 = arith.constant dense<0.000000e+00> : vector<8x512xf32>
    %192 = tpu.matmul %190, %48, %cst_55 {dimension_numbers = #tpu.dot_dimension_numbers<[1], [0], [0], [1], [0, 0, 1, 1], [], []>} : vector<8x128xf32>, vector<128x512xf32>, vector<8x512xf32> -> vector<8x512xf32>
    %193 = arith.addf %191, %192 : vector<8x512xf32>
    %194 = vector.extract_strided_slice %193 {offsets = [0, 0], sizes = [8, 128], strides = [1, 1]} : vector<8x512xf32> to vector<8x128xf32>
    %195 = arith.negf %194 : vector<8x128xf32>
    %196 = math.exp %195 : vector<8x128xf32>
    %cst_56 = arith.constant 1.000000e+00 : f32
    %197 = vector.broadcast %cst_56 : f32 to vector<8x128xf32>
    %198 = arith.addf %197, %196 : vector<8x128xf32>
    %199 = arith.divf %197, %198 : vector<8x128xf32>
    %200 = vector.extract_strided_slice %193 {offsets = [0, 128], sizes = [8, 128], strides = [1, 1]} : vector<8x512xf32> to vector<8x128xf32>
    %201 = arith.negf %200 : vector<8x128xf32>
    %202 = math.exp %201 : vector<8x128xf32>
    %cst_57 = arith.constant 1.000000e+00 : f32
    %203 = vector.broadcast %cst_57 : f32 to vector<8x128xf32>
    %204 = arith.addf %203, %202 : vector<8x128xf32>
    %205 = arith.divf %203, %204 : vector<8x128xf32>
    %206 = vector.extract_strided_slice %193 {offsets = [0, 256], sizes = [8, 128], strides = [1, 1]} : vector<8x512xf32> to vector<8x128xf32>
    %207 = math.tanh %206 : vector<8x128xf32>
    %208 = vector.extract_strided_slice %193 {offsets = [0, 384], sizes = [8, 128], strides = [1, 1]} : vector<8x512xf32> to vector<8x128xf32>
    %209 = arith.negf %208 : vector<8x128xf32>
    %210 = math.exp %209 : vector<8x128xf32>
    %cst_58 = arith.constant 1.000000e+00 : f32
    %211 = vector.broadcast %cst_58 : f32 to vector<8x128xf32>
    %212 = arith.addf %211, %210 : vector<8x128xf32>
    %213 = arith.divf %211, %212 : vector<8x128xf32>
    %214 = arith.mulf %205, %188 : vector<8x128xf32>
    %215 = arith.mulf %199, %207 : vector<8x128xf32>
    %216 = arith.addf %214, %215 : vector<8x128xf32>
    %217 = math.tanh %216 : vector<8x128xf32>
    %218 = arith.mulf %213, %217 : vector<8x128xf32>
    %219 = vector.extract_strided_slice %47 {offsets = [48, 0], sizes = [8, 512], strides = [1, 1]} : vector<128x512xf32> to vector<8x512xf32>
    %cst_59 = arith.constant dense<0.000000e+00> : vector<8x512xf32>
    %220 = tpu.matmul %218, %48, %cst_59 {dimension_numbers = #tpu.dot_dimension_numbers<[1], [0], [0], [1], [0, 0, 1, 1], [], []>} : vector<8x128xf32>, vector<128x512xf32>, vector<8x512xf32> -> vector<8x512xf32>
    %221 = arith.addf %219, %220 : vector<8x512xf32>
    %222 = vector.extract_strided_slice %221 {offsets = [0, 0], sizes = [8, 128], strides = [1, 1]} : vector<8x512xf32> to vector<8x128xf32>
    %223 = arith.negf %222 : vector<8x128xf32>
    %224 = math.exp %223 : vector<8x128xf32>
    %cst_60 = arith.constant 1.000000e+00 : f32
    %225 = vector.broadcast %cst_60 : f32 to vector<8x128xf32>
    %226 = arith.addf %225, %224 : vector<8x128xf32>
    %227 = arith.divf %225, %226 : vector<8x128xf32>
    %228 = vector.extract_strided_slice %221 {offsets = [0, 128], sizes = [8, 128], strides = [1, 1]} : vector<8x512xf32> to vector<8x128xf32>
    %229 = arith.negf %228 : vector<8x128xf32>
    %230 = math.exp %229 : vector<8x128xf32>
    %cst_61 = arith.constant 1.000000e+00 : f32
    %231 = vector.broadcast %cst_61 : f32 to vector<8x128xf32>
    %232 = arith.addf %231, %230 : vector<8x128xf32>
    %233 = arith.divf %231, %232 : vector<8x128xf32>
    %234 = vector.extract_strided_slice %221 {offsets = [0, 256], sizes = [8, 128], strides = [1, 1]} : vector<8x512xf32> to vector<8x128xf32>
    %235 = math.tanh %234 : vector<8x128xf32>
    %236 = vector.extract_strided_slice %221 {offsets = [0, 384], sizes = [8, 128], strides = [1, 1]} : vector<8x512xf32> to vector<8x128xf32>
    %237 = arith.negf %236 : vector<8x128xf32>
    %238 = math.exp %237 : vector<8x128xf32>
    %cst_62 = arith.constant 1.000000e+00 : f32
    %239 = vector.broadcast %cst_62 : f32 to vector<8x128xf32>
    %240 = arith.addf %239, %238 : vector<8x128xf32>
    %241 = arith.divf %239, %240 : vector<8x128xf32>
    %242 = arith.mulf %233, %216 : vector<8x128xf32>
    %243 = arith.mulf %227, %235 : vector<8x128xf32>
    %244 = arith.addf %242, %243 : vector<8x128xf32>
    %245 = math.tanh %244 : vector<8x128xf32>
    %246 = arith.mulf %241, %245 : vector<8x128xf32>
    %247 = vector.extract_strided_slice %47 {offsets = [56, 0], sizes = [8, 512], strides = [1, 1]} : vector<128x512xf32> to vector<8x512xf32>
    %cst_63 = arith.constant dense<0.000000e+00> : vector<8x512xf32>
    %248 = tpu.matmul %246, %48, %cst_63 {dimension_numbers = #tpu.dot_dimension_numbers<[1], [0], [0], [1], [0, 0, 1, 1], [], []>} : vector<8x128xf32>, vector<128x512xf32>, vector<8x512xf32> -> vector<8x512xf32>
    %249 = arith.addf %247, %248 : vector<8x512xf32>
    %250 = vector.extract_strided_slice %249 {offsets = [0, 0], sizes = [8, 128], strides = [1, 1]} : vector<8x512xf32> to vector<8x128xf32>
    %251 = arith.negf %250 : vector<8x128xf32>
    %252 = math.exp %251 : vector<8x128xf32>
    %cst_64 = arith.constant 1.000000e+00 : f32
    %253 = vector.broadcast %cst_64 : f32 to vector<8x128xf32>
    %254 = arith.addf %253, %252 : vector<8x128xf32>
    %255 = arith.divf %253, %254 : vector<8x128xf32>
    %256 = vector.extract_strided_slice %249 {offsets = [0, 128], sizes = [8, 128], strides = [1, 1]} : vector<8x512xf32> to vector<8x128xf32>
    %257 = arith.negf %256 : vector<8x128xf32>
    %258 = math.exp %257 : vector<8x128xf32>
    %cst_65 = arith.constant 1.000000e+00 : f32
    %259 = vector.broadcast %cst_65 : f32 to vector<8x128xf32>
    %260 = arith.addf %259, %258 : vector<8x128xf32>
    %261 = arith.divf %259, %260 : vector<8x128xf32>
    %262 = vector.extract_strided_slice %249 {offsets = [0, 256], sizes = [8, 128], strides = [1, 1]} : vector<8x512xf32> to vector<8x128xf32>
    %263 = math.tanh %262 : vector<8x128xf32>
    %264 = vector.extract_strided_slice %249 {offsets = [0, 384], sizes = [8, 128], strides = [1, 1]} : vector<8x512xf32> to vector<8x128xf32>
    %265 = arith.negf %264 : vector<8x128xf32>
    %266 = math.exp %265 : vector<8x128xf32>
    %cst_66 = arith.constant 1.000000e+00 : f32
    %267 = vector.broadcast %cst_66 : f32 to vector<8x128xf32>
    %268 = arith.addf %267, %266 : vector<8x128xf32>
    %269 = arith.divf %267, %268 : vector<8x128xf32>
    %270 = arith.mulf %261, %244 : vector<8x128xf32>
    %271 = arith.mulf %255, %263 : vector<8x128xf32>
    %272 = arith.addf %270, %271 : vector<8x128xf32>
    %273 = math.tanh %272 : vector<8x128xf32>
    %274 = arith.mulf %269, %273 : vector<8x128xf32>
    %275 = vector.extract_strided_slice %47 {offsets = [64, 0], sizes = [8, 512], strides = [1, 1]} : vector<128x512xf32> to vector<8x512xf32>
    %cst_67 = arith.constant dense<0.000000e+00> : vector<8x512xf32>
    %276 = tpu.matmul %274, %48, %cst_67 {dimension_numbers = #tpu.dot_dimension_numbers<[1], [0], [0], [1], [0, 0, 1, 1], [], []>} : vector<8x128xf32>, vector<128x512xf32>, vector<8x512xf32> -> vector<8x512xf32>
    %277 = arith.addf %275, %276 : vector<8x512xf32>
    %278 = vector.extract_strided_slice %277 {offsets = [0, 0], sizes = [8, 128], strides = [1, 1]} : vector<8x512xf32> to vector<8x128xf32>
    %279 = arith.negf %278 : vector<8x128xf32>
    %280 = math.exp %279 : vector<8x128xf32>
    %cst_68 = arith.constant 1.000000e+00 : f32
    %281 = vector.broadcast %cst_68 : f32 to vector<8x128xf32>
    %282 = arith.addf %281, %280 : vector<8x128xf32>
    %283 = arith.divf %281, %282 : vector<8x128xf32>
    %284 = vector.extract_strided_slice %277 {offsets = [0, 128], sizes = [8, 128], strides = [1, 1]} : vector<8x512xf32> to vector<8x128xf32>
    %285 = arith.negf %284 : vector<8x128xf32>
    %286 = math.exp %285 : vector<8x128xf32>
    %cst_69 = arith.constant 1.000000e+00 : f32
    %287 = vector.broadcast %cst_69 : f32 to vector<8x128xf32>
    %288 = arith.addf %287, %286 : vector<8x128xf32>
    %289 = arith.divf %287, %288 : vector<8x128xf32>
    %290 = vector.extract_strided_slice %277 {offsets = [0, 256], sizes = [8, 128], strides = [1, 1]} : vector<8x512xf32> to vector<8x128xf32>
    %291 = math.tanh %290 : vector<8x128xf32>
    %292 = vector.extract_strided_slice %277 {offsets = [0, 384], sizes = [8, 128], strides = [1, 1]} : vector<8x512xf32> to vector<8x128xf32>
    %293 = arith.negf %292 : vector<8x128xf32>
    %294 = math.exp %293 : vector<8x128xf32>
    %cst_70 = arith.constant 1.000000e+00 : f32
    %295 = vector.broadcast %cst_70 : f32 to vector<8x128xf32>
    %296 = arith.addf %295, %294 : vector<8x128xf32>
    %297 = arith.divf %295, %296 : vector<8x128xf32>
    %298 = arith.mulf %289, %272 : vector<8x128xf32>
    %299 = arith.mulf %283, %291 : vector<8x128xf32>
    %300 = arith.addf %298, %299 : vector<8x128xf32>
    %301 = math.tanh %300 : vector<8x128xf32>
    %302 = arith.mulf %297, %301 : vector<8x128xf32>
    %303 = vector.extract_strided_slice %47 {offsets = [72, 0], sizes = [8, 512], strides = [1, 1]} : vector<128x512xf32> to vector<8x512xf32>
    %cst_71 = arith.constant dense<0.000000e+00> : vector<8x512xf32>
    %304 = tpu.matmul %302, %48, %cst_71 {dimension_numbers = #tpu.dot_dimension_numbers<[1], [0], [0], [1], [0, 0, 1, 1], [], []>} : vector<8x128xf32>, vector<128x512xf32>, vector<8x512xf32> -> vector<8x512xf32>
    %305 = arith.addf %303, %304 : vector<8x512xf32>
    %306 = vector.extract_strided_slice %305 {offsets = [0, 0], sizes = [8, 128], strides = [1, 1]} : vector<8x512xf32> to vector<8x128xf32>
    %307 = arith.negf %306 : vector<8x128xf32>
    %308 = math.exp %307 : vector<8x128xf32>
    %cst_72 = arith.constant 1.000000e+00 : f32
    %309 = vector.broadcast %cst_72 : f32 to vector<8x128xf32>
    %310 = arith.addf %309, %308 : vector<8x128xf32>
    %311 = arith.divf %309, %310 : vector<8x128xf32>
    %312 = vector.extract_strided_slice %305 {offsets = [0, 128], sizes = [8, 128], strides = [1, 1]} : vector<8x512xf32> to vector<8x128xf32>
    %313 = arith.negf %312 : vector<8x128xf32>
    %314 = math.exp %313 : vector<8x128xf32>
    %cst_73 = arith.constant 1.000000e+00 : f32
    %315 = vector.broadcast %cst_73 : f32 to vector<8x128xf32>
    %316 = arith.addf %315, %314 : vector<8x128xf32>
    %317 = arith.divf %315, %316 : vector<8x128xf32>
    %318 = vector.extract_strided_slice %305 {offsets = [0, 256], sizes = [8, 128], strides = [1, 1]} : vector<8x512xf32> to vector<8x128xf32>
    %319 = math.tanh %318 : vector<8x128xf32>
    %320 = vector.extract_strided_slice %305 {offsets = [0, 384], sizes = [8, 128], strides = [1, 1]} : vector<8x512xf32> to vector<8x128xf32>
    %321 = arith.negf %320 : vector<8x128xf32>
    %322 = math.exp %321 : vector<8x128xf32>
    %cst_74 = arith.constant 1.000000e+00 : f32
    %323 = vector.broadcast %cst_74 : f32 to vector<8x128xf32>
    %324 = arith.addf %323, %322 : vector<8x128xf32>
    %325 = arith.divf %323, %324 : vector<8x128xf32>
    %326 = arith.mulf %317, %300 : vector<8x128xf32>
    %327 = arith.mulf %311, %319 : vector<8x128xf32>
    %328 = arith.addf %326, %327 : vector<8x128xf32>
    %329 = math.tanh %328 : vector<8x128xf32>
    %330 = arith.mulf %325, %329 : vector<8x128xf32>
    %331 = vector.extract_strided_slice %47 {offsets = [80, 0], sizes = [8, 512], strides = [1, 1]} : vector<128x512xf32> to vector<8x512xf32>
    %cst_75 = arith.constant dense<0.000000e+00> : vector<8x512xf32>
    %332 = tpu.matmul %330, %48, %cst_75 {dimension_numbers = #tpu.dot_dimension_numbers<[1], [0], [0], [1], [0, 0, 1, 1], [], []>} : vector<8x128xf32>, vector<128x512xf32>, vector<8x512xf32> -> vector<8x512xf32>
    %333 = arith.addf %331, %332 : vector<8x512xf32>
    %334 = vector.extract_strided_slice %333 {offsets = [0, 0], sizes = [8, 128], strides = [1, 1]} : vector<8x512xf32> to vector<8x128xf32>
    %335 = arith.negf %334 : vector<8x128xf32>
    %336 = math.exp %335 : vector<8x128xf32>
    %cst_76 = arith.constant 1.000000e+00 : f32
    %337 = vector.broadcast %cst_76 : f32 to vector<8x128xf32>
    %338 = arith.addf %337, %336 : vector<8x128xf32>
    %339 = arith.divf %337, %338 : vector<8x128xf32>
    %340 = vector.extract_strided_slice %333 {offsets = [0, 128], sizes = [8, 128], strides = [1, 1]} : vector<8x512xf32> to vector<8x128xf32>
    %341 = arith.negf %340 : vector<8x128xf32>
    %342 = math.exp %341 : vector<8x128xf32>
    %cst_77 = arith.constant 1.000000e+00 : f32
    %343 = vector.broadcast %cst_77 : f32 to vector<8x128xf32>
    %344 = arith.addf %343, %342 : vector<8x128xf32>
    %345 = arith.divf %343, %344 : vector<8x128xf32>
    %346 = vector.extract_strided_slice %333 {offsets = [0, 256], sizes = [8, 128], strides = [1, 1]} : vector<8x512xf32> to vector<8x128xf32>
    %347 = math.tanh %346 : vector<8x128xf32>
    %348 = vector.extract_strided_slice %333 {offsets = [0, 384], sizes = [8, 128], strides = [1, 1]} : vector<8x512xf32> to vector<8x128xf32>
    %349 = arith.negf %348 : vector<8x128xf32>
    %350 = math.exp %349 : vector<8x128xf32>
    %cst_78 = arith.constant 1.000000e+00 : f32
    %351 = vector.broadcast %cst_78 : f32 to vector<8x128xf32>
    %352 = arith.addf %351, %350 : vector<8x128xf32>
    %353 = arith.divf %351, %352 : vector<8x128xf32>
    %354 = arith.mulf %345, %328 : vector<8x128xf32>
    %355 = arith.mulf %339, %347 : vector<8x128xf32>
    %356 = arith.addf %354, %355 : vector<8x128xf32>
    %357 = math.tanh %356 : vector<8x128xf32>
    %358 = arith.mulf %353, %357 : vector<8x128xf32>
    %359 = vector.extract_strided_slice %47 {offsets = [88, 0], sizes = [8, 512], strides = [1, 1]} : vector<128x512xf32> to vector<8x512xf32>
    %cst_79 = arith.constant dense<0.000000e+00> : vector<8x512xf32>
    %360 = tpu.matmul %358, %48, %cst_79 {dimension_numbers = #tpu.dot_dimension_numbers<[1], [0], [0], [1], [0, 0, 1, 1], [], []>} : vector<8x128xf32>, vector<128x512xf32>, vector<8x512xf32> -> vector<8x512xf32>
    %361 = arith.addf %359, %360 : vector<8x512xf32>
    %362 = vector.extract_strided_slice %361 {offsets = [0, 0], sizes = [8, 128], strides = [1, 1]} : vector<8x512xf32> to vector<8x128xf32>
    %363 = arith.negf %362 : vector<8x128xf32>
    %364 = math.exp %363 : vector<8x128xf32>
    %cst_80 = arith.constant 1.000000e+00 : f32
    %365 = vector.broadcast %cst_80 : f32 to vector<8x128xf32>
    %366 = arith.addf %365, %364 : vector<8x128xf32>
    %367 = arith.divf %365, %366 : vector<8x128xf32>
    %368 = vector.extract_strided_slice %361 {offsets = [0, 128], sizes = [8, 128], strides = [1, 1]} : vector<8x512xf32> to vector<8x128xf32>
    %369 = arith.negf %368 : vector<8x128xf32>
    %370 = math.exp %369 : vector<8x128xf32>
    %cst_81 = arith.constant 1.000000e+00 : f32
    %371 = vector.broadcast %cst_81 : f32 to vector<8x128xf32>
    %372 = arith.addf %371, %370 : vector<8x128xf32>
    %373 = arith.divf %371, %372 : vector<8x128xf32>
    %374 = vector.extract_strided_slice %361 {offsets = [0, 256], sizes = [8, 128], strides = [1, 1]} : vector<8x512xf32> to vector<8x128xf32>
    %375 = math.tanh %374 : vector<8x128xf32>
    %376 = vector.extract_strided_slice %361 {offsets = [0, 384], sizes = [8, 128], strides = [1, 1]} : vector<8x512xf32> to vector<8x128xf32>
    %377 = arith.negf %376 : vector<8x128xf32>
    %378 = math.exp %377 : vector<8x128xf32>
    %cst_82 = arith.constant 1.000000e+00 : f32
    %379 = vector.broadcast %cst_82 : f32 to vector<8x128xf32>
    %380 = arith.addf %379, %378 : vector<8x128xf32>
    %381 = arith.divf %379, %380 : vector<8x128xf32>
    %382 = arith.mulf %373, %356 : vector<8x128xf32>
    %383 = arith.mulf %367, %375 : vector<8x128xf32>
    %384 = arith.addf %382, %383 : vector<8x128xf32>
    %385 = math.tanh %384 : vector<8x128xf32>
    %386 = arith.mulf %381, %385 : vector<8x128xf32>
    %387 = vector.extract_strided_slice %47 {offsets = [96, 0], sizes = [8, 512], strides = [1, 1]} : vector<128x512xf32> to vector<8x512xf32>
    %cst_83 = arith.constant dense<0.000000e+00> : vector<8x512xf32>
    %388 = tpu.matmul %386, %48, %cst_83 {dimension_numbers = #tpu.dot_dimension_numbers<[1], [0], [0], [1], [0, 0, 1, 1], [], []>} : vector<8x128xf32>, vector<128x512xf32>, vector<8x512xf32> -> vector<8x512xf32>
    %389 = arith.addf %387, %388 : vector<8x512xf32>
    %390 = vector.extract_strided_slice %389 {offsets = [0, 0], sizes = [8, 128], strides = [1, 1]} : vector<8x512xf32> to vector<8x128xf32>
    %391 = arith.negf %390 : vector<8x128xf32>
    %392 = math.exp %391 : vector<8x128xf32>
    %cst_84 = arith.constant 1.000000e+00 : f32
    %393 = vector.broadcast %cst_84 : f32 to vector<8x128xf32>
    %394 = arith.addf %393, %392 : vector<8x128xf32>
    %395 = arith.divf %393, %394 : vector<8x128xf32>
    %396 = vector.extract_strided_slice %389 {offsets = [0, 128], sizes = [8, 128], strides = [1, 1]} : vector<8x512xf32> to vector<8x128xf32>
    %397 = arith.negf %396 : vector<8x128xf32>
    %398 = math.exp %397 : vector<8x128xf32>
    %cst_85 = arith.constant 1.000000e+00 : f32
    %399 = vector.broadcast %cst_85 : f32 to vector<8x128xf32>
    %400 = arith.addf %399, %398 : vector<8x128xf32>
    %401 = arith.divf %399, %400 : vector<8x128xf32>
    %402 = vector.extract_strided_slice %389 {offsets = [0, 256], sizes = [8, 128], strides = [1, 1]} : vector<8x512xf32> to vector<8x128xf32>
    %403 = math.tanh %402 : vector<8x128xf32>
    %404 = vector.extract_strided_slice %389 {offsets = [0, 384], sizes = [8, 128], strides = [1, 1]} : vector<8x512xf32> to vector<8x128xf32>
    %405 = arith.negf %404 : vector<8x128xf32>
    %406 = math.exp %405 : vector<8x128xf32>
    %cst_86 = arith.constant 1.000000e+00 : f32
    %407 = vector.broadcast %cst_86 : f32 to vector<8x128xf32>
    %408 = arith.addf %407, %406 : vector<8x128xf32>
    %409 = arith.divf %407, %408 : vector<8x128xf32>
    %410 = arith.mulf %401, %384 : vector<8x128xf32>
    %411 = arith.mulf %395, %403 : vector<8x128xf32>
    %412 = arith.addf %410, %411 : vector<8x128xf32>
    %413 = math.tanh %412 : vector<8x128xf32>
    %414 = arith.mulf %409, %413 : vector<8x128xf32>
    %415 = vector.extract_strided_slice %47 {offsets = [104, 0], sizes = [8, 512], strides = [1, 1]} : vector<128x512xf32> to vector<8x512xf32>
    %cst_87 = arith.constant dense<0.000000e+00> : vector<8x512xf32>
    %416 = tpu.matmul %414, %48, %cst_87 {dimension_numbers = #tpu.dot_dimension_numbers<[1], [0], [0], [1], [0, 0, 1, 1], [], []>} : vector<8x128xf32>, vector<128x512xf32>, vector<8x512xf32> -> vector<8x512xf32>
    %417 = arith.addf %415, %416 : vector<8x512xf32>
    %418 = vector.extract_strided_slice %417 {offsets = [0, 0], sizes = [8, 128], strides = [1, 1]} : vector<8x512xf32> to vector<8x128xf32>
    %419 = arith.negf %418 : vector<8x128xf32>
    %420 = math.exp %419 : vector<8x128xf32>
    %cst_88 = arith.constant 1.000000e+00 : f32
    %421 = vector.broadcast %cst_88 : f32 to vector<8x128xf32>
    %422 = arith.addf %421, %420 : vector<8x128xf32>
    %423 = arith.divf %421, %422 : vector<8x128xf32>
    %424 = vector.extract_strided_slice %417 {offsets = [0, 128], sizes = [8, 128], strides = [1, 1]} : vector<8x512xf32> to vector<8x128xf32>
    %425 = arith.negf %424 : vector<8x128xf32>
    %426 = math.exp %425 : vector<8x128xf32>
    %cst_89 = arith.constant 1.000000e+00 : f32
    %427 = vector.broadcast %cst_89 : f32 to vector<8x128xf32>
    %428 = arith.addf %427, %426 : vector<8x128xf32>
    %429 = arith.divf %427, %428 : vector<8x128xf32>
    %430 = vector.extract_strided_slice %417 {offsets = [0, 256], sizes = [8, 128], strides = [1, 1]} : vector<8x512xf32> to vector<8x128xf32>
    %431 = math.tanh %430 : vector<8x128xf32>
    %432 = vector.extract_strided_slice %417 {offsets = [0, 384], sizes = [8, 128], strides = [1, 1]} : vector<8x512xf32> to vector<8x128xf32>
    %433 = arith.negf %432 : vector<8x128xf32>
    %434 = math.exp %433 : vector<8x128xf32>
    %cst_90 = arith.constant 1.000000e+00 : f32
    %435 = vector.broadcast %cst_90 : f32 to vector<8x128xf32>
    %436 = arith.addf %435, %434 : vector<8x128xf32>
    %437 = arith.divf %435, %436 : vector<8x128xf32>
    %438 = arith.mulf %429, %412 : vector<8x128xf32>
    %439 = arith.mulf %423, %431 : vector<8x128xf32>
    %440 = arith.addf %438, %439 : vector<8x128xf32>
    %441 = math.tanh %440 : vector<8x128xf32>
    %442 = arith.mulf %437, %441 : vector<8x128xf32>
    %443 = vector.extract_strided_slice %47 {offsets = [112, 0], sizes = [8, 512], strides = [1, 1]} : vector<128x512xf32> to vector<8x512xf32>
    %cst_91 = arith.constant dense<0.000000e+00> : vector<8x512xf32>
    %444 = tpu.matmul %442, %48, %cst_91 {dimension_numbers = #tpu.dot_dimension_numbers<[1], [0], [0], [1], [0, 0, 1, 1], [], []>} : vector<8x128xf32>, vector<128x512xf32>, vector<8x512xf32> -> vector<8x512xf32>
    %445 = arith.addf %443, %444 : vector<8x512xf32>
    %446 = vector.extract_strided_slice %445 {offsets = [0, 0], sizes = [8, 128], strides = [1, 1]} : vector<8x512xf32> to vector<8x128xf32>
    %447 = arith.negf %446 : vector<8x128xf32>
    %448 = math.exp %447 : vector<8x128xf32>
    %cst_92 = arith.constant 1.000000e+00 : f32
    %449 = vector.broadcast %cst_92 : f32 to vector<8x128xf32>
    %450 = arith.addf %449, %448 : vector<8x128xf32>
    %451 = arith.divf %449, %450 : vector<8x128xf32>
    %452 = vector.extract_strided_slice %445 {offsets = [0, 128], sizes = [8, 128], strides = [1, 1]} : vector<8x512xf32> to vector<8x128xf32>
    %453 = arith.negf %452 : vector<8x128xf32>
    %454 = math.exp %453 : vector<8x128xf32>
    %cst_93 = arith.constant 1.000000e+00 : f32
    %455 = vector.broadcast %cst_93 : f32 to vector<8x128xf32>
    %456 = arith.addf %455, %454 : vector<8x128xf32>
    %457 = arith.divf %455, %456 : vector<8x128xf32>
    %458 = vector.extract_strided_slice %445 {offsets = [0, 256], sizes = [8, 128], strides = [1, 1]} : vector<8x512xf32> to vector<8x128xf32>
    %459 = math.tanh %458 : vector<8x128xf32>
    %460 = vector.extract_strided_slice %445 {offsets = [0, 384], sizes = [8, 128], strides = [1, 1]} : vector<8x512xf32> to vector<8x128xf32>
    %461 = arith.negf %460 : vector<8x128xf32>
    %462 = math.exp %461 : vector<8x128xf32>
    %cst_94 = arith.constant 1.000000e+00 : f32
    %463 = vector.broadcast %cst_94 : f32 to vector<8x128xf32>
    %464 = arith.addf %463, %462 : vector<8x128xf32>
    %465 = arith.divf %463, %464 : vector<8x128xf32>
    %466 = arith.mulf %457, %440 : vector<8x128xf32>
    %467 = arith.mulf %451, %459 : vector<8x128xf32>
    %468 = arith.addf %466, %467 : vector<8x128xf32>
    %469 = math.tanh %468 : vector<8x128xf32>
    %470 = arith.mulf %465, %469 : vector<8x128xf32>
    %471 = vector.extract_strided_slice %47 {offsets = [120, 0], sizes = [8, 512], strides = [1, 1]} : vector<128x512xf32> to vector<8x512xf32>
    %cst_95 = arith.constant dense<0.000000e+00> : vector<8x512xf32>
    %472 = tpu.matmul %470, %48, %cst_95 {dimension_numbers = #tpu.dot_dimension_numbers<[1], [0], [0], [1], [0, 0, 1, 1], [], []>} : vector<8x128xf32>, vector<128x512xf32>, vector<8x512xf32> -> vector<8x512xf32>
    %473 = arith.addf %471, %472 : vector<8x512xf32>
    %474 = vector.extract_strided_slice %473 {offsets = [0, 0], sizes = [8, 128], strides = [1, 1]} : vector<8x512xf32> to vector<8x128xf32>
    %475 = arith.negf %474 : vector<8x128xf32>
    %476 = math.exp %475 : vector<8x128xf32>
    %cst_96 = arith.constant 1.000000e+00 : f32
    %477 = vector.broadcast %cst_96 : f32 to vector<8x128xf32>
    %478 = arith.addf %477, %476 : vector<8x128xf32>
    %479 = arith.divf %477, %478 : vector<8x128xf32>
    %480 = vector.extract_strided_slice %473 {offsets = [0, 128], sizes = [8, 128], strides = [1, 1]} : vector<8x512xf32> to vector<8x128xf32>
    %481 = arith.negf %480 : vector<8x128xf32>
    %482 = math.exp %481 : vector<8x128xf32>
    %cst_97 = arith.constant 1.000000e+00 : f32
    %483 = vector.broadcast %cst_97 : f32 to vector<8x128xf32>
    %484 = arith.addf %483, %482 : vector<8x128xf32>
    %485 = arith.divf %483, %484 : vector<8x128xf32>
    %486 = vector.extract_strided_slice %473 {offsets = [0, 256], sizes = [8, 128], strides = [1, 1]} : vector<8x512xf32> to vector<8x128xf32>
    %487 = math.tanh %486 : vector<8x128xf32>
    %488 = vector.extract_strided_slice %473 {offsets = [0, 384], sizes = [8, 128], strides = [1, 1]} : vector<8x512xf32> to vector<8x128xf32>
    %489 = arith.negf %488 : vector<8x128xf32>
    %490 = math.exp %489 : vector<8x128xf32>
    %cst_98 = arith.constant 1.000000e+00 : f32
    %491 = vector.broadcast %cst_98 : f32 to vector<8x128xf32>
    %492 = arith.addf %491, %490 : vector<8x128xf32>
    %493 = arith.divf %491, %492 : vector<8x128xf32>
    %494 = arith.mulf %485, %468 : vector<8x128xf32>
    %495 = arith.mulf %479, %487 : vector<8x128xf32>
    %496 = arith.addf %494, %495 : vector<8x128xf32>
    %497 = math.tanh %496 : vector<8x128xf32>
    %498 = arith.mulf %493, %497 : vector<8x128xf32>
    %c0_99 = arith.constant 0 : index
    %c0_100 = arith.constant 0 : index
    %499 = vector.load %arg10[%c0_99, %c0_100] : memref<128x128xf32, #tpu.memory_space<vmem>>, vector<128x128xf32>
    %cst_101 = arith.constant dense<0.000000e+00> : vector<8x128xf32>
    %500 = tpu.matmul %498, %499, %cst_101 {dimension_numbers = #tpu.dot_dimension_numbers<[1], [0], [0], [1], [0, 0, 1, 1], [], []>} : vector<8x128xf32>, vector<128x128xf32>, vector<8x128xf32> -> vector<8x128xf32>
    %c0_102 = arith.constant 0 : index
    %c0_103 = arith.constant 0 : index
    %501 = vector.load %arg11[%c0_102, %c0_103] : memref<1x128xf32, #tpu.memory_space<vmem>>, vector<1x128xf32>
    %502 = vector.broadcast %501 : vector<1x128xf32> to vector<8x128xf32>
    %503 = arith.addf %500, %502 : vector<8x128xf32>
    %cst_104 = arith.constant 0.000000e+00 : f32
    %504 = vector.broadcast %cst_104 : f32 to vector<8x128xf32>
    %505 = arith.maximumf %503, %504 : vector<8x128xf32>
    %c0_105 = arith.constant 0 : index
    %c0_106 = arith.constant 0 : index
    %506 = vector.load %arg12[%c0_105, %c0_106] : memref<1x128xf32, #tpu.memory_space<vmem>>, vector<1x128xf32>
    %507 = vector.broadcast %506 : vector<1x128xf32> to vector<8x128xf32>
    %508 = arith.mulf %505, %507 : vector<8x128xf32>
    %cst_107 = arith.constant dense<0.000000e+00> : vector<8xf32>
    %509 = vector.multi_reduction <add>, %508, %cst_107 [1] : vector<8x128xf32> to vector<8xf32>
    %510 = vector.shape_cast %509 : vector<8xf32> to vector<8x1xf32>
    %c0_108 = arith.constant 0 : index
    %c0_109 = arith.constant 0 : index
    %511 = vector.load %arg13[%c0_108, %c0_109] : memref<1x1xf32, #tpu.memory_space<vmem>>, vector<1x1xf32>
    %512 = vector.broadcast %511 : vector<1x1xf32> to vector<8x1xf32>
    %513 = arith.addf %510, %512 : vector<8x1xf32>
    %514 = vector.extract_strided_slice %513 {offsets = [0, 0], sizes = [2, 1], strides = [1, 1]} : vector<8x1xf32> to vector<2x1xf32>
    %c0_110 = arith.constant 0 : index
    %c0_111 = arith.constant 0 : index
    %515 = vector.load %arg14[%c0_110, %c0_111] : memref<2x1xf32, #tpu.memory_space<vmem>>, vector<2x1xf32>
    tpu.vector_store %arg14[%c0_110, %c0_111], %514 {strides = array<i32>} : memref<2x1xf32, #tpu.memory_space<vmem>>, vector<2x1xf32>,
    return
  }
}

</mosaic_0001>

<llo_original>
// kernel: tpu_custom_call.1
$region0: #{tpu_custom_call.1}
  #allocation0 [shape = 'u32[]', space=smem, size = 0x4, offset = 0x4, fixed_abs, tag = 'smem constant byte address 0x4 - core index']
  #allocation1 [shape = 'u32[144,128]{1,0:T(1,128)}', space=vmem, size = 0x12000, scoped, tag = 'internal scratch']
  #allocation2 [shape = 'f32[1,1]{1,0:T(1,128)S(1)}', space=vmem, size = 0x200, scoped, tag = 'scoped memory for tpu_custom_call.1']
  %s0 = inlined_call_operand.vmem [shape: f32[128,1], index: 0, kind: input, shape index: {}]
  %s1 = inlined_call_operand.vmem [shape: f32[128,128], index: 1, kind: input, shape index: {}]
  %s2 = inlined_call_operand.vmem [shape: f32[128,128], index: 2, kind: input, shape index: {}]
  %s3 = inlined_call_operand.vmem [shape: f32[3,64], index: 3, kind: input, shape index: {}]
  %s4 = inlined_call_operand.vmem [shape: f32[1,64], index: 4, kind: input, shape index: {}]
  %s5 = inlined_call_operand.vmem [shape: f32[3,64,32], index: 5, kind: input, shape index: {}]
  %s6 = inlined_call_operand.vmem [shape: f32[1,32], index: 6, kind: input, shape index: {}]
  %s7 = inlined_call_operand.vmem [shape: f32[32,512], index: 7, kind: input, shape index: {}]
  %s8 = inlined_call_operand.hbm [shape: f32[128,512], index: 8, kind: input, shape index: {}]
  %s9 = inlined_call_operand.vmem [shape: f32[1,512], index: 9, kind: input, shape index: {}]
  %s10 = inlined_call_operand.hbm [shape: f32[128,128], index: 10, kind: input, shape index: {}]
  %s11 = inlined_call_operand.vmem [shape: f32[1,128], index: 11, kind: input, shape index: {}]
  %s12 = inlined_call_operand.vmem [shape: f32[1,128], index: 12, kind: input, shape index: {}]
  %s13 = inlined_call_operand.<no memory space> [shape: f32[1,1], index: 13, kind: input, shape index: {}]
  %s14 = inlined_call_operand.vmem [shape: f32[2,1], index: 14, kind: output, shape index: {}]
  %s15 = sld [smem:[#allocation0]]
  $region74: #{tpu_custom_call.1} parent=0
    _
  %s17 = ssub.s32 1, %s15
  %s18 = scalar_select 0, %s17, %s15
  %v19 = vstv %s13
  %20 = vst [vmem:[#allocation2] sm:$0x1] %v19
  $region1: #{tpu_custom_call.1} parent=0
    #allocation3 [shape = 'u8[262144]{0}', space=vmem, size = 0x40000, scoped, tag = 'input window, operand 8, single buffered']
    #allocation4 [shape = 's32[1]{0}', space=sflag, size = 0x4, scoped, tag = 'scoped memory for tpu_custom_call.1']
    #allocation5 [shape = 'u8[65536]{0}', space=vmem, size = 0x10000, scoped, tag = 'input window, operand 10, single buffered']
    #allocation6 [shape = 's32[1]{0}', space=sflag, size = 0x4, scoped, tag = 'scoped memory for tpu_custom_call.1']
    %21 = vsyncpa [#allocation4], 0
    %22 = vsyncpa [#allocation6], 0
    // Predicated region
    $region2: #{tpu_custom_call.1} parent=1 // pred_check
      _
    $region3: #{tpu_custom_call.1} parent=1 // pred_check_branch
      %24 = sbr.rel (0) target = $region5
    $region4: #{tpu_custom_call.1} parent=1 // pred_region
      _
    $region5: #{tpu_custom_call.1} parent=1 // pred_fallthru
      _
    // Predicated region
    $region6: #{tpu_custom_call.1} parent=1 // pred_check
      _
    $region7: #{tpu_custom_call.1} parent=1 // pred_check_branch
      %26 = sbr.rel (0) target = $region9
    $region8: #{tpu_custom_call.1} parent=1 // pred_region
      _
    $region9: #{tpu_custom_call.1} parent=1 // pred_fallthru
      _
    // Predicated region
    $region10: #{tpu_custom_call.1} parent=1 // pred_check
      _
    $region11: #{tpu_custom_call.1} parent=1 // pred_check_branch
      %28 = sbr.rel (0) target = $region13
    $region12: #{tpu_custom_call.1} parent=1 // pred_region
      _
    $region13: #{tpu_custom_call.1} parent=1 // pred_fallthru
      _
    // Predicated region
    $region14: #{tpu_custom_call.1} parent=1 // pred_check
      _
    $region15: #{tpu_custom_call.1} parent=1 // pred_check_branch
      %30 = sbr.rel (0) target = $region17
    $region16: #{tpu_custom_call.1} parent=1 // pred_region
      _
    $region17: #{tpu_custom_call.1} parent=1 // pred_fallthru
      _
    // Predicated region
    $region18: #{tpu_custom_call.1} parent=1 // pred_check
      _
    $region19: #{tpu_custom_call.1} parent=1 // pred_check_branch
      %32 = sbr.rel (0) target = $region21
    $region20: #{tpu_custom_call.1} parent=1 // pred_region
      _
    $region21: #{tpu_custom_call.1} parent=1 // pred_fallthru
      _
    // Predicated region
    $region22: #{tpu_custom_call.1} parent=1 // pred_check
      _
    $region23: #{tpu_custom_call.1} parent=1 // pred_check_branch
      %34 = sbr.rel (0) target = $region25
    $region24: #{tpu_custom_call.1} parent=1 // pred_region
      _
    $region25: #{tpu_custom_call.1} parent=1 // pred_fallthru
      _
    // Predicated region
    $region26: #{tpu_custom_call.1} parent=1 // pred_check
      _
    $region27: #{tpu_custom_call.1} parent=1 // pred_check_branch
      %36 = sbr.rel (0) target = $region29
    $region28: #{tpu_custom_call.1} parent=1 // pred_region
      _
    $region29: #{tpu_custom_call.1} parent=1 // pred_fallthru
      _
    // Predicated region
    $region30: #{tpu_custom_call.1} parent=1 // pred_check
      _
    $region31: #{tpu_custom_call.1} parent=1 // pred_check_branch
      %38 = sbr.rel (0) target = $region33
    $region32: #{tpu_custom_call.1} parent=1 // pred_region
      _
    $region33: #{tpu_custom_call.1} parent=1 // pred_fallthru
      _
    // Predicated region
    $region34: #{tpu_custom_call.1} parent=1 // pred_check
      _
    $region35: #{tpu_custom_call.1} parent=1 // pred_check_branch
      %40 = sbr.rel (0) target = $region37
    $region36: #{tpu_custom_call.1} parent=1 // pred_region
      %s42 = ssub.s32 8192, 8192
      %43 = vsyncadd [#allocation4], %s42
      %s44 = sshll.u32 [#allocation3], 4
      %s45 = int_to_ptr.vmem [resolvable:$true] %s44
      %50 = dma.hbm_to_vmem [thread:$0]  %s8, 8192, %s45, [#allocation4], 512, 512, 32
    $region37: #{tpu_custom_call.1} parent=1 // pred_fallthru
      _
    // Predicated region
    $region38: #{tpu_custom_call.1} parent=1 // pred_check
      _
    $region39: #{tpu_custom_call.1} parent=1 // pred_check_branch
      %52 = sbr.rel (0) target = $region41
    $region40: #{tpu_custom_call.1} parent=1 // pred_region
      _
    $region41: #{tpu_custom_call.1} parent=1 // pred_fallthru
      _
    // Predicated region
    $region42: #{tpu_custom_call.1} parent=1 // pred_check
      _
    $region43: #{tpu_custom_call.1} parent=1 // pred_check_branch
      %54 = sbr.rel (0) target = $region45
    $region44: #{tpu_custom_call.1} parent=1 // pred_region
      %s56 = ssub.s32 2048, 2048
      %57 = vsyncadd [#allocation6], %s56
      %s58 = sshll.u32 [#allocation5], 4
      %s59 = int_to_ptr.vmem [resolvable:$true] %s58
      %64 = dma.hbm_to_vmem [thread:$0]  %s10, 2048, %s59, [#allocation6], 128, 128, 8
    $region45: #{tpu_custom_call.1} parent=1 // pred_fallthru
      _
    // Predicated region
    $region46: #{tpu_custom_call.1} parent=1 // pred_check
      _
    $region47: #{tpu_custom_call.1} parent=1 // pred_check_branch
      %66 = sbr.rel (0) target = $region49
    $region48: #{tpu_custom_call.1} parent=1 // pred_region
      _
    $region49: #{tpu_custom_call.1} parent=1 // pred_fallthru
      _
    // Predicated region
    $region50: #{tpu_custom_call.1} parent=1 // pred_check
      _
    $region51: #{tpu_custom_call.1} parent=1 // pred_check_branch
      %68 = sbr.rel (0) target = $region53
    $region52: #{tpu_custom_call.1} parent=1 // pred_region
      _
    $region53: #{tpu_custom_call.1} parent=1 // pred_fallthru
      _
    // Predicated region
    $region54: #{tpu_custom_call.1} parent=1 // pred_check
      _
    $region55: #{tpu_custom_call.1} parent=1 // pred_check_branch
      %70 = sbr.rel (0) target = $region57
    $region56: #{tpu_custom_call.1} parent=1 // pred_region
      _
    $region57: #{tpu_custom_call.1} parent=1 // pred_fallthru
      _
    // Predicated region
    $region58: #{tpu_custom_call.1} parent=1 // pred_check
      _
    $region59: #{tpu_custom_call.1} parent=1 // pred_check_branch
      %72 = sbr.rel (0) target = $region61
    $region60: #{tpu_custom_call.1} parent=1 // pred_region
      %73 = dma.done [#allocation4], 8192
    $region61: #{tpu_custom_call.1} parent=1 // pred_fallthru
      _
    // Predicated region
    $region62: #{tpu_custom_call.1} parent=1 // pred_check
      _
    $region63: #{tpu_custom_call.1} parent=1 // pred_check_branch
      %75 = sbr.rel (0) target = $region65
    $region64: #{tpu_custom_call.1} parent=1 // pred_region
      %76 = dma.done [#allocation6], 2048
    $region65: #{tpu_custom_call.1} parent=1 // pred_fallthru
      _
    %v77 = vld [vmem:[%s0] sm:$0xff]
    %v78 = vld [vmem:[%s0 + $0x8] sm:$0xff]
    %v79 = vld [vmem:[%s0 + $0x10] sm:$0xff]
    %v80 = vld [vmem:[%s0 + $0x18] sm:$0xff]
    %v81 = vld [vmem:[%s0 + $0x20] sm:$0xff]
    %v82 = vld [vmem:[%s0 + $0x28] sm:$0xff]
    %v83 = vld [vmem:[%s0 + $0x30] sm:$0xff]
    %v84 = vld [vmem:[%s0 + $0x38] sm:$0xff]
    %v85 = vld [vmem:[%s0 + $0x40] sm:$0xff]
    %v86 = vld [vmem:[%s0 + $0x48] sm:$0xff]
    %v87 = vld [vmem:[%s0 + $0x50] sm:$0xff]
    %v88 = vld [vmem:[%s0 + $0x58] sm:$0xff]
    %v89 = vld [vmem:[%s0 + $0x60] sm:$0xff]
    %v90 = vld [vmem:[%s0 + $0x68] sm:$0xff]
    %v91 = vld [vmem:[%s0 + $0x70] sm:$0xff]
    %v92 = vld [vmem:[%s0 + $0x78] sm:$0xff]
    %v93 = vld [vmem:[%s1] sm:$0xff]
    %v94 = vld [vmem:[%s1 + $0x8] sm:$0xff]
    %v95 = vld [vmem:[%s1 + $0x10] sm:$0xff]
    %v96 = vld [vmem:[%s1 + $0x18] sm:$0xff]
    %v97 = vld [vmem:[%s1 + $0x20] sm:$0xff]
    %v98 = vld [vmem:[%s1 + $0x28] sm:$0xff]
    %v99 = vld [vmem:[%s1 + $0x30] sm:$0xff]
    %v100 = vld [vmem:[%s1 + $0x38] sm:$0xff]
    %v101 = vld [vmem:[%s1 + $0x40] sm:$0xff]
    %v102 = vld [vmem:[%s1 + $0x48] sm:$0xff]
    %v103 = vld [vmem:[%s1 + $0x50] sm:$0xff]
    %v104 = vld [vmem:[%s1 + $0x58] sm:$0xff]
    %v105 = vld [vmem:[%s1 + $0x60] sm:$0xff]
    %v106 = vld [vmem:[%s1 + $0x68] sm:$0xff]
    %v107 = vld [vmem:[%s1 + $0x70] sm:$0xff]
    %v108 = vld [vmem:[%s1 + $0x78] sm:$0xff]
    %v109 = vld [vmem:[%s2] sm:$0xff]
    %v110 = vld [vmem:[%s2 + $0x8] sm:$0xff]
    %v111 = vld [vmem:[%s2 + $0x10] sm:$0xff]
    %v112 = vld [vmem:[%s2 + $0x18] sm:$0xff]
    %v113 = vld [vmem:[%s2 + $0x20] sm:$0xff]
    %v114 = vld [vmem:[%s2 + $0x28] sm:$0xff]
    %v115 = vld [vmem:[%s2 + $0x30] sm:$0xff]
    %v116 = vld [vmem:[%s2 + $0x38] sm:$0xff]
    %v117 = vld [vmem:[%s2 + $0x40] sm:$0xff]
    %v118 = vld [vmem:[%s2 + $0x48] sm:$0xff]
    %v119 = vld [vmem:[%s2 + $0x50] sm:$0xff]
    %v120 = vld [vmem:[%s2 + $0x58] sm:$0xff]
    %v121 = vld [vmem:[%s2 + $0x60] sm:$0xff]
    %v122 = vld [vmem:[%s2 + $0x68] sm:$0xff]
    %v123 = vld [vmem:[%s2 + $0x70] sm:$0xff]
    %v124 = vld [vmem:[%s2 + $0x78] sm:$0xff]
    %125 = vmatprep.subr.mxu0 0.0
    %126 = vmatpush1.msra.mxu0 %v77
    %127 = vmatprep.subr.mxu0 0.0
    %128 = vmatpush1.msra.mxu0 %v78
    %129 = vmatprep.subr.mxu0 0.0
    %130 = vmatpush1.msra.mxu0 %v79
    %131 = vmatprep.subr.mxu0 0.0
    %132 = vmatpush1.msra.mxu0 %v80
    %133 = vmatprep.subr.mxu0 0.0
    %134 = vmatpush1.msra.mxu0 %v81
    %135 = vmatprep.subr.mxu0 0.0
    %136 = vmatpush1.msra.mxu0 %v82
    %137 = vmatprep.subr.mxu0 0.0
    %138 = vmatpush1.msra.mxu0 %v83
    %139 = vmatprep.subr.mxu0 0.0
    %140 = vmatpush1.msra.mxu0 %v84
    %141 = vmatprep.subr.mxu0 0.0
    %142 = vmatpush1.msra.mxu0 %v85
    %143 = vmatprep.subr.mxu0 0.0
    %144 = vmatpush1.msra.mxu0 %v86
    %145 = vmatprep.subr.mxu0 0.0
    %146 = vmatpush1.msra.mxu0 %v87
    %147 = vmatprep.subr.mxu0 0.0
    %148 = vmatpush1.msra.mxu0 %v88
    %149 = vmatprep.subr.mxu0 0.0
    %150 = vmatpush1.msra.mxu0 %v89
    %151 = vmatprep.subr.mxu0 0.0
    %152 = vmatpush1.msra.mxu0 %v90
    %153 = vmatprep.subr.mxu0 0.0
    %154 = vmatpush1.msra.mxu0 %v91
    %155 = vmatprep.subr.mxu0 0.0
    %156 = vmatpush1.msra.mxu0 %v92
    %157 = vmatprep.subr.mxu0 0.0
    %158 = vmatpush1.msra.mxu0 0.0
    %159 = vmatprep.subr.mxu0 0.0
    %160 = vmatpush1.msra.mxu0 0.0
    %161 = vmatprep.subr.mxu0 0.0
    %162 = vmatpush1.msra.mxu0 0.0
    %163 = vmatprep.subr.mxu0 0.0
    %164 = vmatpush1.msra.mxu0 0.0
    %165 = vmatprep.subr.mxu0 0.0
    %166 = vmatpush1.msra.mxu0 0.0
    %167 = vmatprep.subr.mxu0 0.0
    %168 = vmatpush1.msra.mxu0 0.0
    %169 = vmatprep.subr.mxu0 0.0
    %170 = vmatpush1.msra.mxu0 0.0
    %171 = vmatprep.subr.mxu0 0.0
    %172 = vmatpush1.msra.mxu0 0.0
    %173 = vmatprep.subr.mxu0 0.0
    %174 = vmatpush1.msra.mxu0 0.0
    %175 = vmatprep.subr.mxu0 0.0
    %176 = vmatpush1.msra.mxu0 0.0
    %177 = vmatprep.subr.mxu0 0.0
    %178 = vmatpush1.msra.mxu0 0.0
    %179 = vmatprep.subr.mxu0 0.0
    %180 = vmatpush1.msra.mxu0 0.0
    %181 = vmatprep.subr.mxu0 0.0
    %182 = vmatpush1.msra.mxu0 0.0
    %183 = vmatprep.subr.mxu0 0.0
    %184 = vmatpush1.msra.mxu0 0.0
    %185 = vmatprep.subr.mxu0 0.0
    %186 = vmatpush1.msra.mxu0 0.0
    %187 = vmatprep.subr.mxu0 0.0
    %188 = vmatpush1.msra.mxu0 0.0
    %189 = vmatprep.mubr.f32.mxu0 0.0
    %190 = vmatmul.mubr.f32.gmra.mrb[0].mxu0 %v93
    %v191 = vpop.f32.mrb[0].mxu0
    %v192 = vadd.f32 0.0, %v191
    %v193 = vpop.f32.mrb[0].mxu0
    %194 = vmatprep.mubr.f32.mxu0 0.0
    %195 = vmatmul.mubr.f32.gmra.mrb[0].mxu0 %v94
    %v196 = vpop.f32.mrb[0].mxu0
    %v197 = vadd.f32 0.0, %v196
    %v198 = vpop.f32.mrb[0].mxu0
    %199 = vmatprep.mubr.f32.mxu0 0.0
    %200 = vmatmul.mubr.f32.gmra.mrb[0].mxu0 %v95
    %v201 = vpop.f32.mrb[0].mxu0
    %v202 = vadd.f32 0.0, %v201
    %v203 = vpop.f32.mrb[0].mxu0
    %204 = vmatprep.mubr.f32.mxu0 0.0
    %205 = vmatmul.mubr.f32.gmra.mrb[0].mxu0 %v96
    %v206 = vpop.f32.mrb[0].mxu0
    %v207 = vadd.f32 0.0, %v206
    %v208 = vpop.f32.mrb[0].mxu0
    %209 = vmatprep.mubr.f32.mxu0 0.0
    %210 = vmatmul.mubr.f32.gmra.mrb[0].mxu0 %v97
    %v211 = vpop.f32.mrb[0].mxu0
    %v212 = vadd.f32 0.0, %v211
    %v213 = vpop.f32.mrb[0].mxu0
    %214 = vmatprep.mubr.f32.mxu0 0.0
    %215 = vmatmul.mubr.f32.gmra.mrb[0].mxu0 %v98
    %v216 = vpop.f32.mrb[0].mxu0
    %v217 = vadd.f32 0.0, %v216
    %v218 = vpop.f32.mrb[0].mxu0
    %219 = vmatprep.mubr.f32.mxu0 0.0
    %220 = vmatmul.mubr.f32.gmra.mrb[0].mxu0 %v99
    %v221 = vpop.f32.mrb[0].mxu0
    %v222 = vadd.f32 0.0, %v221
    %v223 = vpop.f32.mrb[0].mxu0
    %224 = vmatprep.mubr.f32.mxu0 0.0
    %225 = vmatmul.mubr.f32.gmra.mrb[0].mxu0 %v100
    %v226 = vpop.f32.mrb[0].mxu0
    %v227 = vadd.f32 0.0, %v226
    %v228 = vpop.f32.mrb[0].mxu0
    %229 = vmatprep.mubr.f32.mxu0 0.0
    %230 = vmatmul.mubr.f32.gmra.mrb[0].mxu0 %v101
    %v231 = vpop.f32.mrb[0].mxu0
    %v232 = vadd.f32 0.0, %v231
    %v233 = vpop.f32.mrb[0].mxu0
    %234 = vmatprep.mubr.f32.mxu0 0.0
    %235 = vmatmul.mubr.f32.gmra.mrb[0].mxu0 %v102
    %v236 = vpop.f32.mrb[0].mxu0
    %v237 = vadd.f32 0.0, %v236
    %v238 = vpop.f32.mrb[0].mxu0
    %239 = vmatprep.mubr.f32.mxu0 0.0
    %240 = vmatmul.mubr.f32.gmra.mrb[0].mxu0 %v103
    %v241 = vpop.f32.mrb[0].mxu0
    %v242 = vadd.f32 0.0, %v241
    %v243 = vpop.f32.mrb[0].mxu0
    %244 = vmatprep.mubr.f32.mxu0 0.0
    %245 = vmatmul.mubr.f32.gmra.mrb[0].mxu0 %v104
    %v246 = vpop.f32.mrb[0].mxu0
    %v247 = vadd.f32 0.0, %v246
    %v248 = vpop.f32.mrb[0].mxu0
    %249 = vmatprep.mubr.f32.mxu0 0.0
    %250 = vmatmul.mubr.f32.gmra.mrb[0].mxu0 %v105
    %v251 = vpop.f32.mrb[0].mxu0
    %v252 = vadd.f32 0.0, %v251
    %v253 = vpop.f32.mrb[0].mxu0
    %254 = vmatprep.mubr.f32.mxu0 0.0
    %255 = vmatmul.mubr.f32.gmra.mrb[0].mxu0 %v106
    %v256 = vpop.f32.mrb[0].mxu0
    %v257 = vadd.f32 0.0, %v256
    %v258 = vpop.f32.mrb[0].mxu0
    %259 = vmatprep.mubr.f32.mxu0 0.0
    %260 = vmatmul.mubr.f32.gmra.mrb[0].mxu0 %v107
    %v261 = vpop.f32.mrb[0].mxu0
    %v262 = vadd.f32 0.0, %v261
    %v263 = vpop.f32.mrb[0].mxu0
    %264 = vmatprep.mubr.f32.mxu0 0.0
    %265 = vmatmul.mubr.f32.gmra.mrb[0].mxu0 %v108
    %v266 = vpop.f32.mrb[0].mxu0
    %v267 = vadd.f32 0.0, %v266
    %v268 = vpop.f32.mrb[0].mxu0
    %269 = vdwg.mxu0
    %270 = vmatprep.subr.mxu0 0.0
    %271 = vmatpush1.msra.mxu0 %v77
    %272 = vmatprep.subr.mxu0 0.0
    %273 = vmatpush1.msra.mxu0 %v78
    %274 = vmatprep.subr.mxu0 0.0
    %275 = vmatpush1.msra.mxu0 %v79
    %276 = vmatprep.subr.mxu0 0.0
    %277 = vmatpush1.msra.mxu0 %v80
    %278 = vmatprep.subr.mxu0 0.0
    %279 = vmatpush1.msra.mxu0 %v81
    %280 = vmatprep.subr.mxu0 0.0
    %281 = vmatpush1.msra.mxu0 %v82
    %282 = vmatprep.subr.mxu0 0.0
    %283 = vmatpush1.msra.mxu0 %v83
    %284 = vmatprep.subr.mxu0 0.0
    %285 = vmatpush1.msra.mxu0 %v84
    %286 = vmatprep.subr.mxu0 0.0
    %287 = vmatpush1.msra.mxu0 %v85
    %288 = vmatprep.subr.mxu0 0.0
    %289 = vmatpush1.msra.mxu0 %v86
    %290 = vmatprep.subr.mxu0 0.0
    %291 = vmatpush1.msra.mxu0 %v87
    %292 = vmatprep.subr.mxu0 0.0
    %293 = vmatpush1.msra.mxu0 %v88
    %294 = vmatprep.subr.mxu0 0.0
    %295 = vmatpush1.msra.mxu0 %v89
    %296 = vmatprep.subr.mxu0 0.0
    %297 = vmatpush1.msra.mxu0 %v90
    %298 = vmatprep.subr.mxu0 0.0
    %299 = vmatpush1.msra.mxu0 %v91
    %300 = vmatprep.subr.mxu0 0.0
    %301 = vmatpush1.msra.mxu0 %v92
    %302 = vmatprep.subr.mxu0 0.0
    %303 = vmatpush1.msra.mxu0 0.0
    %304 = vmatprep.subr.mxu0 0.0
    %305 = vmatpush1.msra.mxu0 0.0
    %306 = vmatprep.subr.mxu0 0.0
    %307 = vmatpush1.msra.mxu0 0.0
    %308 = vmatprep.subr.mxu0 0.0
    %309 = vmatpush1.msra.mxu0 0.0
    %310 = vmatprep.subr.mxu0 0.0
    %311 = vmatpush1.msra.mxu0 0.0
    %312 = vmatprep.subr.mxu0 0.0
    %313 = vmatpush1.msra.mxu0 0.0
    %314 = vmatprep.subr.mxu0 0.0
    %315 = vmatpush1.msra.mxu0 0.0
    %316 = vmatprep.subr.mxu0 0.0
    %317 = vmatpush1.msra.mxu0 0.0
    %318 = vmatprep.subr.mxu0 0.0
    %319 = vmatpush1.msra.mxu0 0.0
    %320 = vmatprep.subr.mxu0 0.0
    %321 = vmatpush1.msra.mxu0 0.0
    %322 = vmatprep.subr.mxu0 0.0
    %323 = vmatpush1.msra.mxu0 0.0
    %324 = vmatprep.subr.mxu0 0.0
    %325 = vmatpush1.msra.mxu0 0.0
    %326 = vmatprep.subr.mxu0 0.0
    %327 = vmatpush1.msra.mxu0 0.0
    %328 = vmatprep.subr.mxu0 0.0
    %329 = vmatpush1.msra.mxu0 0.0
    %330 = vmatprep.subr.mxu0 0.0
    %331 = vmatpush1.msra.mxu0 0.0
    %332 = vmatprep.subr.mxu0 0.0
    %333 = vmatpush1.msra.mxu0 0.0
    %334 = vmatprep.mubr.f32.mxu0 0.0
    %335 = vmatmul.mubr.f32.gmra.mrb[0].mxu0 %v109
    %v336 = vpop.f32.mrb[0].mxu0
    %v337 = vadd.f32 0.0, %v336
    %v338 = vpop.f32.mrb[0].mxu0
    %339 = vmatprep.mubr.f32.mxu0 0.0
    %340 = vmatmul.mubr.f32.gmra.mrb[0].mxu0 %v110
    %v341 = vpop.f32.mrb[0].mxu0
    %v342 = vadd.f32 0.0, %v341
    %v343 = vpop.f32.mrb[0].mxu0
    %344 = vmatprep.mubr.f32.mxu0 0.0
    %345 = vmatmul.mubr.f32.gmra.mrb[0].mxu0 %v111
    %v346 = vpop.f32.mrb[0].mxu0
    %v347 = vadd.f32 0.0, %v346
    %v348 = vpop.f32.mrb[0].mxu0
    %349 = vmatprep.mubr.f32.mxu0 0.0
    %350 = vmatmul.mubr.f32.gmra.mrb[0].mxu0 %v112
    %v351 = vpop.f32.mrb[0].mxu0
    %v352 = vadd.f32 0.0, %v351
    %v353 = vpop.f32.mrb[0].mxu0
    %354 = vmatprep.mubr.f32.mxu0 0.0
    %355 = vmatmul.mubr.f32.gmra.mrb[0].mxu0 %v113
    %v356 = vpop.f32.mrb[0].mxu0
    %v357 = vadd.f32 0.0, %v356
    %v358 = vpop.f32.mrb[0].mxu0
    %359 = vmatprep.mubr.f32.mxu0 0.0
    %360 = vmatmul.mubr.f32.gmra.mrb[0].mxu0 %v114
    %v361 = vpop.f32.mrb[0].mxu0
    %v362 = vadd.f32 0.0, %v361
    %v363 = vpop.f32.mrb[0].mxu0
    %364 = vmatprep.mubr.f32.mxu0 0.0
    %365 = vmatmul.mubr.f32.gmra.mrb[0].mxu0 %v115
    %v366 = vpop.f32.mrb[0].mxu0
    %v367 = vadd.f32 0.0, %v366
    %v368 = vpop.f32.mrb[0].mxu0
    %369 = vmatprep.mubr.f32.mxu0 0.0
    %370 = vmatmul.mubr.f32.gmra.mrb[0].mxu0 %v116
    %v371 = vpop.f32.mrb[0].mxu0
    %v372 = vadd.f32 0.0, %v371
    %v373 = vpop.f32.mrb[0].mxu0
    %374 = vmatprep.mubr.f32.mxu0 0.0
    %375 = vmatmul.mubr.f32.gmra.mrb[0].mxu0 %v117
    %v376 = vpop.f32.mrb[0].mxu0
    %v377 = vadd.f32 0.0, %v376
    %v378 = vpop.f32.mrb[0].mxu0
    %379 = vmatprep.mubr.f32.mxu0 0.0
    %380 = vmatmul.mubr.f32.gmra.mrb[0].mxu0 %v118
    %v381 = vpop.f32.mrb[0].mxu0
    %v382 = vadd.f32 0.0, %v381
    %v383 = vpop.f32.mrb[0].mxu0
    %384 = vmatprep.mubr.f32.mxu0 0.0
    %385 = vmatmul.mubr.f32.gmra.mrb[0].mxu0 %v119
    %v386 = vpop.f32.mrb[0].mxu0
    %v387 = vadd.f32 0.0, %v386
    %v388 = vpop.f32.mrb[0].mxu0
    %389 = vmatprep.mubr.f32.mxu0 0.0
    %390 = vmatmul.mubr.f32.gmra.mrb[0].mxu0 %v120
    %v391 = vpop.f32.mrb[0].mxu0
    %v392 = vadd.f32 0.0, %v391
    %v393 = vpop.f32.mrb[0].mxu0
    %394 = vmatprep.mubr.f32.mxu0 0.0
    %395 = vmatmul.mubr.f32.gmra.mrb[0].mxu0 %v121
    %v396 = vpop.f32.mrb[0].mxu0
    %v397 = vadd.f32 0.0, %v396
    %v398 = vpop.f32.mrb[0].mxu0
    %399 = vmatprep.mubr.f32.mxu0 0.0
    %400 = vmatmul.mubr.f32.gmra.mrb[0].mxu0 %v122
    %v401 = vpop.f32.mrb[0].mxu0
    %v402 = vadd.f32 0.0, %v401
    %v403 = vpop.f32.mrb[0].mxu0
    %404 = vmatprep.mubr.f32.mxu0 0.0
    %405 = vmatmul.mubr.f32.gmra.mrb[0].mxu0 %v123
    %v406 = vpop.f32.mrb[0].mxu0
    %v407 = vadd.f32 0.0, %v406
    %v408 = vpop.f32.mrb[0].mxu0
    %409 = vmatprep.mubr.f32.mxu0 0.0
    %410 = vmatmul.mubr.f32.gmra.mrb[0].mxu0 %v124
    %v411 = vpop.f32.mrb[0].mxu0
    %v412 = vadd.f32 0.0, %v411
    %v413 = vpop.f32.mrb[0].mxu0
    %414 = vdwg.mxu0
    %v415 = vld [vmem:[%s3] sm:$0x7]
    %417 = vset.pattern.permute.xlu0 0
    %418 = vperm.xlu0 %417, %v192
    %v419 = vpop.permute.xlu0 %418
    %422 = vset.pattern.permute.xlu0 0
    %423 = vperm.xlu0 %422, %v197
    %v424 = vpop.permute.xlu0 %423
    %427 = vset.pattern.permute.xlu0 0
    %428 = vperm.xlu0 %427, %v202
    %v429 = vpop.permute.xlu0 %428
    %432 = vset.pattern.permute.xlu0 0
    %433 = vperm.xlu0 %432, %v207
    %v434 = vpop.permute.xlu0 %433
    %437 = vset.pattern.permute.xlu0 0
    %438 = vperm.xlu0 %437, %v212
    %v439 = vpop.permute.xlu0 %438
    %442 = vset.pattern.permute.xlu0 0
    %443 = vperm.xlu0 %442, %v217
    %v444 = vpop.permute.xlu0 %443
    %447 = vset.pattern.permute.xlu0 0
    %448 = vperm.xlu0 %447, %v222
    %v449 = vpop.permute.xlu0 %448
    %452 = vset.pattern.permute.xlu0 0
    %453 = vperm.xlu0 %452, %v227
    %v454 = vpop.permute.xlu0 %453
    %457 = vset.pattern.permute.xlu0 0
    %458 = vperm.xlu0 %457, %v232
    %v459 = vpop.permute.xlu0 %458
    %462 = vset.pattern.permute.xlu0 0
    %463 = vperm.xlu0 %462, %v237
    %v464 = vpop.permute.xlu0 %463
    %467 = vset.pattern.permute.xlu0 0
    %468 = vperm.xlu0 %467, %v242
    %v469 = vpop.permute.xlu0 %468
    %472 = vset.pattern.permute.xlu0 0
    %473 = vperm.xlu0 %472, %v247
    %v474 = vpop.permute.xlu0 %473
    %477 = vset.pattern.permute.xlu0 0
    %478 = vperm.xlu0 %477, %v252
    %v479 = vpop.permute.xlu0 %478
    %482 = vset.pattern.permute.xlu0 0
    %483 = vperm.xlu0 %482, %v257
    %v484 = vpop.permute.xlu0 %483
    %487 = vset.pattern.permute.xlu0 0
    %488 = vperm.xlu0 %487, %v262
    %v489 = vpop.permute.xlu0 %488
    %492 = vset.pattern.permute.xlu0 0
    %493 = vperm.xlu0 %492, %v267
    %v494 = vpop.permute.xlu0 %493
    %v496 = vlaneseq
    %v497 = vshrl.u32 %v496, 7
    %v498 = vsub.s32 0, %v497
    %v499 = vrot.slane %v415, %v498
    %v500 = vmul.f32 %v419, %v499
    %v501 = vmul.f32 %v424, %v499
    %v502 = vmul.f32 %v429, %v499
    %v503 = vmul.f32 %v434, %v499
    %v504 = vmul.f32 %v439, %v499
    %v505 = vmul.f32 %v444, %v499
    %v506 = vmul.f32 %v449, %v499
    %v507 = vmul.f32 %v454, %v499
    %v508 = vmul.f32 %v459, %v499
    %v509 = vmul.f32 %v464, %v499
    %v510 = vmul.f32 %v469, %v499
    %v511 = vmul.f32 %v474, %v499
    %v512 = vmul.f32 %v479, %v499
    %v513 = vmul.f32 %v484, %v499
    %v514 = vmul.f32 %v489, %v499
    %v515 = vmul.f32 %v494, %v499
    %517 = vset.pattern.permute.xlu0 0
    %518 = vperm.xlu0 %517, %v77
    %v519 = vpop.permute.xlu0 %518
    %522 = vset.pattern.permute.xlu0 0
    %523 = vperm.xlu0 %522, %v78
    %v524 = vpop.permute.xlu0 %523
    %527 = vset.pattern.permute.xlu0 0
    %528 = vperm.xlu0 %527, %v79
    %v529 = vpop.permute.xlu0 %528
    %532 = vset.pattern.permute.xlu0 0
    %533 = vperm.xlu0 %532, %v80
    %v534 = vpop.permute.xlu0 %533
    %537 = vset.pattern.permute.xlu0 0
    %538 = vperm.xlu0 %537, %v81
    %v539 = vpop.permute.xlu0 %538
    %542 = vset.pattern.permute.xlu0 0
    %543 = vperm.xlu0 %542, %v82
    %v544 = vpop.permute.xlu0 %543
    %547 = vset.pattern.permute.xlu0 0
    %548 = vperm.xlu0 %547, %v83
    %v549 = vpop.permute.xlu0 %548
    %552 = vset.pattern.permute.xlu0 0
    %553 = vperm.xlu0 %552, %v84
    %v554 = vpop.permute.xlu0 %553
    %557 = vset.pattern.permute.xlu0 0
    %558 = vperm.xlu0 %557, %v85
    %v559 = vpop.permute.xlu0 %558
    %562 = vset.pattern.permute.xlu0 0
    %563 = vperm.xlu0 %562, %v86
    %v564 = vpop.permute.xlu0 %563
    %567 = vset.pattern.permute.xlu0 0
    %568 = vperm.xlu0 %567, %v87
    %v569 = vpop.permute.xlu0 %568
    %572 = vset.pattern.permute.xlu0 0
    %573 = vperm.xlu0 %572, %v88
    %v574 = vpop.permute.xlu0 %573
    %577 = vset.pattern.permute.xlu0 0
    %578 = vperm.xlu0 %577, %v89
    %v579 = vpop.permute.xlu0 %578
    %582 = vset.pattern.permute.xlu0 0
    %583 = vperm.xlu0 %582, %v90
    %v584 = vpop.permute.xlu0 %583
    %587 = vset.pattern.permute.xlu0 0
    %588 = vperm.xlu0 %587, %v91
    %v589 = vpop.permute.xlu0 %588
    %592 = vset.pattern.permute.xlu0 0
    %593 = vperm.xlu0 %592, %v92
    %v594 = vpop.permute.xlu0 %593
    %v596 = vlaneseq
    %v597 = vshrl.u32 %v596, 7
    %v598 = vsub.s32 1, %v597
    %v599 = vrot.slane %v415, %v598
    %v600 = vmul.f32 %v519, %v599
    %v601 = vmul.f32 %v524, %v599
    %v602 = vmul.f32 %v529, %v599
    %v603 = vmul.f32 %v534, %v599
    %v604 = vmul.f32 %v539, %v599
    %v605 = vmul.f32 %v544, %v599
    %v606 = vmul.f32 %v549, %v599
    %v607 = vmul.f32 %v554, %v599
    %v608 = vmul.f32 %v559, %v599
    %v609 = vmul.f32 %v564, %v599
    %v610 = vmul.f32 %v569, %v599
    %v611 = vmul.f32 %v574, %v599
    %v612 = vmul.f32 %v579, %v599
    %v613 = vmul.f32 %v584, %v599
    %v614 = vmul.f32 %v589, %v599
    %v615 = vmul.f32 %v594, %v599
    %v616 = vadd.f32 %v500, %v600
    %v617 = vadd.f32 %v501, %v601
    %v618 = vadd.f32 %v502, %v602
    %v619 = vadd.f32 %v503, %v603
    %v620 = vadd.f32 %v504, %v604
    %v621 = vadd.f32 %v505, %v605
    %v622 = vadd.f32 %v506, %v606
    %v623 = vadd.f32 %v507, %v607
    %v624 = vadd.f32 %v508, %v608
    %v625 = vadd.f32 %v509, %v609
    %v626 = vadd.f32 %v510, %v610
    %v627 = vadd.f32 %v511, %v611
    %v628 = vadd.f32 %v512, %v612
    %v629 = vadd.f32 %v513, %v613
    %v630 = vadd.f32 %v514, %v614
    %v631 = vadd.f32 %v515, %v615
    %633 = vset.pattern.permute.xlu0 0
    %634 = vperm.xlu0 %633, %v337
    %v635 = vpop.permute.xlu0 %634
    %638 = vset.pattern.permute.xlu0 0
    %639 = vperm.xlu0 %638, %v342
    %v640 = vpop.permute.xlu0 %639
    %643 = vset.pattern.permute.xlu0 0
    %644 = vperm.xlu0 %643, %v347
    %v645 = vpop.permute.xlu0 %644
    %648 = vset.pattern.permute.xlu0 0
    %649 = vperm.xlu0 %648, %v352
    %v650 = vpop.permute.xlu0 %649
    %653 = vset.pattern.permute.xlu0 0
    %654 = vperm.xlu0 %653, %v357
    %v655 = vpop.permute.xlu0 %654
    %658 = vset.pattern.permute.xlu0 0
    %659 = vperm.xlu0 %658, %v362
    %v660 = vpop.permute.xlu0 %659
    %663 = vset.pattern.permute.xlu0 0
    %664 = vperm.xlu0 %663, %v367
    %v665 = vpop.permute.xlu0 %664
    %668 = vset.pattern.permute.xlu0 0
    %669 = vperm.xlu0 %668, %v372
    %v670 = vpop.permute.xlu0 %669
    %673 = vset.pattern.permute.xlu0 0
    %674 = vperm.xlu0 %673, %v377
    %v675 = vpop.permute.xlu0 %674
    %678 = vset.pattern.permute.xlu0 0
    %679 = vperm.xlu0 %678, %v382
    %v680 = vpop.permute.xlu0 %679
    %683 = vset.pattern.permute.xlu0 0
    %684 = vperm.xlu0 %683, %v387
    %v685 = vpop.permute.xlu0 %684
    %688 = vset.pattern.permute.xlu0 0
    %689 = vperm.xlu0 %688, %v392
    %v690 = vpop.permute.xlu0 %689
    %693 = vset.pattern.permute.xlu0 0
    %694 = vperm.xlu0 %693, %v397
    %v695 = vpop.permute.xlu0 %694
    %698 = vset.pattern.permute.xlu0 0
    %699 = vperm.xlu0 %698, %v402
    %v700 = vpop.permute.xlu0 %699
    %703 = vset.pattern.permute.xlu0 0
    %704 = vperm.xlu0 %703, %v407
    %v705 = vpop.permute.xlu0 %704
    %708 = vset.pattern.permute.xlu0 0
    %709 = vperm.xlu0 %708, %v412
    %v710 = vpop.permute.xlu0 %709
    %v712 = vlaneseq
    %v713 = vshrl.u32 %v712, 7
    %v714 = vsub.s32 2, %v713
    %v715 = vrot.slane %v415, %v714
    %v716 = vmul.f32 %v635, %v715
    %v717 = vmul.f32 %v640, %v715
    %v718 = vmul.f32 %v645, %v715
    %v719 = vmul.f32 %v650, %v715
    %v720 = vmul.f32 %v655, %v715
    %v721 = vmul.f32 %v660, %v715
    %v722 = vmul.f32 %v665, %v715
    %v723 = vmul.f32 %v670, %v715
    %v724 = vmul.f32 %v675, %v715
    %v725 = vmul.f32 %v680, %v715
    %v726 = vmul.f32 %v685, %v715
    %v727 = vmul.f32 %v690, %v715
    %v728 = vmul.f32 %v695, %v715
    %v729 = vmul.f32 %v700, %v715
    %v730 = vmul.f32 %v705, %v715
    %v731 = vmul.f32 %v710, %v715
    %v732 = vadd.f32 %v616, %v716
    %v733 = vadd.f32 %v617, %v717
    %v734 = vadd.f32 %v618, %v718
    %v735 = vadd.f32 %v619, %v719
    %v736 = vadd.f32 %v620, %v720
    %v737 = vadd.f32 %v621, %v721
    %v738 = vadd.f32 %v622, %v722
    %v739 = vadd.f32 %v623, %v723
    %v740 = vadd.f32 %v624, %v724
    %v741 = vadd.f32 %v625, %v725
    %v742 = vadd.f32 %v626, %v726
    %v743 = vadd.f32 %v627, %v727
    %v744 = vadd.f32 %v628, %v728
    %v745 = vadd.f32 %v629, %v729
    %v746 = vadd.f32 %v630, %v730
    %v747 = vadd.f32 %v631, %v731
    %v748 = vld [vmem:[%s4] sm:$0x1]
    %v750 = vlaneseq
    %v751 = vshrl.u32 %v750, 7
    %v752 = vsub.s32 0, %v751
    %v753 = vrot.slane %v748, %v752
    %v755 = vadd.f32 %v732, %v753
    %v756 = vadd.f32 %v733, %v753
    %v757 = vadd.f32 %v734, %v753
    %v758 = vadd.f32 %v735, %v753
    %v759 = vadd.f32 %v736, %v753
    %v760 = vadd.f32 %v737, %v753
    %v761 = vadd.f32 %v738, %v753
    %v762 = vadd.f32 %v739, %v753
    %v763 = vadd.f32 %v740, %v753
    %v764 = vadd.f32 %v741, %v753
    %v765 = vadd.f32 %v742, %v753
    %v766 = vadd.f32 %v743, %v753
    %v767 = vadd.f32 %v744, %v753
    %v768 = vadd.f32 %v745, %v753
    %v769 = vadd.f32 %v746, %v753
    %v770 = vadd.f32 %v747, %v753
    %v771 = vmax.f32 %v755, 0.0
    %v772 = vmax.f32 %v756, 0.0
    %v773 = vmax.f32 %v757, 0.0
    %v774 = vmax.f32 %v758, 0.0
    %v775 = vmax.f32 %v759, 0.0
    %v776 = vmax.f32 %v760, 0.0
    %v777 = vmax.f32 %v761, 0.0
    %v778 = vmax.f32 %v762, 0.0
    %v779 = vmax.f32 %v763, 0.0
    %v780 = vmax.f32 %v764, 0.0
    %v781 = vmax.f32 %v765, 0.0
    %v782 = vmax.f32 %v766, 0.0
    %v783 = vmax.f32 %v767, 0.0
    %v784 = vmax.f32 %v768, 0.0
    %v785 = vmax.f32 %v769, 0.0
    %v786 = vmax.f32 %v770, 0.0
    %787 = vmatprep.subr.mxu0 0.0
    %788 = vmatpush1.msra.mxu0 %v771
    %789 = vmatprep.subr.mxu0 0.0
    %790 = vmatpush1.msra.mxu0 %v772
    %791 = vmatprep.subr.mxu0 0.0
    %792 = vmatpush1.msra.mxu0 %v773
    %793 = vmatprep.subr.mxu0 0.0
    %794 = vmatpush1.msra.mxu0 %v774
    %795 = vmatprep.subr.mxu0 0.0
    %796 = vmatpush1.msra.mxu0 %v775
    %797 = vmatprep.subr.mxu0 0.0
    %798 = vmatpush1.msra.mxu0 %v776
    %799 = vmatprep.subr.mxu0 0.0
    %800 = vmatpush1.msra.mxu0 %v777
    %801 = vmatprep.subr.mxu0 0.0
    %802 = vmatpush1.msra.mxu0 %v778
    %803 = vmatprep.subr.mxu0 0.0
    %804 = vmatpush1.msra.mxu0 %v779
    %805 = vmatprep.subr.mxu0 0.0
    %806 = vmatpush1.msra.mxu0 %v780
    %807 = vmatprep.subr.mxu0 0.0
    %808 = vmatpush1.msra.mxu0 %v781
    %809 = vmatprep.subr.mxu0 0.0
    %810 = vmatpush1.msra.mxu0 %v782
    %811 = vmatprep.subr.mxu0 0.0
    %812 = vmatpush1.msra.mxu0 %v783
    %813 = vmatprep.subr.mxu0 0.0
    %814 = vmatpush1.msra.mxu0 %v784
    %815 = vmatprep.subr.mxu0 0.0
    %816 = vmatpush1.msra.mxu0 %v785
    %817 = vmatprep.subr.mxu0 0.0
    %818 = vmatpush1.msra.mxu0 %v786
    %819 = vmatprep.subr.mxu0 0.0
    %820 = vmatpush1.msra.mxu0 0.0
    %821 = vmatprep.subr.mxu0 0.0
    %822 = vmatpush1.msra.mxu0 0.0
    %823 = vmatprep.subr.mxu0 0.0
    %824 = vmatpush1.msra.mxu0 0.0
    %825 = vmatprep.subr.mxu0 0.0
    %826 = vmatpush1.msra.mxu0 0.0
    %827 = vmatprep.subr.mxu0 0.0
    %828 = vmatpush1.msra.mxu0 0.0
    %829 = vmatprep.subr.mxu0 0.0
    %830 = vmatpush1.msra.mxu0 0.0
    %831 = vmatprep.subr.mxu0 0.0
    %832 = vmatpush1.msra.mxu0 0.0
    %833 = vmatprep.subr.mxu0 0.0
    %834 = vmatpush1.msra.mxu0 0.0
    %835 = vmatprep.subr.mxu0 0.0
    %836 = vmatpush1.msra.mxu0 0.0
    %837 = vmatprep.subr.mxu0 0.0
    %838 = vmatpush1.msra.mxu0 0.0
    %839 = vmatprep.subr.mxu0 0.0
    %840 = vmatpush1.msra.mxu0 0.0
    %841 = vmatprep.subr.mxu0 0.0
    %842 = vmatpush1.msra.mxu0 0.0
    %843 = vmatprep.subr.mxu0 0.0
    %844 = vmatpush1.msra.mxu0 0.0
    %845 = vmatprep.subr.mxu0 0.0
    %846 = vmatpush1.msra.mxu0 0.0
    %847 = vmatprep.subr.mxu0 0.0
    %848 = vmatpush1.msra.mxu0 0.0
    %849 = vmatprep.subr.mxu0 0.0
    %850 = vmatpush1.msra.mxu0 0.0
    %851 = vmatprep.mubr.f32.mxu0 0.0
    %852 = vmatmul.mubr.f32.gmra.mrb[0].mxu0 %v93
    %v853 = vpop.f32.mrb[0].mxu0
    %v854 = vadd.f32 0.0, %v853
    %v855 = vpop.f32.mrb[0].mxu0
    %856 = vmatprep.mubr.f32.mxu0 0.0
    %857 = vmatmul.mubr.f32.gmra.mrb[0].mxu0 %v94
    %v858 = vpop.f32.mrb[0].mxu0
    %v859 = vadd.f32 0.0, %v858
    %v860 = vpop.f32.mrb[0].mxu0
    %861 = vmatprep.mubr.f32.mxu0 0.0
    %862 = vmatmul.mubr.f32.gmra.mrb[0].mxu0 %v95
    %v863 = vpop.f32.mrb[0].mxu0
    %v864 = vadd.f32 0.0, %v863
    %v865 = vpop.f32.mrb[0].mxu0
    %866 = vmatprep.mubr.f32.mxu0 0.0
    %867 = vmatmul.mubr.f32.gmra.mrb[0].mxu0 %v96
    %v868 = vpop.f32.mrb[0].mxu0
    %v869 = vadd.f32 0.0, %v868
    %v870 = vpop.f32.mrb[0].mxu0
    %871 = vmatprep.mubr.f32.mxu0 0.0
    %872 = vmatmul.mubr.f32.gmra.mrb[0].mxu0 %v97
    %v873 = vpop.f32.mrb[0].mxu0
    %v874 = vadd.f32 0.0, %v873
    %v875 = vpop.f32.mrb[0].mxu0
    %876 = vmatprep.mubr.f32.mxu0 0.0
    %877 = vmatmul.mubr.f32.gmra.mrb[0].mxu0 %v98
    %v878 = vpop.f32.mrb[0].mxu0
    %v879 = vadd.f32 0.0, %v878
    %v880 = vpop.f32.mrb[0].mxu0
    %881 = vmatprep.mubr.f32.mxu0 0.0
    %882 = vmatmul.mubr.f32.gmra.mrb[0].mxu0 %v99
    %v883 = vpop.f32.mrb[0].mxu0
    %v884 = vadd.f32 0.0, %v883
    %v885 = vpop.f32.mrb[0].mxu0
    %886 = vmatprep.mubr.f32.mxu0 0.0
    %887 = vmatmul.mubr.f32.gmra.mrb[0].mxu0 %v100
    %v888 = vpop.f32.mrb[0].mxu0
    %v889 = vadd.f32 0.0, %v888
    %v890 = vpop.f32.mrb[0].mxu0
    %891 = vmatprep.mubr.f32.mxu0 0.0
    %892 = vmatmul.mubr.f32.gmra.mrb[0].mxu0 %v101
    %v893 = vpop.f32.mrb[0].mxu0
    %v894 = vadd.f32 0.0, %v893
    %v895 = vpop.f32.mrb[0].mxu0
    %896 = vmatprep.mubr.f32.mxu0 0.0
    %897 = vmatmul.mubr.f32.gmra.mrb[0].mxu0 %v102
    %v898 = vpop.f32.mrb[0].mxu0
    %v899 = vadd.f32 0.0, %v898
    %v900 = vpop.f32.mrb[0].mxu0
    %901 = vmatprep.mubr.f32.mxu0 0.0
    %902 = vmatmul.mubr.f32.gmra.mrb[0].mxu0 %v103
    %v903 = vpop.f32.mrb[0].mxu0
    %v904 = vadd.f32 0.0, %v903
    %v905 = vpop.f32.mrb[0].mxu0
    %906 = vmatprep.mubr.f32.mxu0 0.0
    %907 = vmatmul.mubr.f32.gmra.mrb[0].mxu0 %v104
    %v908 = vpop.f32.mrb[0].mxu0
    %v909 = vadd.f32 0.0, %v908
    %v910 = vpop.f32.mrb[0].mxu0
    %911 = vmatprep.mubr.f32.mxu0 0.0
    %912 = vmatmul.mubr.f32.gmra.mrb[0].mxu0 %v105
    %v913 = vpop.f32.mrb[0].mxu0
    %v914 = vadd.f32 0.0, %v913
    %v915 = vpop.f32.mrb[0].mxu0
    %916 = vmatprep.mubr.f32.mxu0 0.0
    %917 = vmatmul.mubr.f32.gmra.mrb[0].mxu0 %v106
    %v918 = vpop.f32.mrb[0].mxu0
    %v919 = vadd.f32 0.0, %v918
    %v920 = vpop.f32.mrb[0].mxu0
    %921 = vmatprep.mubr.f32.mxu0 0.0
    %922 = vmatmul.mubr.f32.gmra.mrb[0].mxu0 %v107
    %v923 = vpop.f32.mrb[0].mxu0
    %v924 = vadd.f32 0.0, %v923
    %v925 = vpop.f32.mrb[0].mxu0
    %926 = vmatprep.mubr.f32.mxu0 0.0
    %927 = vmatmul.mubr.f32.gmra.mrb[0].mxu0 %v108
    %v928 = vpop.f32.mrb[0].mxu0
    %v929 = vadd.f32 0.0, %v928
    %v930 = vpop.f32.mrb[0].mxu0
    %931 = vdwg.mxu0
    %932 = vmatprep.subr.mxu0 0.0
    %933 = vmatpush1.msra.mxu0 %v771
    %934 = vmatprep.subr.mxu0 0.0
    %935 = vmatpush1.msra.mxu0 %v772
    %936 = vmatprep.subr.mxu0 0.0
    %937 = vmatpush1.msra.mxu0 %v773
    %938 = vmatprep.subr.mxu0 0.0
    %939 = vmatpush1.msra.mxu0 %v774
    %940 = vmatprep.subr.mxu0 0.0
    %941 = vmatpush1.msra.mxu0 %v775
    %942 = vmatprep.subr.mxu0 0.0
    %943 = vmatpush1.msra.mxu0 %v776
    %944 = vmatprep.subr.mxu0 0.0
    %945 = vmatpush1.msra.mxu0 %v777
    %946 = vmatprep.subr.mxu0 0.0
    %947 = vmatpush1.msra.mxu0 %v778
    %948 = vmatprep.subr.mxu0 0.0
    %949 = vmatpush1.msra.mxu0 %v779
    %950 = vmatprep.subr.mxu0 0.0
    %951 = vmatpush1.msra.mxu0 %v780
    %952 = vmatprep.subr.mxu0 0.0
    %953 = vmatpush1.msra.mxu0 %v781
    %954 = vmatprep.subr.mxu0 0.0
    %955 = vmatpush1.msra.mxu0 %v782
    %956 = vmatprep.subr.mxu0 0.0
    %957 = vmatpush1.msra.mxu0 %v783
    %958 = vmatprep.subr.mxu0 0.0
    %959 = vmatpush1.msra.mxu0 %v784
    %960 = vmatprep.subr.mxu0 0.0
    %961 = vmatpush1.msra.mxu0 %v785
    %962 = vmatprep.subr.mxu0 0.0
    %963 = vmatpush1.msra.mxu0 %v786
    %964 = vmatprep.subr.mxu0 0.0
    %965 = vmatpush1.msra.mxu0 0.0
    %966 = vmatprep.subr.mxu0 0.0
    %967 = vmatpush1.msra.mxu0 0.0
    %968 = vmatprep.subr.mxu0 0.0
    %969 = vmatpush1.msra.mxu0 0.0
    %970 = vmatprep.subr.mxu0 0.0
    %971 = vmatpush1.msra.mxu0 0.0
    %972 = vmatprep.subr.mxu0 0.0
    %973 = vmatpush1.msra.mxu0 0.0
    %974 = vmatprep.subr.mxu0 0.0
    %975 = vmatpush1.msra.mxu0 0.0
    %976 = vmatprep.subr.mxu0 0.0
    %977 = vmatpush1.msra.mxu0 0.0
    %978 = vmatprep.subr.mxu0 0.0
    %979 = vmatpush1.msra.mxu0 0.0
    %980 = vmatprep.subr.mxu0 0.0
    %981 = vmatpush1.msra.mxu0 0.0
    %982 = vmatprep.subr.mxu0 0.0
    %983 = vmatpush1.msra.mxu0 0.0
    %984 = vmatprep.subr.mxu0 0.0
    %985 = vmatpush1.msra.mxu0 0.0
    %986 = vmatprep.subr.mxu0 0.0
    %987 = vmatpush1.msra.mxu0 0.0
    %988 = vmatprep.subr.mxu0 0.0
    %989 = vmatpush1.msra.mxu0 0.0
    %990 = vmatprep.subr.mxu0 0.0
    %991 = vmatpush1.msra.mxu0 0.0
    %992 = vmatprep.subr.mxu0 0.0
    %993 = vmatpush1.msra.mxu0 0.0
    %994 = vmatprep.subr.mxu0 0.0
    %995 = vmatpush1.msra.mxu0 0.0
    %996 = vmatprep.mubr.f32.mxu0 0.0
    %997 = vmatmul.mubr.f32.gmra.mrb[0].mxu0 %v109
    %v998 = vpop.f32.mrb[0].mxu0
    %v999 = vadd.f32 0.0, %v998
    %v1000 = vpop.f32.mrb[0].mxu0
    %1001 = vmatprep.mubr.f32.mxu0 0.0
    %1002 = vmatmul.mubr.f32.gmra.mrb[0].mxu0 %v110
    %v1003 = vpop.f32.mrb[0].mxu0
    %v1004 = vadd.f32 0.0, %v1003
    %v1005 = vpop.f32.mrb[0].mxu0
    %1006 = vmatprep.mubr.f32.mxu0 0.0
    %1007 = vmatmul.mubr.f32.gmra.mrb[0].mxu0 %v111
    %v1008 = vpop.f32.mrb[0].mxu0
    %v1009 = vadd.f32 0.0, %v1008
    %v1010 = vpop.f32.mrb[0].mxu0
    %1011 = vmatprep.mubr.f32.mxu0 0.0
    %1012 = vmatmul.mubr.f32.gmra.mrb[0].mxu0 %v112
    %v1013 = vpop.f32.mrb[0].mxu0
    %v1014 = vadd.f32 0.0, %v1013
    %v1015 = vpop.f32.mrb[0].mxu0
    %1016 = vmatprep.mubr.f32.mxu0 0.0
    %1017 = vmatmul.mubr.f32.gmra.mrb[0].mxu0 %v113
    %v1018 = vpop.f32.mrb[0].mxu0
    %v1019 = vadd.f32 0.0, %v1018
    %v1020 = vpop.f32.mrb[0].mxu0
    %1021 = vmatprep.mubr.f32.mxu0 0.0
    %1022 = vmatmul.mubr.f32.gmra.mrb[0].mxu0 %v114
    %v1023 = vpop.f32.mrb[0].mxu0
    %v1024 = vadd.f32 0.0, %v1023
    %v1025 = vpop.f32.mrb[0].mxu0
    %1026 = vmatprep.mubr.f32.mxu0 0.0
    %1027 = vmatmul.mubr.f32.gmra.mrb[0].mxu0 %v115
    %v1028 = vpop.f32.mrb[0].mxu0
    %v1029 = vadd.f32 0.0, %v1028
    %v1030 = vpop.f32.mrb[0].mxu0
    %1031 = vmatprep.mubr.f32.mxu0 0.0
    %1032 = vmatmul.mubr.f32.gmra.mrb[0].mxu0 %v116
    %v1033 = vpop.f32.mrb[0].mxu0
    %v1034 = vadd.f32 0.0, %v1033
    %v1035 = vpop.f32.mrb[0].mxu0
    %1036 = vmatprep.mubr.f32.mxu0 0.0
    %1037 = vmatmul.mubr.f32.gmra.mrb[0].mxu0 %v117
    %v1038 = vpop.f32.mrb[0].mxu0
    %v1039 = vadd.f32 0.0, %v1038
    %v1040 = vpop.f32.mrb[0].mxu0
    %1041 = vmatprep.mubr.f32.mxu0 0.0
    %1042 = vmatmul.mubr.f32.gmra.mrb[0].mxu0 %v118
    %v1043 = vpop.f32.mrb[0].mxu0
    %v1044 = vadd.f32 0.0, %v1043
    %v1045 = vpop.f32.mrb[0].mxu0
    %1046 = vmatprep.mubr.f32.mxu0 0.0
    %1047 = vmatmul.mubr.f32.gmra.mrb[0].mxu0 %v119
    %v1048 = vpop.f32.mrb[0].mxu0
    %v1049 = vadd.f32 0.0, %v1048
    %v1050 = vpop.f32.mrb[0].mxu0
    %1051 = vmatprep.mubr.f32.mxu0 0.0
    %1052 = vmatmul.mubr.f32.gmra.mrb[0].mxu0 %v120
    %v1053 = vpop.f32.mrb[0].mxu0
    %v1054 = vadd.f32 0.0, %v1053
    %v1055 = vpop.f32.mrb[0].mxu0
    %1056 = vmatprep.mubr.f32.mxu0 0.0
    %1057 = vmatmul.mubr.f32.gmra.mrb[0].mxu0 %v121
    %v1058 = vpop.f32.mrb[0].mxu0
    %v1059 = vadd.f32 0.0, %v1058
    %v1060 = vpop.f32.mrb[0].mxu0
    %1061 = vmatprep.mubr.f32.mxu0 0.0
    %1062 = vmatmul.mubr.f32.gmra.mrb[0].mxu0 %v122
    %v1063 = vpop.f32.mrb[0].mxu0
    %v1064 = vadd.f32 0.0, %v1063
    %v1065 = vpop.f32.mrb[0].mxu0
    %1066 = vmatprep.mubr.f32.mxu0 0.0
    %1067 = vmatmul.mubr.f32.gmra.mrb[0].mxu0 %v123
    %v1068 = vpop.f32.mrb[0].mxu0
    %v1069 = vadd.f32 0.0, %v1068
    %v1070 = vpop.f32.mrb[0].mxu0
    %1071 = vmatprep.mubr.f32.mxu0 0.0
    %1072 = vmatmul.mubr.f32.gmra.mrb[0].mxu0 %v124
    %v1073 = vpop.f32.mrb[0].mxu0
    %v1074 = vadd.f32 0.0, %v1073
    %v1075 = vpop.f32.mrb[0].mxu0
    %1076 = vdwg.mxu0
    %v1077 = vld [vmem:[%s5] sm:$0xff]
    %v1078 = vld [vmem:[%s5 + $0x8] sm:$0xff]
    %v1079 = vld [vmem:[%s5 + $0x10] sm:$0xff]
    %v1080 = vld [vmem:[%s5 + $0x18] sm:$0xff]
    %v1081 = vld [vmem:[%s5 + $0x20] sm:$0xff]
    %v1082 = vld [vmem:[%s5 + $0x28] sm:$0xff]
    %v1083 = vld [vmem:[%s5 + $0x30] sm:$0xff]
    %v1084 = vld [vmem:[%s5 + $0x38] sm:$0xff]
    %s1085 = scalar_lea.vmem %s5, 64
    %v1086 = vld [vmem:[%s1085] sm:$0xff]
    %v1087 = vld [vmem:[%s1085 + $0x8] sm:$0xff]
    %v1088 = vld [vmem:[%s1085 + $0x10] sm:$0xff]
    %v1089 = vld [vmem:[%s1085 + $0x18] sm:$0xff]
    %v1090 = vld [vmem:[%s1085 + $0x20] sm:$0xff]
    %v1091 = vld [vmem:[%s1085 + $0x28] sm:$0xff]
    %v1092 = vld [vmem:[%s1085 + $0x30] sm:$0xff]
    %v1093 = vld [vmem:[%s1085 + $0x38] sm:$0xff]
    %vm1094 = vcmask 523264
    %v1096 = vsel %vm1094, %v771, 0
    %v1099 = vsel %vm1094, %v772, 0
    %v1102 = vsel %vm1094, %v773, 0
    %v1105 = vsel %vm1094, %v774, 0
    %v1108 = vsel %vm1094, %v775, 0
    %v1111 = vsel %vm1094, %v776, 0
    %v1114 = vsel %vm1094, %v777, 0
    %v1117 = vsel %vm1094, %v778, 0
    %v1120 = vsel %vm1094, %v779, 0
    %v1123 = vsel %vm1094, %v780, 0
    %v1126 = vsel %vm1094, %v781, 0
    %v1129 = vsel %vm1094, %v782, 0
    %v1132 = vsel %vm1094, %v783, 0
    %v1135 = vsel %vm1094, %v784, 0
    %v1138 = vsel %vm1094, %v785, 0
    %v1141 = vsel %vm1094, %v786, 0
    %1143 = vmatprep.subr.mxu0 0.0
    %1144 = vmatpush1.msra.mxu0 %v1086
    %1145 = vmatprep.subr.mxu0 0.0
    %1146 = vmatpush1.msra.mxu0 %v1087
    %1147 = vmatprep.subr.mxu0 0.0
    %1148 = vmatpush1.msra.mxu0 %v1088
    %1149 = vmatprep.subr.mxu0 0.0
    %1150 = vmatpush1.msra.mxu0 %v1089
    %1151 = vmatprep.subr.mxu0 0.0
    %1152 = vmatpush1.msra.mxu0 %v1090
    %1153 = vmatprep.subr.mxu0 0.0
    %1154 = vmatpush1.msra.mxu0 %v1091
    %1155 = vmatprep.subr.mxu0 0.0
    %1156 = vmatpush1.msra.mxu0 %v1092
    %1157 = vmatprep.subr.mxu0 0.0
    %1158 = vmatpush1.msra.mxu0 %v1093
    %1159 = vmatprep.subr.mxu0 0.0
    %1160 = vmatpush1.msra.mxu0 0.0
    %1161 = vmatprep.subr.mxu0 0.0
    %1162 = vmatpush1.msra.mxu0 0.0
    %1163 = vmatprep.subr.mxu0 0.0
    %1164 = vmatpush1.msra.mxu0 0.0
    %1165 = vmatprep.subr.mxu0 0.0
    %1166 = vmatpush1.msra.mxu0 0.0
    %1167 = vmatprep.subr.mxu0 0.0
    %1168 = vmatpush1.msra.mxu0 0.0
    %1169 = vmatprep.subr.mxu0 0.0
    %1170 = vmatpush1.msra.mxu0 0.0
    %1171 = vmatprep.subr.mxu0 0.0
    %1172 = vmatpush1.msra.mxu0 0.0
    %1173 = vmatprep.subr.mxu0 0.0
    %1174 = vmatpush1.msra.mxu0 0.0
    %1175 = vmatprep.subr.mxu0 0.0
    %1176 = vmatpush1.msra.mxu0 0.0
    %1177 = vmatprep.subr.mxu0 0.0
    %1178 = vmatpush1.msra.mxu0 0.0
    %1179 = vmatprep.subr.mxu0 0.0
    %1180 = vmatpush1.msra.mxu0 0.0
    %1181 = vmatprep.subr.mxu0 0.0
    %1182 = vmatpush1.msra.mxu0 0.0
    %1183 = vmatprep.subr.mxu0 0.0
    %1184 = vmatpush1.msra.mxu0 0.0
    %1185 = vmatprep.subr.mxu0 0.0
    %1186 = vmatpush1.msra.mxu0 0.0
    %1187 = vmatprep.subr.mxu0 0.0
    %1188 = vmatpush1.msra.mxu0 0.0
    %1189 = vmatprep.subr.mxu0 0.0
    %1190 = vmatpush1.msra.mxu0 0.0
    %1191 = vmatprep.subr.mxu0 0.0
    %1192 = vmatpush1.msra.mxu0 0.0
    %1193 = vmatprep.subr.mxu0 0.0
    %1194 = vmatpush1.msra.mxu0 0.0
    %1195 = vmatprep.subr.mxu0 0.0
    %1196 = vmatpush1.msra.mxu0 0.0
    %1197 = vmatprep.subr.mxu0 0.0
    %1198 = vmatpush1.msra.mxu0 0.0
    %1199 = vmatprep.subr.mxu0 0.0
    %1200 = vmatpush1.msra.mxu0 0.0
    %1201 = vmatprep.subr.mxu0 0.0
    %1202 = vmatpush1.msra.mxu0 0.0
    %1203 = vmatprep.subr.mxu0 0.0
    %1204 = vmatpush1.msra.mxu0 0.0
    %1205 = vmatprep.subr.mxu0 0.0
    %1206 = vmatpush1.msra.mxu0 0.0
    %1207 = vmatprep.mubr.f32.mxu0 0.0
    %1208 = vmatmul.mubr.f32.gmra.mrb[0].mxu0 %v1096
    %v1209 = vpop.f32.mrb[0].mxu0
    %v1210 = vadd.f32 0.0, %v1209
    %v1211 = vpop.f32.mrb[0].mxu0
    %1212 = vmatprep.mubr.f32.mxu0 0.0
    %1213 = vmatmul.mubr.f32.gmra.mrb[0].mxu0 %v1099
    %v1214 = vpop.f32.mrb[0].mxu0
    %v1215 = vadd.f32 0.0, %v1214
    %v1216 = vpop.f32.mrb[0].mxu0
    %1217 = vmatprep.mubr.f32.mxu0 0.0
    %1218 = vmatmul.mubr.f32.gmra.mrb[0].mxu0 %v1102
    %v1219 = vpop.f32.mrb[0].mxu0
    %v1220 = vadd.f32 0.0, %v1219
    %v1221 = vpop.f32.mrb[0].mxu0
    %1222 = vmatprep.mubr.f32.mxu0 0.0
    %1223 = vmatmul.mubr.f32.gmra.mrb[0].mxu0 %v1105
    %v1224 = vpop.f32.mrb[0].mxu0
    %v1225 = vadd.f32 0.0, %v1224
    %v1226 = vpop.f32.mrb[0].mxu0
    %1227 = vmatprep.mubr.f32.mxu0 0.0
    %1228 = vmatmul.mubr.f32.gmra.mrb[0].mxu0 %v1108
    %v1229 = vpop.f32.mrb[0].mxu0
    %v1230 = vadd.f32 0.0, %v1229
    %v1231 = vpop.f32.mrb[0].mxu0
    %1232 = vmatprep.mubr.f32.mxu0 0.0
    %1233 = vmatmul.mubr.f32.gmra.mrb[0].mxu0 %v1111
    %v1234 = vpop.f32.mrb[0].mxu0
    %v1235 = vadd.f32 0.0, %v1234
    %v1236 = vpop.f32.mrb[0].mxu0
    %1237 = vmatprep.mubr.f32.mxu0 0.0
    %1238 = vmatmul.mubr.f32.gmra.mrb[0].mxu0 %v1114
    %v1239 = vpop.f32.mrb[0].mxu0
    %v1240 = vadd.f32 0.0, %v1239
    %v1241 = vpop.f32.mrb[0].mxu0
    %1242 = vmatprep.mubr.f32.mxu0 0.0
    %1243 = vmatmul.mubr.f32.gmra.mrb[0].mxu0 %v1117
    %v1244 = vpop.f32.mrb[0].mxu0
    %v1245 = vadd.f32 0.0, %v1244
    %v1246 = vpop.f32.mrb[0].mxu0
    %1247 = vmatprep.mubr.f32.mxu0 0.0
    %1248 = vmatmul.mubr.f32.gmra.mrb[0].mxu0 %v1120
    %v1249 = vpop.f32.mrb[0].mxu0
    %v1250 = vadd.f32 0.0, %v1249
    %v1251 = vpop.f32.mrb[0].mxu0
    %1252 = vmatprep.mubr.f32.mxu0 0.0
    %1253 = vmatmul.mubr.f32.gmra.mrb[0].mxu0 %v1123
    %v1254 = vpop.f32.mrb[0].mxu0
    %v1255 = vadd.f32 0.0, %v1254
    %v1256 = vpop.f32.mrb[0].mxu0
    %1257 = vmatprep.mubr.f32.mxu0 0.0
    %1258 = vmatmul.mubr.f32.gmra.mrb[0].mxu0 %v1126
    %v1259 = vpop.f32.mrb[0].mxu0
    %v1260 = vadd.f32 0.0, %v1259
    %v1261 = vpop.f32.mrb[0].mxu0
    %1262 = vmatprep.mubr.f32.mxu0 0.0
    %1263 = vmatmul.mubr.f32.gmra.mrb[0].mxu0 %v1129
    %v1264 = vpop.f32.mrb[0].mxu0
    %v1265 = vadd.f32 0.0, %v1264
    %v1266 = vpop.f32.mrb[0].mxu0
    %1267 = vmatprep.mubr.f32.mxu0 0.0
    %1268 = vmatmul.mubr.f32.gmra.mrb[0].mxu0 %v1132
    %v1269 = vpop.f32.mrb[0].mxu0
    %v1270 = vadd.f32 0.0, %v1269
    %v1271 = vpop.f32.mrb[0].mxu0
    %1272 = vmatprep.mubr.f32.mxu0 0.0
    %1273 = vmatmul.mubr.f32.gmra.mrb[0].mxu0 %v1135
    %v1274 = vpop.f32.mrb[0].mxu0
    %v1275 = vadd.f32 0.0, %v1274
    %v1276 = vpop.f32.mrb[0].mxu0
    %1277 = vmatprep.mubr.f32.mxu0 0.0
    %1278 = vmatmul.mubr.f32.gmra.mrb[0].mxu0 %v1138
    %v1279 = vpop.f32.mrb[0].mxu0
    %v1280 = vadd.f32 0.0, %v1279
    %v1281 = vpop.f32.mrb[0].mxu0
    %1282 = vmatprep.mubr.f32.mxu0 0.0
    %1283 = vmatmul.mubr.f32.gmra.mrb[0].mxu0 %v1141
    %v1284 = vpop.f32.mrb[0].mxu0
    %v1285 = vadd.f32 0.0, %v1284
    %v1286 = vpop.f32.mrb[0].mxu0
    %1287 = vdwg.mxu0
    %v1289 = vsel %vm1094, %v854, 0
    %v1292 = vsel %vm1094, %v859, 0
    %v1295 = vsel %vm1094, %v864, 0
    %v1298 = vsel %vm1094, %v869, 0
    %v1301 = vsel %vm1094, %v874, 0
    %v1304 = vsel %vm1094, %v879, 0
    %v1307 = vsel %vm1094, %v884, 0
    %v1310 = vsel %vm1094, %v889, 0
    %v1313 = vsel %vm1094, %v894, 0
    %v1316 = vsel %vm1094, %v899, 0
    %v1319 = vsel %vm1094, %v904, 0
    %v1322 = vsel %vm1094, %v909, 0
    %v1325 = vsel %vm1094, %v914, 0
    %v1328 = vsel %vm1094, %v919, 0
    %v1331 = vsel %vm1094, %v924, 0
    %v1334 = vsel %vm1094, %v929, 0
    %1336 = vmatprep.subr.mxu0 0.0
    %1337 = vmatpush1.msra.mxu0 %v1077
    %1338 = vmatprep.subr.mxu0 0.0
    %1339 = vmatpush1.msra.mxu0 %v1078
    %1340 = vmatprep.subr.mxu0 0.0
    %1341 = vmatpush1.msra.mxu0 %v1079
    %1342 = vmatprep.subr.mxu0 0.0
    %1343 = vmatpush1.msra.mxu0 %v1080
    %1344 = vmatprep.subr.mxu0 0.0
    %1345 = vmatpush1.msra.mxu0 %v1081
    %1346 = vmatprep.subr.mxu0 0.0
    %1347 = vmatpush1.msra.mxu0 %v1082
    %1348 = vmatprep.subr.mxu0 0.0
    %1349 = vmatpush1.msra.mxu0 %v1083
    %1350 = vmatprep.subr.mxu0 0.0
    %1351 = vmatpush1.msra.mxu0 %v1084
    %1352 = vmatprep.subr.mxu0 0.0
    %1353 = vmatpush1.msra.mxu0 0.0
    %1354 = vmatprep.subr.mxu0 0.0
    %1355 = vmatpush1.msra.mxu0 0.0
    %1356 = vmatprep.subr.mxu0 0.0
    %1357 = vmatpush1.msra.mxu0 0.0
    %1358 = vmatprep.subr.mxu0 0.0
    %1359 = vmatpush1.msra.mxu0 0.0
    %1360 = vmatprep.subr.mxu0 0.0
    %1361 = vmatpush1.msra.mxu0 0.0
    %1362 = vmatprep.subr.mxu0 0.0
    %1363 = vmatpush1.msra.mxu0 0.0
    %1364 = vmatprep.subr.mxu0 0.0
    %1365 = vmatpush1.msra.mxu0 0.0
    %1366 = vmatprep.subr.mxu0 0.0
    %1367 = vmatpush1.msra.mxu0 0.0
    %1368 = vmatprep.subr.mxu0 0.0
    %1369 = vmatpush1.msra.mxu0 0.0
    %1370 = vmatprep.subr.mxu0 0.0
    %1371 = vmatpush1.msra.mxu0 0.0
    %1372 = vmatprep.subr.mxu0 0.0
    %1373 = vmatpush1.msra.mxu0 0.0
    %1374 = vmatprep.subr.mxu0 0.0
    %1375 = vmatpush1.msra.mxu0 0.0
    %1376 = vmatprep.subr.mxu0 0.0
    %1377 = vmatpush1.msra.mxu0 0.0
    %1378 = vmatprep.subr.mxu0 0.0
    %1379 = vmatpush1.msra.mxu0 0.0
    %1380 = vmatprep.subr.mxu0 0.0
    %1381 = vmatpush1.msra.mxu0 0.0
    %1382 = vmatprep.subr.mxu0 0.0
    %1383 = vmatpush1.msra.mxu0 0.0
    %1384 = vmatprep.subr.mxu0 0.0
    %1385 = vmatpush1.msra.mxu0 0.0
    %1386 = vmatprep.subr.mxu0 0.0
    %1387 = vmatpush1.msra.mxu0 0.0
    %1388 = vmatprep.subr.mxu0 0.0
    %1389 = vmatpush1.msra.mxu0 0.0
    %1390 = vmatprep.subr.mxu0 0.0
    %1391 = vmatpush1.msra.mxu0 0.0
    %1392 = vmatprep.subr.mxu0 0.0
    %1393 = vmatpush1.msra.mxu0 0.0
    %1394 = vmatprep.subr.mxu0 0.0
    %1395 = vmatpush1.msra.mxu0 0.0
    %1396 = vmatprep.subr.mxu0 0.0
    %1397 = vmatpush1.msra.mxu0 0.0
    %1398 = vmatprep.subr.mxu0 0.0
    %1399 = vmatpush1.msra.mxu0 0.0
    %1400 = vmatprep.mubr.f32.mxu0 0.0
    %1401 = vmatmul.mubr.f32.gmra.mrb[0].mxu0 %v1289
    %v1402 = vpop.f32.mrb[0].mxu0
    %v1403 = vadd.f32 %v1210, %v1402
    %v1404 = vpop.f32.mrb[0].mxu0
    %1405 = vmatprep.mubr.f32.mxu0 0.0
    %1406 = vmatmul.mubr.f32.gmra.mrb[0].mxu0 %v1292
    %v1407 = vpop.f32.mrb[0].mxu0
    %v1408 = vadd.f32 %v1215, %v1407
    %v1409 = vpop.f32.mrb[0].mxu0
    %1410 = vmatprep.mubr.f32.mxu0 0.0
    %1411 = vmatmul.mubr.f32.gmra.mrb[0].mxu0 %v1295
    %v1412 = vpop.f32.mrb[0].mxu0
    %v1413 = vadd.f32 %v1220, %v1412
    %v1414 = vpop.f32.mrb[0].mxu0
    %1415 = vmatprep.mubr.f32.mxu0 0.0
    %1416 = vmatmul.mubr.f32.gmra.mrb[0].mxu0 %v1298
    %v1417 = vpop.f32.mrb[0].mxu0
    %v1418 = vadd.f32 %v1225, %v1417
    %v1419 = vpop.f32.mrb[0].mxu0
    %1420 = vmatprep.mubr.f32.mxu0 0.0
    %1421 = vmatmul.mubr.f32.gmra.mrb[0].mxu0 %v1301
    %v1422 = vpop.f32.mrb[0].mxu0
    %v1423 = vadd.f32 %v1230, %v1422
    %v1424 = vpop.f32.mrb[0].mxu0
    %1425 = vmatprep.mubr.f32.mxu0 0.0
    %1426 = vmatmul.mubr.f32.gmra.mrb[0].mxu0 %v1304
    %v1427 = vpop.f32.mrb[0].mxu0
    %v1428 = vadd.f32 %v1235, %v1427
    %v1429 = vpop.f32.mrb[0].mxu0
    %1430 = vmatprep.mubr.f32.mxu0 0.0
    %1431 = vmatmul.mubr.f32.gmra.mrb[0].mxu0 %v1307
    %v1432 = vpop.f32.mrb[0].mxu0
    %v1433 = vadd.f32 %v1240, %v1432
    %v1434 = vpop.f32.mrb[0].mxu0
    %1435 = vmatprep.mubr.f32.mxu0 0.0
    %1436 = vmatmul.mubr.f32.gmra.mrb[0].mxu0 %v1310
    %v1437 = vpop.f32.mrb[0].mxu0
    %v1438 = vadd.f32 %v1245, %v1437
    %v1439 = vpop.f32.mrb[0].mxu0
    %1440 = vmatprep.mubr.f32.mxu0 0.0
    %1441 = vmatmul.mubr.f32.gmra.mrb[0].mxu0 %v1313
    %v1442 = vpop.f32.mrb[0].mxu0
    %v1443 = vadd.f32 %v1250, %v1442
    %v1444 = vpop.f32.mrb[0].mxu0
    %1445 = vmatprep.mubr.f32.mxu0 0.0
    %1446 = vmatmul.mubr.f32.gmra.mrb[0].mxu0 %v1316
    %v1447 = vpop.f32.mrb[0].mxu0
    %v1448 = vadd.f32 %v1255, %v1447
    %v1449 = vpop.f32.mrb[0].mxu0
    %1450 = vmatprep.mubr.f32.mxu0 0.0
    %1451 = vmatmul.mubr.f32.gmra.mrb[0].mxu0 %v1319
    %v1452 = vpop.f32.mrb[0].mxu0
    %v1453 = vadd.f32 %v1260, %v1452
    %v1454 = vpop.f32.mrb[0].mxu0
    %1455 = vmatprep.mubr.f32.mxu0 0.0
    %1456 = vmatmul.mubr.f32.gmra.mrb[0].mxu0 %v1322
    %v1457 = vpop.f32.mrb[0].mxu0
    %v1458 = vadd.f32 %v1265, %v1457
    %v1459 = vpop.f32.mrb[0].mxu0
    %1460 = vmatprep.mubr.f32.mxu0 0.0
    %1461 = vmatmul.mubr.f32.gmra.mrb[0].mxu0 %v1325
    %v1462 = vpop.f32.mrb[0].mxu0
    %v1463 = vadd.f32 %v1270, %v1462
    %v1464 = vpop.f32.mrb[0].mxu0
    %1465 = vmatprep.mubr.f32.mxu0 0.0
    %1466 = vmatmul.mubr.f32.gmra.mrb[0].mxu0 %v1328
    %v1467 = vpop.f32.mrb[0].mxu0
    %v1468 = vadd.f32 %v1275, %v1467
    %v1469 = vpop.f32.mrb[0].mxu0
    %1470 = vmatprep.mubr.f32.mxu0 0.0
    %1471 = vmatmul.mubr.f32.gmra.mrb[0].mxu0 %v1331
    %v1472 = vpop.f32.mrb[0].mxu0
    %v1473 = vadd.f32 %v1280, %v1472
    %v1474 = vpop.f32.mrb[0].mxu0
    %1475 = vmatprep.mubr.f32.mxu0 0.0
    %1476 = vmatmul.mubr.f32.gmra.mrb[0].mxu0 %v1334
    %v1477 = vpop.f32.mrb[0].mxu0
    %v1478 = vadd.f32 %v1285, %v1477
    %v1479 = vpop.f32.mrb[0].mxu0
    %1480 = vdwg.mxu0
    %s1481 = scalar_lea.vmem %s5, 128
    %v1482 = vld [vmem:[%s1481] sm:$0xff]
    %v1483 = vld [vmem:[%s1481 + $0x8] sm:$0xff]
    %v1484 = vld [vmem:[%s1481 + $0x10] sm:$0xff]
    %v1485 = vld [vmem:[%s1481 + $0x18] sm:$0xff]
    %v1486 = vld [vmem:[%s1481 + $0x20] sm:$0xff]
    %v1487 = vld [vmem:[%s1481 + $0x28] sm:$0xff]
    %v1488 = vld [vmem:[%s1481 + $0x30] sm:$0xff]
    %v1489 = vld [vmem:[%s1481 + $0x38] sm:$0xff]
    %v1491 = vsel %vm1094, %v999, 0
    %v1494 = vsel %vm1094, %v1004, 0
    %v1497 = vsel %vm1094, %v1009, 0
    %v1500 = vsel %vm1094, %v1014, 0
    %v1503 = vsel %vm1094, %v1019, 0
    %v1506 = vsel %vm1094, %v1024, 0
    %v1509 = vsel %vm1094, %v1029, 0
    %v1512 = vsel %vm1094, %v1034, 0
    %v1515 = vsel %vm1094, %v1039, 0
    %v1518 = vsel %vm1094, %v1044, 0
    %v1521 = vsel %vm1094, %v1049, 0
    %v1524 = vsel %vm1094, %v1054, 0
    %v1527 = vsel %vm1094, %v1059, 0
    %v1530 = vsel %vm1094, %v1064, 0
    %v1533 = vsel %vm1094, %v1069, 0
    %v1536 = vsel %vm1094, %v1074, 0
    %1538 = vmatprep.subr.mxu0 0.0
    %1539 = vmatpush1.msra.mxu0 %v1482
    %1540 = vmatprep.subr.mxu0 0.0
    %1541 = vmatpush1.msra.mxu0 %v1483
    %1542 = vmatprep.subr.mxu0 0.0
    %1543 = vmatpush1.msra.mxu0 %v1484
    %1544 = vmatprep.subr.mxu0 0.0
    %1545 = vmatpush1.msra.mxu0 %v1485
    %1546 = vmatprep.subr.mxu0 0.0
    %1547 = vmatpush1.msra.mxu0 %v1486
    %1548 = vmatprep.subr.mxu0 0.0
    %1549 = vmatpush1.msra.mxu0 %v1487
    %1550 = vmatprep.subr.mxu0 0.0
    %1551 = vmatpush1.msra.mxu0 %v1488
    %1552 = vmatprep.subr.mxu0 0.0
    %1553 = vmatpush1.msra.mxu0 %v1489
    %1554 = vmatprep.subr.mxu0 0.0
    %1555 = vmatpush1.msra.mxu0 0.0
    %1556 = vmatprep.subr.mxu0 0.0
    %1557 = vmatpush1.msra.mxu0 0.0
    %1558 = vmatprep.subr.mxu0 0.0
    %1559 = vmatpush1.msra.mxu0 0.0
    %1560 = vmatprep.subr.mxu0 0.0
    %1561 = vmatpush1.msra.mxu0 0.0
    %1562 = vmatprep.subr.mxu0 0.0
    %1563 = vmatpush1.msra.mxu0 0.0
    %1564 = vmatprep.subr.mxu0 0.0
    %1565 = vmatpush1.msra.mxu0 0.0
    %1566 = vmatprep.subr.mxu0 0.0
    %1567 = vmatpush1.msra.mxu0 0.0
    %1568 = vmatprep.subr.mxu0 0.0
    %1569 = vmatpush1.msra.mxu0 0.0
    %1570 = vmatprep.subr.mxu0 0.0
    %1571 = vmatpush1.msra.mxu0 0.0
    %1572 = vmatprep.subr.mxu0 0.0
    %1573 = vmatpush1.msra.mxu0 0.0
    %1574 = vmatprep.subr.mxu0 0.0
    %1575 = vmatpush1.msra.mxu0 0.0
    %1576 = vmatprep.subr.mxu0 0.0
    %1577 = vmatpush1.msra.mxu0 0.0
    %1578 = vmatprep.subr.mxu0 0.0
    %1579 = vmatpush1.msra.mxu0 0.0
    %1580 = vmatprep.subr.mxu0 0.0
    %1581 = vmatpush1.msra.mxu0 0.0
    %1582 = vmatprep.subr.mxu0 0.0
    %1583 = vmatpush1.msra.mxu0 0.0
    %1584 = vmatprep.subr.mxu0 0.0
    %1585 = vmatpush1.msra.mxu0 0.0
    %1586 = vmatprep.subr.mxu0 0.0
    %1587 = vmatpush1.msra.mxu0 0.0
    %1588 = vmatprep.subr.mxu0 0.0
    %1589 = vmatpush1.msra.mxu0 0.0
    %1590 = vmatprep.subr.mxu0 0.0
    %1591 = vmatpush1.msra.mxu0 0.0
    %1592 = vmatprep.subr.mxu0 0.0
    %1593 = vmatpush1.msra.mxu0 0.0
    %1594 = vmatprep.subr.mxu0 0.0
    %1595 = vmatpush1.msra.mxu0 0.0
    %1596 = vmatprep.subr.mxu0 0.0
    %1597 = vmatpush1.msra.mxu0 0.0
    %1598 = vmatprep.subr.mxu0 0.0
    %1599 = vmatpush1.msra.mxu0 0.0
    %1600 = vmatprep.subr.mxu0 0.0
    %1601 = vmatpush1.msra.mxu0 0.0
    %1602 = vmatprep.mubr.f32.mxu0 0.0
    %1603 = vmatmul.mubr.f32.gmra.mrb[0].mxu0 %v1491
    %v1604 = vpop.f32.mrb[0].mxu0
    %v1605 = vadd.f32 0.0, %v1604
    %v1606 = vpop.f32.mrb[0].mxu0
    %1607 = vmatprep.mubr.f32.mxu0 0.0
    %1608 = vmatmul.mubr.f32.gmra.mrb[0].mxu0 %v1494
    %v1609 = vpop.f32.mrb[0].mxu0
    %v1610 = vadd.f32 0.0, %v1609
    %v1611 = vpop.f32.mrb[0].mxu0
    %1612 = vmatprep.mubr.f32.mxu0 0.0
    %1613 = vmatmul.mubr.f32.gmra.mrb[0].mxu0 %v1497
    %v1614 = vpop.f32.mrb[0].mxu0
    %v1615 = vadd.f32 0.0, %v1614
    %v1616 = vpop.f32.mrb[0].mxu0
    %1617 = vmatprep.mubr.f32.mxu0 0.0
    %1618 = vmatmul.mubr.f32.gmra.mrb[0].mxu0 %v1500
    %v1619 = vpop.f32.mrb[0].mxu0
    %v1620 = vadd.f32 0.0, %v1619
    %v1621 = vpop.f32.mrb[0].mxu0
    %1622 = vmatprep.mubr.f32.mxu0 0.0
    %1623 = vmatmul.mubr.f32.gmra.mrb[0].mxu0 %v1503
    %v1624 = vpop.f32.mrb[0].mxu0
    %v1625 = vadd.f32 0.0, %v1624
    %v1626 = vpop.f32.mrb[0].mxu0
    %1627 = vmatprep.mubr.f32.mxu0 0.0
    %1628 = vmatmul.mubr.f32.gmra.mrb[0].mxu0 %v1506
    %v1629 = vpop.f32.mrb[0].mxu0
    %v1630 = vadd.f32 0.0, %v1629
    %v1631 = vpop.f32.mrb[0].mxu0
    %1632 = vmatprep.mubr.f32.mxu0 0.0
    %1633 = vmatmul.mubr.f32.gmra.mrb[0].mxu0 %v1509
    %v1634 = vpop.f32.mrb[0].mxu0
    %v1635 = vadd.f32 0.0, %v1634
    %v1636 = vpop.f32.mrb[0].mxu0
    %1637 = vmatprep.mubr.f32.mxu0 0.0
    %1638 = vmatmul.mubr.f32.gmra.mrb[0].mxu0 %v1512
    %v1639 = vpop.f32.mrb[0].mxu0
    %v1640 = vadd.f32 0.0, %v1639
    %v1641 = vpop.f32.mrb[0].mxu0
    %1642 = vmatprep.mubr.f32.mxu0 0.0
    %1643 = vmatmul.mubr.f32.gmra.mrb[0].mxu0 %v1515
    %v1644 = vpop.f32.mrb[0].mxu0
    %v1645 = vadd.f32 0.0, %v1644
    %v1646 = vpop.f32.mrb[0].mxu0
    %1647 = vmatprep.mubr.f32.mxu0 0.0
    %1648 = vmatmul.mubr.f32.gmra.mrb[0].mxu0 %v1518
    %v1649 = vpop.f32.mrb[0].mxu0
    %v1650 = vadd.f32 0.0, %v1649
    %v1651 = vpop.f32.mrb[0].mxu0
    %1652 = vmatprep.mubr.f32.mxu0 0.0
    %1653 = vmatmul.mubr.f32.gmra.mrb[0].mxu0 %v1521
    %v1654 = vpop.f32.mrb[0].mxu0
    %v1655 = vadd.f32 0.0, %v1654
    %v1656 = vpop.f32.mrb[0].mxu0
    %1657 = vmatprep.mubr.f32.mxu0 0.0
    %1658 = vmatmul.mubr.f32.gmra.mrb[0].mxu0 %v1524
    %v1659 = vpop.f32.mrb[0].mxu0
    %v1660 = vadd.f32 0.0, %v1659
    %v1661 = vpop.f32.mrb[0].mxu0
    %1662 = vmatprep.mubr.f32.mxu0 0.0
    %1663 = vmatmul.mubr.f32.gmra.mrb[0].mxu0 %v1527
    %v1664 = vpop.f32.mrb[0].mxu0
    %v1665 = vadd.f32 0.0, %v1664
    %v1666 = vpop.f32.mrb[0].mxu0
    %1667 = vmatprep.mubr.f32.mxu0 0.0
    %1668 = vmatmul.mubr.f32.gmra.mrb[0].mxu0 %v1530
    %v1669 = vpop.f32.mrb[0].mxu0
    %v1670 = vadd.f32 0.0, %v1669
    %v1671 = vpop.f32.mrb[0].mxu0
    %1672 = vmatprep.mubr.f32.mxu0 0.0
    %1673 = vmatmul.mubr.f32.gmra.mrb[0].mxu0 %v1533
    %v1674 = vpop.f32.mrb[0].mxu0
    %v1675 = vadd.f32 0.0, %v1674
    %v1676 = vpop.f32.mrb[0].mxu0
    %1677 = vmatprep.mubr.f32.mxu0 0.0
    %1678 = vmatmul.mubr.f32.gmra.mrb[0].mxu0 %v1536
    %v1679 = vpop.f32.mrb[0].mxu0
    %v1680 = vadd.f32 0.0, %v1679
    %v1681 = vpop.f32.mrb[0].mxu0
    %1682 = vdwg.mxu0
    %v1683 = vadd.f32 %v1403, %v1605
    %v1684 = vadd.f32 %v1408, %v1610
    %v1685 = vadd.f32 %v1413, %v1615
    %v1686 = vadd.f32 %v1418, %v1620
    %v1687 = vadd.f32 %v1423, %v1625
    %v1688 = vadd.f32 %v1428, %v1630
    %v1689 = vadd.f32 %v1433, %v1635
    %v1690 = vadd.f32 %v1438, %v1640
    %v1691 = vadd.f32 %v1443, %v1645
    %v1692 = vadd.f32 %v1448, %v1650
    %v1693 = vadd.f32 %v1453, %v1655
    %v1694 = vadd.f32 %v1458, %v1660
    %v1695 = vadd.f32 %v1463, %v1665
    %v1696 = vadd.f32 %v1468, %v1670
    %v1697 = vadd.f32 %v1473, %v1675
    %v1698 = vadd.f32 %v1478, %v1680
    %v1699 = vld [vmem:[%s6] sm:$0x1]
    %v1701 = vlaneseq
    %v1702 = vshrl.u32 %v1701, 7
    %v1703 = vsub.s32 0, %v1702
    %v1704 = vrot.slane %v1699, %v1703
    %v1706 = vadd.f32 %v1683, %v1704
    %v1707 = vadd.f32 %v1684, %v1704
    %v1708 = vadd.f32 %v1685, %v1704
    %v1709 = vadd.f32 %v1686, %v1704
    %v1710 = vadd.f32 %v1687, %v1704
    %v1711 = vadd.f32 %v1688, %v1704
    %v1712 = vadd.f32 %v1689, %v1704
    %v1713 = vadd.f32 %v1690, %v1704
    %v1714 = vadd.f32 %v1691, %v1704
    %v1715 = vadd.f32 %v1692, %v1704
    %v1716 = vadd.f32 %v1693, %v1704
    %v1717 = vadd.f32 %v1694, %v1704
    %v1718 = vadd.f32 %v1695, %v1704
    %v1719 = vadd.f32 %v1696, %v1704
    %v1720 = vadd.f32 %v1697, %v1704
    %v1721 = vadd.f32 %v1698, %v1704
    %v1722 = vmax.f32 %v1706, 0.0
    %v1723 = vmax.f32 %v1707, 0.0
    %v1724 = vmax.f32 %v1708, 0.0
    %v1725 = vmax.f32 %v1709, 0.0
    %v1726 = vmax.f32 %v1710, 0.0
    %v1727 = vmax.f32 %v1711, 0.0
    %v1728 = vmax.f32 %v1712, 0.0
    %v1729 = vmax.f32 %v1713, 0.0
    %v1730 = vmax.f32 %v1714, 0.0
    %v1731 = vmax.f32 %v1715, 0.0
    %v1732 = vmax.f32 %v1716, 0.0
    %v1733 = vmax.f32 %v1717, 0.0
    %v1734 = vmax.f32 %v1718, 0.0
    %v1735 = vmax.f32 %v1719, 0.0
    %v1736 = vmax.f32 %v1720, 0.0
    %v1737 = vmax.f32 %v1721, 0.0
    %v1738 = vld [vmem:[%s7] sm:$0xff]
    %v1739 = vld [vmem:[%s7 + $0x8] sm:$0xff]
    %v1740 = vld [vmem:[%s7 + $0x10] sm:$0xff]
    %v1741 = vld [vmem:[%s7 + $0x18] sm:$0xff]
    %v1742 = vld [vmem:[%s7 + $0x20] sm:$0xff]
    %v1743 = vld [vmem:[%s7 + $0x28] sm:$0xff]
    %v1744 = vld [vmem:[%s7 + $0x30] sm:$0xff]
    %v1745 = vld [vmem:[%s7 + $0x38] sm:$0xff]
    %v1746 = vld [vmem:[%s7 + $0x40] sm:$0xff]
    %v1747 = vld [vmem:[%s7 + $0x48] sm:$0xff]
    %v1748 = vld [vmem:[%s7 + $0x50] sm:$0xff]
    %v1749 = vld [vmem:[%s7 + $0x58] sm:$0xff]
    %v1750 = vld [vmem:[%s7 + $0x60] sm:$0xff]
    %v1751 = vld [vmem:[%s7 + $0x68] sm:$0xff]
    %v1752 = vld [vmem:[%s7 + $0x70] sm:$0xff]
    %v1753 = vld [vmem:[%s7 + $0x78] sm:$0xff]
    %v1754 = vld [vmem:[%s9] sm:$0xf]
    %v1756 = vlaneseq
    %v1757 = vshrl.u32 %v1756, 7
    %v1758 = vsub.s32 0, %v1757
    %v1759 = vrot.slane %v1754, %v1758
    %v1760 = vlaneseq
    %v1761 = vshrl.u32 %v1760, 7
    %v1762 = vsub.s32 1, %v1761
    %v1763 = vrot.slane %v1754, %v1762
    %v1764 = vlaneseq
    %v1765 = vshrl.u32 %v1764, 7
    %v1766 = vsub.s32 2, %v1765
    %v1767 = vrot.slane %v1754, %v1766
    %v1768 = vlaneseq
    %v1769 = vshrl.u32 %v1768, 7
    %v1770 = vsub.s32 3, %v1769
    %v1771 = vrot.slane %v1754, %v1770
    %vm1776 = vcmask 261120
    %v1778 = vsel %vm1776, %v1722, 0
    %v1781 = vsel %vm1776, %v1723, 0
    %v1784 = vsel %vm1776, %v1724, 0
    %v1787 = vsel %vm1776, %v1725, 0
    %v1790 = vsel %vm1776, %v1726, 0
    %v1793 = vsel %vm1776, %v1727, 0
    %v1796 = vsel %vm1776, %v1728, 0
    %v1799 = vsel %vm1776, %v1729, 0
    %v1802 = vsel %vm1776, %v1730, 0
    %v1805 = vsel %vm1776, %v1731, 0
    %v1808 = vsel %vm1776, %v1732, 0
    %v1811 = vsel %vm1776, %v1733, 0
    %v1814 = vsel %vm1776, %v1734, 0
    %v1817 = vsel %vm1776, %v1735, 0
    %v1820 = vsel %vm1776, %v1736, 0
    %v1823 = vsel %vm1776, %v1737, 0
    %1825 = vmatprep.subr.mxu0 %v1739
    %1826 = vmatpush1.msra.mxu0 %v1738
    %1827 = vmatprep.subr.mxu0 %v1743
    %1828 = vmatpush1.msra.mxu0 %v1742
    %1829 = vmatprep.subr.mxu0 %v1747
    %1830 = vmatpush1.msra.mxu0 %v1746
    %1831 = vmatprep.subr.mxu0 %v1751
    %1832 = vmatpush1.msra.mxu0 %v1750
    %1833 = vmatprep.subr.mxu0 0.0
    %1834 = vmatpush1.msra.mxu0 0.0
    %1835 = vmatprep.subr.mxu0 0.0
    %1836 = vmatpush1.msra.mxu0 0.0
    %1837 = vmatprep.subr.mxu0 0.0
    %1838 = vmatpush1.msra.mxu0 0.0
    %1839 = vmatprep.subr.mxu0 0.0
    %1840 = vmatpush1.msra.mxu0 0.0
    %1841 = vmatprep.subr.mxu0 0.0
    %1842 = vmatpush1.msra.mxu0 0.0
    %1843 = vmatprep.subr.mxu0 0.0
    %1844 = vmatpush1.msra.mxu0 0.0
    %1845 = vmatprep.subr.mxu0 0.0
    %1846 = vmatpush1.msra.mxu0 0.0
    %1847 = vmatprep.subr.mxu0 0.0
    %1848 = vmatpush1.msra.mxu0 0.0
    %1849 = vmatprep.subr.mxu0 0.0
    %1850 = vmatpush1.msra.mxu0 0.0
    %1851 = vmatprep.subr.mxu0 0.0
    %1852 = vmatpush1.msra.mxu0 0.0
    %1853 = vmatprep.subr.mxu0 0.0
    %1854 = vmatpush1.msra.mxu0 0.0
    %1855 = vmatprep.subr.mxu0 0.0
    %1856 = vmatpush1.msra.mxu0 0.0
    %1857 = vmatprep.subr.mxu0 0.0
    %1858 = vmatpush1.msra.mxu0 0.0
    %1859 = vmatprep.subr.mxu0 0.0
    %1860 = vmatpush1.msra.mxu0 0.0
    %1861 = vmatprep.subr.mxu0 0.0
    %1862 = vmatpush1.msra.mxu0 0.0
    %1863 = vmatprep.subr.mxu0 0.0
    %1864 = vmatpush1.msra.mxu0 0.0
    %1865 = vmatprep.subr.mxu0 0.0
    %1866 = vmatpush1.msra.mxu0 0.0
    %1867 = vmatprep.subr.mxu0 0.0
    %1868 = vmatpush1.msra.mxu0 0.0
    %1869 = vmatprep.subr.mxu0 0.0
    %1870 = vmatpush1.msra.mxu0 0.0
    %1871 = vmatprep.subr.mxu0 0.0
    %1872 = vmatpush1.msra.mxu0 0.0
    %1873 = vmatprep.subr.mxu0 0.0
    %1874 = vmatpush1.msra.mxu0 0.0
    %1875 = vmatprep.subr.mxu0 0.0
    %1876 = vmatpush1.msra.mxu0 0.0
    %1877 = vmatprep.subr.mxu0 0.0
    %1878 = vmatpush1.msra.mxu0 0.0
    %1879 = vmatprep.subr.mxu0 0.0
    %1880 = vmatpush1.msra.mxu0 0.0
    %1881 = vmatprep.subr.mxu0 0.0
    %1882 = vmatpush1.msra.mxu0 0.0
    %1883 = vmatprep.subr.mxu0 0.0
    %1884 = vmatpush1.msra.mxu0 0.0
    %1885 = vmatprep.subr.mxu0 0.0
    %1886 = vmatpush1.msra.mxu0 0.0
    %1887 = vmatprep.subr.mxu0 0.0
    %1888 = vmatpush1.msra.mxu0 0.0
    %1889 = vmatprep.mubr.f32.mxu0 0.0
    %1890 = vmatmul.mubr.f32.gmra.mrb[0].mxu0 %v1778
    %v1891 = vpop.f32.mrb[0].mxu0
    %v1892 = vadd.f32 %v1759, %v1891
    %v1893 = vpop.f32.mrb[0].mxu0
    %v1894 = vadd.f32 %v1763, %v1893
    %1895 = vmatprep.mubr.f32.mxu0 0.0
    %1896 = vmatmul.mubr.f32.gmra.mrb[0].mxu0 %v1781
    %v1897 = vpop.f32.mrb[0].mxu0
    %v1898 = vadd.f32 %v1759, %v1897
    %v1899 = vpop.f32.mrb[0].mxu0
    %v1900 = vadd.f32 %v1763, %v1899
    %1901 = vmatprep.mubr.f32.mxu0 0.0
    %1902 = vmatmul.mubr.f32.gmra.mrb[0].mxu0 %v1784
    %v1903 = vpop.f32.mrb[0].mxu0
    %v1904 = vadd.f32 %v1759, %v1903
    %v1905 = vpop.f32.mrb[0].mxu0
    %v1906 = vadd.f32 %v1763, %v1905
    %1907 = vmatprep.mubr.f32.mxu0 0.0
    %1908 = vmatmul.mubr.f32.gmra.mrb[0].mxu0 %v1787
    %v1909 = vpop.f32.mrb[0].mxu0
    %v1910 = vadd.f32 %v1759, %v1909
    %v1911 = vpop.f32.mrb[0].mxu0
    %v1912 = vadd.f32 %v1763, %v1911
    %1913 = vmatprep.mubr.f32.mxu0 0.0
    %1914 = vmatmul.mubr.f32.gmra.mrb[0].mxu0 %v1790
    %v1915 = vpop.f32.mrb[0].mxu0
    %v1916 = vadd.f32 %v1759, %v1915
    %v1917 = vpop.f32.mrb[0].mxu0
    %v1918 = vadd.f32 %v1763, %v1917
    %1919 = vmatprep.mubr.f32.mxu0 0.0
    %1920 = vmatmul.mubr.f32.gmra.mrb[0].mxu0 %v1793
    %v1921 = vpop.f32.mrb[0].mxu0
    %v1922 = vadd.f32 %v1759, %v1921
    %v1923 = vpop.f32.mrb[0].mxu0
    %v1924 = vadd.f32 %v1763, %v1923
    %1925 = vmatprep.mubr.f32.mxu0 0.0
    %1926 = vmatmul.mubr.f32.gmra.mrb[0].mxu0 %v1796
    %v1927 = vpop.f32.mrb[0].mxu0
    %v1928 = vadd.f32 %v1759, %v1927
    %v1929 = vpop.f32.mrb[0].mxu0
    %v1930 = vadd.f32 %v1763, %v1929
    %1931 = vmatprep.mubr.f32.mxu0 0.0
    %1932 = vmatmul.mubr.f32.gmra.mrb[0].mxu0 %v1799
    %v1933 = vpop.f32.mrb[0].mxu0
    %v1934 = vadd.f32 %v1759, %v1933
    %v1935 = vpop.f32.mrb[0].mxu0
    %v1936 = vadd.f32 %v1763, %v1935
    %1937 = vmatprep.mubr.f32.mxu0 0.0
    %1938 = vmatmul.mubr.f32.gmra.mrb[0].mxu0 %v1802
    %v1939 = vpop.f32.mrb[0].mxu0
    %v1940 = vadd.f32 %v1759, %v1939
    %v1941 = vpop.f32.mrb[0].mxu0
    %v1942 = vadd.f32 %v1763, %v1941
    %1943 = vmatprep.mubr.f32.mxu0 0.0
    %1944 = vmatmul.mubr.f32.gmra.mrb[0].mxu0 %v1805
    %v1945 = vpop.f32.mrb[0].mxu0
    %v1946 = vadd.f32 %v1759, %v1945
    %v1947 = vpop.f32.mrb[0].mxu0
    %v1948 = vadd.f32 %v1763, %v1947
    %1949 = vmatprep.mubr.f32.mxu0 0.0
    %1950 = vmatmul.mubr.f32.gmra.mrb[0].mxu0 %v1808
    %v1951 = vpop.f32.mrb[0].mxu0
    %v1952 = vadd.f32 %v1759, %v1951
    %v1953 = vpop.f32.mrb[0].mxu0
    %v1954 = vadd.f32 %v1763, %v1953
    %1955 = vmatprep.mubr.f32.mxu0 0.0
    %1956 = vmatmul.mubr.f32.gmra.mrb[0].mxu0 %v1811
    %v1957 = vpop.f32.mrb[0].mxu0
    %v1958 = vadd.f32 %v1759, %v1957
    %v1959 = vpop.f32.mrb[0].mxu0
    %v1960 = vadd.f32 %v1763, %v1959
    %1961 = vmatprep.mubr.f32.mxu0 0.0
    %1962 = vmatmul.mubr.f32.gmra.mrb[0].mxu0 %v1814
    %v1963 = vpop.f32.mrb[0].mxu0
    %v1964 = vadd.f32 %v1759, %v1963
    %v1965 = vpop.f32.mrb[0].mxu0
    %v1966 = vadd.f32 %v1763, %v1965
    %1967 = vmatprep.mubr.f32.mxu0 0.0
    %1968 = vmatmul.mubr.f32.gmra.mrb[0].mxu0 %v1817
    %v1969 = vpop.f32.mrb[0].mxu0
    %v1970 = vadd.f32 %v1759, %v1969
    %v1971 = vpop.f32.mrb[0].mxu0
    %v1972 = vadd.f32 %v1763, %v1971
    %1973 = vmatprep.mubr.f32.mxu0 0.0
    %1974 = vmatmul.mubr.f32.gmra.mrb[0].mxu0 %v1820
    %v1975 = vpop.f32.mrb[0].mxu0
    %v1976 = vadd.f32 %v1759, %v1975
    %v1977 = vpop.f32.mrb[0].mxu0
    %v1978 = vadd.f32 %v1763, %v1977
    %1979 = vmatprep.mubr.f32.mxu0 0.0
    %1980 = vmatmul.mubr.f32.gmra.mrb[0].mxu0 %v1823
    %v1981 = vpop.f32.mrb[0].mxu0
    %v1982 = vadd.f32 %v1759, %v1981
    %v1983 = vpop.f32.mrb[0].mxu0
    %v1984 = vadd.f32 %v1763, %v1983
    %1985 = vdwg.mxu0
    %1986 = vmatprep.subr.mxu0 %v1741
    %1987 = vmatpush1.msra.mxu0 %v1740
    %1988 = vmatprep.subr.mxu0 %v1745
    %1989 = vmatpush1.msra.mxu0 %v1744
    %1990 = vmatprep.subr.mxu0 %v1749
    %1991 = vmatpush1.msra.mxu0 %v1748
    %1992 = vmatprep.subr.mxu0 %v1753
    %1993 = vmatpush1.msra.mxu0 %v1752
    %1994 = vmatprep.subr.mxu0 0.0
    %1995 = vmatpush1.msra.mxu0 0.0
    %1996 = vmatprep.subr.mxu0 0.0
    %1997 = vmatpush1.msra.mxu0 0.0
    %1998 = vmatprep.subr.mxu0 0.0
    %1999 = vmatpush1.msra.mxu0 0.0
    %2000 = vmatprep.subr.mxu0 0.0
    %2001 = vmatpush1.msra.mxu0 0.0
    %2002 = vmatprep.subr.mxu0 0.0
    %2003 = vmatpush1.msra.mxu0 0.0
    %2004 = vmatprep.subr.mxu0 0.0
    %2005 = vmatpush1.msra.mxu0 0.0
    %2006 = vmatprep.subr.mxu0 0.0
    %2007 = vmatpush1.msra.mxu0 0.0
    %2008 = vmatprep.subr.mxu0 0.0
    %2009 = vmatpush1.msra.mxu0 0.0
    %2010 = vmatprep.subr.mxu0 0.0
    %2011 = vmatpush1.msra.mxu0 0.0
    %2012 = vmatprep.subr.mxu0 0.0
    %2013 = vmatpush1.msra.mxu0 0.0
    %2014 = vmatprep.subr.mxu0 0.0
    %2015 = vmatpush1.msra.mxu0 0.0
    %2016 = vmatprep.subr.mxu0 0.0
    %2017 = vmatpush1.msra.mxu0 0.0
    %2018 = vmatprep.subr.mxu0 0.0
    %2019 = vmatpush1.msra.mxu0 0.0
    %2020 = vmatprep.subr.mxu0 0.0
    %2021 = vmatpush1.msra.mxu0 0.0
    %2022 = vmatprep.subr.mxu0 0.0
    %2023 = vmatpush1.msra.mxu0 0.0
    %2024 = vmatprep.subr.mxu0 0.0
    %2025 = vmatpush1.msra.mxu0 0.0
    %2026 = vmatprep.subr.mxu0 0.0
    %2027 = vmatpush1.msra.mxu0 0.0
    %2028 = vmatprep.subr.mxu0 0.0
    %2029 = vmatpush1.msra.mxu0 0.0
    %2030 = vmatprep.subr.mxu0 0.0
    %2031 = vmatpush1.msra.mxu0 0.0
    %2032 = vmatprep.subr.mxu0 0.0
    %2033 = vmatpush1.msra.mxu0 0.0
    %2034 = vmatprep.subr.mxu0 0.0
    %2035 = vmatpush1.msra.mxu0 0.0
    %2036 = vmatprep.subr.mxu0 0.0
    %2037 = vmatpush1.msra.mxu0 0.0
    %2038 = vmatprep.subr.mxu0 0.0
    %2039 = vmatpush1.msra.mxu0 0.0
    %2040 = vmatprep.subr.mxu0 0.0
    %2041 = vmatpush1.msra.mxu0 0.0
    %2042 = vmatprep.subr.mxu0 0.0
    %2043 = vmatpush1.msra.mxu0 0.0
    %2044 = vmatprep.subr.mxu0 0.0
    %2045 = vmatpush1.msra.mxu0 0.0
    %2046 = vmatprep.subr.mxu0 0.0
    %2047 = vmatpush1.msra.mxu0 0.0
    %2048 = vmatprep.subr.mxu0 0.0
    %2049 = vmatpush1.msra.mxu0 0.0
    %2050 = vmatprep.mubr.f32.mxu0 0.0
    %2051 = vmatmul.mubr.f32.gmra.mrb[0].mxu0 %v1778
    %v2052 = vpop.f32.mrb[0].mxu0
    %v2053 = vadd.f32 %v1767, %v2052
    %v2054 = vpop.f32.mrb[0].mxu0
    %v2055 = vadd.f32 %v1771, %v2054
    %2056 = vmatprep.mubr.f32.mxu0 0.0
    %2057 = vmatmul.mubr.f32.gmra.mrb[0].mxu0 %v1781
    %v2058 = vpop.f32.mrb[0].mxu0
    %v2059 = vadd.f32 %v1767, %v2058
    %v2060 = vpop.f32.mrb[0].mxu0
    %v2061 = vadd.f32 %v1771, %v2060
    %2062 = vmatprep.mubr.f32.mxu0 0.0
    %2063 = vmatmul.mubr.f32.gmra.mrb[0].mxu0 %v1784
    %v2064 = vpop.f32.mrb[0].mxu0
    %v2065 = vadd.f32 %v1767, %v2064
    %v2066 = vpop.f32.mrb[0].mxu0
    %v2067 = vadd.f32 %v1771, %v2066
    %2068 = vmatprep.mubr.f32.mxu0 0.0
    %2069 = vmatmul.mubr.f32.gmra.mrb[0].mxu0 %v1787
    %v2070 = vpop.f32.mrb[0].mxu0
    %v2071 = vadd.f32 %v1767, %v2070
    %v2072 = vpop.f32.mrb[0].mxu0
    %v2073 = vadd.f32 %v1771, %v2072
    %2074 = vmatprep.mubr.f32.mxu0 0.0
    %2075 = vmatmul.mubr.f32.gmra.mrb[0].mxu0 %v1790
    %v2076 = vpop.f32.mrb[0].mxu0
    %v2077 = vadd.f32 %v1767, %v2076
    %v2078 = vpop.f32.mrb[0].mxu0
    %v2079 = vadd.f32 %v1771, %v2078
    %2080 = vmatprep.mubr.f32.mxu0 0.0
    %2081 = vmatmul.mubr.f32.gmra.mrb[0].mxu0 %v1793
    %v2082 = vpop.f32.mrb[0].mxu0
    %v2083 = vadd.f32 %v1767, %v2082
    %v2084 = vpop.f32.mrb[0].mxu0
    %v2085 = vadd.f32 %v1771, %v2084
    %2086 = vmatprep.mubr.f32.mxu0 0.0
    %2087 = vmatmul.mubr.f32.gmra.mrb[0].mxu0 %v1796
    %v2088 = vpop.f32.mrb[0].mxu0
    %v2089 = vadd.f32 %v1767, %v2088
    %v2090 = vpop.f32.mrb[0].mxu0
    %v2091 = vadd.f32 %v1771, %v2090
    %2092 = vmatprep.mubr.f32.mxu0 0.0
    %2093 = vmatmul.mubr.f32.gmra.mrb[0].mxu0 %v1799
    %v2094 = vpop.f32.mrb[0].mxu0
    %v2095 = vadd.f32 %v1767, %v2094
    %v2096 = vpop.f32.mrb[0].mxu0
    %v2097 = vadd.f32 %v1771, %v2096
    %2098 = vmatprep.mubr.f32.mxu0 0.0
    %2099 = vmatmul.mubr.f32.gmra.mrb[0].mxu0 %v1802
    %v2100 = vpop.f32.mrb[0].mxu0
    %v2101 = vadd.f32 %v1767, %v2100
    %v2102 = vpop.f32.mrb[0].mxu0
    %v2103 = vadd.f32 %v1771, %v2102
    %2104 = vmatprep.mubr.f32.mxu0 0.0
    %2105 = vmatmul.mubr.f32.gmra.mrb[0].mxu0 %v1805
    %v2106 = vpop.f32.mrb[0].mxu0
    %v2107 = vadd.f32 %v1767, %v2106
    %v2108 = vpop.f32.mrb[0].mxu0
    %v2109 = vadd.f32 %v1771, %v2108
    %2110 = vmatprep.mubr.f32.mxu0 0.0
    %2111 = vmatmul.mubr.f32.gmra.mrb[0].mxu0 %v1808
    %v2112 = vpop.f32.mrb[0].mxu0
    %v2113 = vadd.f32 %v1767, %v2112
    %v2114 = vpop.f32.mrb[0].mxu0
    %v2115 = vadd.f32 %v1771, %v2114
    %2116 = vmatprep.mubr.f32.mxu0 0.0
    %2117 = vmatmul.mubr.f32.gmra.mrb[0].mxu0 %v1811
    %v2118 = vpop.f32.mrb[0].mxu0
    %v2119 = vadd.f32 %v1767, %v2118
    %v2120 = vpop.f32.mrb[0].mxu0
    %v2121 = vadd.f32 %v1771, %v2120
    %2122 = vmatprep.mubr.f32.mxu0 0.0
    %2123 = vmatmul.mubr.f32.gmra.mrb[0].mxu0 %v1814
    %v2124 = vpop.f32.mrb[0].mxu0
    %v2125 = vadd.f32 %v1767, %v2124
    %v2126 = vpop.f32.mrb[0].mxu0
    %v2127 = vadd.f32 %v1771, %v2126
    %2128 = vmatprep.mubr.f32.mxu0 0.0
    %2129 = vmatmul.mubr.f32.gmra.mrb[0].mxu0 %v1817
    %v2130 = vpop.f32.mrb[0].mxu0
    %v2131 = vadd.f32 %v1767, %v2130
    %v2132 = vpop.f32.mrb[0].mxu0
    %v2133 = vadd.f32 %v1771, %v2132
    %2134 = vmatprep.mubr.f32.mxu0 0.0
    %2135 = vmatmul.mubr.f32.gmra.mrb[0].mxu0 %v1820
    %v2136 = vpop.f32.mrb[0].mxu0
    %v2137 = vadd.f32 %v1767, %v2136
    %v2138 = vpop.f32.mrb[0].mxu0
    %v2139 = vadd.f32 %v1771, %v2138
    %2140 = vmatprep.mubr.f32.mxu0 0.0
    %2141 = vmatmul.mubr.f32.gmra.mrb[0].mxu0 %v1823
    %v2142 = vpop.f32.mrb[0].mxu0
    %v2143 = vadd.f32 %v1767, %v2142
    %v2144 = vpop.f32.mrb[0].mxu0
    %v2145 = vadd.f32 %v1771, %v2144
    %2146 = vdwg.mxu0
    %v2147 = vld [vmem:[#allocation3] sm:$0xff]
    %v2148 = vld [vmem:[#allocation3 + $0x8] sm:$0xff]
    %v2149 = vld [vmem:[#allocation3 + $0x10] sm:$0xff]
    %v2150 = vld [vmem:[#allocation3 + $0x18] sm:$0xff]
    %v2151 = vld [vmem:[#allocation3 + $0x20] sm:$0xff]
    %v2152 = vld [vmem:[#allocation3 + $0x28] sm:$0xff]
    %v2153 = vld [vmem:[#allocation3 + $0x30] sm:$0xff]
    %v2154 = vld [vmem:[#allocation3 + $0x38] sm:$0xff]
    %v2155 = vld [vmem:[#allocation3 + $0x40] sm:$0xff]
    %v2156 = vld [vmem:[#allocation3 + $0x48] sm:$0xff]
    %v2157 = vld [vmem:[#allocation3 + $0x50] sm:$0xff]
    %v2158 = vld [vmem:[#allocation3 + $0x58] sm:$0xff]
    %v2159 = vld [vmem:[#allocation3 + $0x60] sm:$0xff]
    %v2160 = vld [vmem:[#allocation3 + $0x68] sm:$0xff]
    %v2161 = vld [vmem:[#allocation3 + $0x70] sm:$0xff]
    %v2162 = vld [vmem:[#allocation3 + $0x78] sm:$0xff]
    %v2163 = vld [vmem:[#allocation3 + $0x80] sm:$0xff]
    %v2164 = vld [vmem:[#allocation3 + $0x88] sm:$0xff]
    %v2165 = vld [vmem:[#allocation3 + $0x90] sm:$0xff]
    %v2166 = vld [vmem:[#allocation3 + $0x98] sm:$0xff]
    %v2167 = vld [vmem:[#allocation3 + $0xa0] sm:$0xff]
    %v2168 = vld [vmem:[#allocation3 + $0xa8] sm:$0xff]
    %v2169 = vld [vmem:[#allocation3 + $0xb0] sm:$0xff]
    %v2170 = vld [vmem:[#allocation3 + $0xb8] sm:$0xff]
    %v2171 = vld [vmem:[#allocation3 + $0xc0] sm:$0xff]
    %v2172 = vld [vmem:[#allocation3 + $0xc8] sm:$0xff]
    %v2173 = vld [vmem:[#allocation3 + $0xd0] sm:$0xff]
    %v2174 = vld [vmem:[#allocation3 + $0xd8] sm:$0xff]
    %v2175 = vld [vmem:[#allocation3 + $0xe0] sm:$0xff]
    %v2176 = vld [vmem:[#allocation3 + $0xe8] sm:$0xff]
    %v2177 = vld [vmem:[#allocation3 + $0xf0] sm:$0xff]
    %v2178 = vld [vmem:[#allocation3 + $0xf8] sm:$0xff]
    %v2179 = vld [vmem:[#allocation3 + $0x100] sm:$0xff]
    %v2180 = vld [vmem:[#allocation3 + $0x108] sm:$0xff]
    %v2181 = vld [vmem:[#allocation3 + $0x110] sm:$0xff]
    %v2182 = vld [vmem:[#allocation3 + $0x118] sm:$0xff]
    %v2183 = vld [vmem:[#allocation3 + $0x120] sm:$0xff]
    %v2184 = vld [vmem:[#allocation3 + $0x128] sm:$0xff]
    %v2185 = vld [vmem:[#allocation3 + $0x130] sm:$0xff]
    %v2186 = vld [vmem:[#allocation3 + $0x138] sm:$0xff]
    %v2187 = vld [vmem:[#allocation3 + $0x140] sm:$0xff]
    %v2188 = vld [vmem:[#allocation3 + $0x148] sm:$0xff]
    %v2189 = vld [vmem:[#allocation3 + $0x150] sm:$0xff]
    %v2190 = vld [vmem:[#allocation3 + $0x158] sm:$0xff]
    %v2191 = vld [vmem:[#allocation3 + $0x160] sm:$0xff]
    %v2192 = vld [vmem:[#allocation3 + $0x168] sm:$0xff]
    %v2193 = vld [vmem:[#allocation3 + $0x170] sm:$0xff]
    %v2194 = vld [vmem:[#allocation3 + $0x178] sm:$0xff]
    %v2195 = vld [vmem:[#allocation3 + $0x180] sm:$0xff]
    %v2196 = vld [vmem:[#allocation3 + $0x188] sm:$0xff]
    %v2197 = vld [vmem:[#allocation3 + $0x190] sm:$0xff]
    %v2198 = vld [vmem:[#allocation3 + $0x198] sm:$0xff]
    %v2199 = vld [vmem:[#allocation3 + $0x1a0] sm:$0xff]
    %v2200 = vld [vmem:[#allocation3 + $0x1a8] sm:$0xff]
    %v2201 = vld [vmem:[#allocation3 + $0x1b0] sm:$0xff]
    %v2202 = vld [vmem:[#allocation3 + $0x1b8] sm:$0xff]
    %v2203 = vld [vmem:[#allocation3 + $0x1c0] sm:$0xff]
    %v2204 = vld [vmem:[#allocation3 + $0x1c8] sm:$0xff]
    %v2205 = vld [vmem:[#allocation3 + $0x1d0] sm:$0xff]
    %v2206 = vld [vmem:[#allocation3 + $0x1d8] sm:$0xff]
    %v2207 = vld [vmem:[#allocation3 + $0x1e0] sm:$0xff]
    %v2208 = vld [vmem:[#allocation3 + $0x1e8] sm:$0xff]
    %v2209 = vld [vmem:[#allocation3 + $0x1f0] sm:$0xff]
    %v2210 = vld [vmem:[#allocation3 + $0x1f8] sm:$0xff]
    %2211 = vmatprep.subr.mxu0 %v2148
    %2212 = vmatpush1.msra.mxu0 %v2147
    %2213 = vmatprep.subr.mxu0 %v2152
    %2214 = vmatpush1.msra.mxu0 %v2151
    %2215 = vmatprep.subr.mxu0 %v2156
    %2216 = vmatpush1.msra.mxu0 %v2155
    %2217 = vmatprep.subr.mxu0 %v2160
    %2218 = vmatpush1.msra.mxu0 %v2159
    %2219 = vmatprep.subr.mxu0 %v2164
    %2220 = vmatpush1.msra.mxu0 %v2163
    %2221 = vmatprep.subr.mxu0 %v2168
    %2222 = vmatpush1.msra.mxu0 %v2167
    %2223 = vmatprep.subr.mxu0 %v2172
    %2224 = vmatpush1.msra.mxu0 %v2171
    %2225 = vmatprep.subr.mxu0 %v2176
    %2226 = vmatpush1.msra.mxu0 %v2175
    %2227 = vmatprep.subr.mxu0 %v2180
    %2228 = vmatpush1.msra.mxu0 %v2179
    %2229 = vmatprep.subr.mxu0 %v2184
    %2230 = vmatpush1.msra.mxu0 %v2183
    %2231 = vmatprep.subr.mxu0 %v2188
    %2232 = vmatpush1.msra.mxu0 %v2187
    %2233 = vmatprep.subr.mxu0 %v2192
    %2234 = vmatpush1.msra.mxu0 %v2191
    %2235 = vmatprep.subr.mxu0 %v2196
    %2236 = vmatpush1.msra.mxu0 %v2195
    %2237 = vmatprep.subr.mxu0 %v2200
    %2238 = vmatpush1.msra.mxu0 %v2199
    %2239 = vmatprep.subr.mxu0 %v2204
    %2240 = vmatpush1.msra.mxu0 %v2203
    %2241 = vmatprep.subr.mxu0 %v2208
    %2242 = vmatpush1.msra.mxu0 %v2207
    %2243 = vmatprep.subr.mxu0 0.0
    %2244 = vmatpush1.msra.mxu0 0.0
    %2245 = vmatprep.subr.mxu0 0.0
    %2246 = vmatpush1.msra.mxu0 0.0
    %2247 = vmatprep.subr.mxu0 0.0
    %2248 = vmatpush1.msra.mxu0 0.0
    %2249 = vmatprep.subr.mxu0 0.0
    %2250 = vmatpush1.msra.mxu0 0.0
    %2251 = vmatprep.subr.mxu0 0.0
    %2252 = vmatpush1.msra.mxu0 0.0
    %2253 = vmatprep.subr.mxu0 0.0
    %2254 = vmatpush1.msra.mxu0 0.0
    %2255 = vmatprep.subr.mxu0 0.0
    %2256 = vmatpush1.msra.mxu0 0.0
    %2257 = vmatprep.subr.mxu0 0.0
    %2258 = vmatpush1.msra.mxu0 0.0
    %2259 = vmatprep.subr.mxu0 0.0
    %2260 = vmatpush1.msra.mxu0 0.0
    %2261 = vmatprep.subr.mxu0 0.0
    %2262 = vmatpush1.msra.mxu0 0.0
    %2263 = vmatprep.subr.mxu0 0.0
    %2264 = vmatpush1.msra.mxu0 0.0
    %2265 = vmatprep.subr.mxu0 0.0
    %2266 = vmatpush1.msra.mxu0 0.0
    %2267 = vmatprep.subr.mxu0 0.0
    %2268 = vmatpush1.msra.mxu0 0.0
    %2269 = vmatprep.subr.mxu0 0.0
    %2270 = vmatpush1.msra.mxu0 0.0
    %2271 = vmatprep.subr.mxu0 0.0
    %2272 = vmatpush1.msra.mxu0 0.0
    %2273 = vmatprep.subr.mxu0 0.0
    %2274 = vmatpush1.msra.mxu0 0.0
    %2275 = vmatprep.mubr.f32.mxu0 0.0
    %2276 = vmatmul.mubr.f32.gmra.mrb[0].mxu0 0.0
    %v2277 = vpop.f32.mrb[0].mxu0
    %v2278 = vadd.f32 0.0, %v2277
    %v2279 = vpop.f32.mrb[0].mxu0
    %v2280 = vadd.f32 0.0, %v2279
    %2281 = vdwg.mxu0
    %2282 = vmatprep.subr.mxu0 %v2150
    %2283 = vmatpush1.msra.mxu0 %v2149
    %2284 = vmatprep.subr.mxu0 %v2154
    %2285 = vmatpush1.msra.mxu0 %v2153
    %2286 = vmatprep.subr.mxu0 %v2158
    %2287 = vmatpush1.msra.mxu0 %v2157
    %2288 = vmatprep.subr.mxu0 %v2162
    %2289 = vmatpush1.msra.mxu0 %v2161
    %2290 = vmatprep.subr.mxu0 %v2166
    %2291 = vmatpush1.msra.mxu0 %v2165
    %2292 = vmatprep.subr.mxu0 %v2170
    %2293 = vmatpush1.msra.mxu0 %v2169
    %2294 = vmatprep.subr.mxu0 %v2174
    %2295 = vmatpush1.msra.mxu0 %v2173
    %2296 = vmatprep.subr.mxu0 %v2178
    %2297 = vmatpush1.msra.mxu0 %v2177
    %2298 = vmatprep.subr.mxu0 %v2182
    %2299 = vmatpush1.msra.mxu0 %v2181
    %2300 = vmatprep.subr.mxu0 %v2186
    %2301 = vmatpush1.msra.mxu0 %v2185
    %2302 = vmatprep.subr.mxu0 %v2190
    %2303 = vmatpush1.msra.mxu0 %v2189
    %2304 = vmatprep.subr.mxu0 %v2194
    %2305 = vmatpush1.msra.mxu0 %v2193
    %2306 = vmatprep.subr.mxu0 %v2198
    %2307 = vmatpush1.msra.mxu0 %v2197
    %2308 = vmatprep.subr.mxu0 %v2202
    %2309 = vmatpush1.msra.mxu0 %v2201
    %2310 = vmatprep.subr.mxu0 %v2206
    %2311 = vmatpush1.msra.mxu0 %v2205
    %2312 = vmatprep.subr.mxu0 %v2210
    %2313 = vmatpush1.msra.mxu0 %v2209
    %2314 = vmatprep.subr.mxu0 0.0
    %2315 = vmatpush1.msra.mxu0 0.0
    %2316 = vmatprep.subr.mxu0 0.0
    %2317 = vmatpush1.msra.mxu0 0.0
    %2318 = vmatprep.subr.mxu0 0.0
    %2319 = vmatpush1.msra.mxu0 0.0
    %2320 = vmatprep.subr.mxu0 0.0
    %2321 = vmatpush1.msra.mxu0 0.0
    %2322 = vmatprep.subr.mxu0 0.0
    %2323 = vmatpush1.msra.mxu0 0.0
    %2324 = vmatprep.subr.mxu0 0.0
    %2325 = vmatpush1.msra.mxu0 0.0
    %2326 = vmatprep.subr.mxu0 0.0
    %2327 = vmatpush1.msra.mxu0 0.0
    %2328 = vmatprep.subr.mxu0 0.0
    %2329 = vmatpush1.msra.mxu0 0.0
    %2330 = vmatprep.subr.mxu0 0.0
    %2331 = vmatpush1.msra.mxu0 0.0
    %2332 = vmatprep.subr.mxu0 0.0
    %2333 = vmatpush1.msra.mxu0 0.0
    %2334 = vmatprep.subr.mxu0 0.0
    %2335 = vmatpush1.msra.mxu0 0.0
    %2336 = vmatprep.subr.mxu0 0.0
    %2337 = vmatpush1.msra.mxu0 0.0
    %2338 = vmatprep.subr.mxu0 0.0
    %2339 = vmatpush1.msra.mxu0 0.0
    %2340 = vmatprep.subr.mxu0 0.0
    %2341 = vmatpush1.msra.mxu0 0.0
    %2342 = vmatprep.subr.mxu0 0.0
    %2343 = vmatpush1.msra.mxu0 0.0
    %2344 = vmatprep.subr.mxu0 0.0
    %2345 = vmatpush1.msra.mxu0 0.0
    %2346 = vmatprep.mubr.f32.mxu0 0.0
    %2347 = vmatmul.mubr.f32.gmra.mrb[0].mxu0 0.0
    %v2348 = vpop.f32.mrb[0].mxu0
    %v2349 = vadd.f32 0.0, %v2348
    %v2350 = vpop.f32.mrb[0].mxu0
    %v2351 = vadd.f32 0.0, %v2350
    %2352 = vdwg.mxu0
    %v2353 = vadd.f32 %v1892, %v2278
    %v2354 = vadd.f32 %v1894, %v2280
    %v2355 = vadd.f32 %v2053, %v2349
    %v2356 = vadd.f32 %v2055, %v2351
    %v2357 = vxor.u32 %v2353, 2147483648
    %v2358 = vmul.f32 %v2357, 1.442695
    %v2359 = vpow.pop %v2358
    %v2360 = vadd.f32 %v2359, 1.0
    %v2361 = vrcp.pop %v2360
    %v2362 = vmul.f32 1.0, %v2361
    %v2363 = vxor.u32 %v2354, 2147483648
    %v2364 = vmul.f32 %v2363, 1.442695
    %v2365 = vpow.pop %v2364
    %v2366 = vadd.f32 %v2365, 1.0
    %v2367 = vrcp.pop %v2366
    %v2368 = vmul.f32 1.0, %v2367
    %v2369 = vtanh.pop %v2355
    %v2370 = vxor.u32 %v2356, 2147483648
    %v2371 = vmul.f32 %v2370, 1.442695
    %v2372 = vpow.pop %v2371
    %v2373 = vadd.f32 %v2372, 1.0
    %v2374 = vrcp.pop %v2373
    %v2375 = vmul.f32 1.0, %v2374
    %v2376 = vmul.f32 %v2368, 0.0
    %v2377 = vmul.f32 %v2362, %v2369
    %v2378 = vadd.f32 %v2376, %v2377
    %v2379 = vtanh.pop %v2378
    %v2380 = vmul.f32 %v2375, %v2379
    %2381 = vmatprep.subr.mxu0 %v2148
    %2382 = vmatpush1.msra.mxu0 %v2147
    %2383 = vmatprep.subr.mxu0 %v2152
    %2384 = vmatpush1.msra.mxu0 %v2151
    %2385 = vmatprep.subr.mxu0 %v2156
    %2386 = vmatpush1.msra.mxu0 %v2155
    %2387 = vmatprep.subr.mxu0 %v2160
    %2388 = vmatpush1.msra.mxu0 %v2159
    %2389 = vmatprep.subr.mxu0 %v2164
    %2390 = vmatpush1.msra.mxu0 %v2163
    %2391 = vmatprep.subr.mxu0 %v2168
    %2392 = vmatpush1.msra.mxu0 %v2167
    %2393 = vmatprep.subr.mxu0 %v2172
    %2394 = vmatpush1.msra.mxu0 %v2171
    %2395 = vmatprep.subr.mxu0 %v2176
    %2396 = vmatpush1.msra.mxu0 %v2175
    %2397 = vmatprep.subr.mxu0 %v2180
    %2398 = vmatpush1.msra.mxu0 %v2179
    %2399 = vmatprep.subr.mxu0 %v2184
    %2400 = vmatpush1.msra.mxu0 %v2183
    %2401 = vmatprep.subr.mxu0 %v2188
    %2402 = vmatpush1.msra.mxu0 %v2187
    %2403 = vmatprep.subr.mxu0 %v2192
    %2404 = vmatpush1.msra.mxu0 %v2191
    %2405 = vmatprep.subr.mxu0 %v2196
    %2406 = vmatpush1.msra.mxu0 %v2195
    %2407 = vmatprep.subr.mxu0 %v2200
    %2408 = vmatpush1.msra.mxu0 %v2199
    %2409 = vmatprep.subr.mxu0 %v2204
    %2410 = vmatpush1.msra.mxu0 %v2203
    %2411 = vmatprep.subr.mxu0 %v2208
    %2412 = vmatpush1.msra.mxu0 %v2207
    %2413 = vmatprep.subr.mxu0 0.0
    %2414 = vmatpush1.msra.mxu0 0.0
    %2415 = vmatprep.subr.mxu0 0.0
    %2416 = vmatpush1.msra.mxu0 0.0
    %2417 = vmatprep.subr.mxu0 0.0
    %2418 = vmatpush1.msra.mxu0 0.0
    %2419 = vmatprep.subr.mxu0 0.0
    %2420 = vmatpush1.msra.mxu0 0.0
    %2421 = vmatprep.subr.mxu0 0.0
    %2422 = vmatpush1.msra.mxu0 0.0
    %2423 = vmatprep.subr.mxu0 0.0
    %2424 = vmatpush1.msra.mxu0 0.0
    %2425 = vmatprep.subr.mxu0 0.0
    %2426 = vmatpush1.msra.mxu0 0.0
    %2427 = vmatprep.subr.mxu0 0.0
    %2428 = vmatpush1.msra.mxu0 0.0
    %2429 = vmatprep.subr.mxu0 0.0
    %2430 = vmatpush1.msra.mxu0 0.0
    %2431 = vmatprep.subr.mxu0 0.0
    %2432 = vmatpush1.msra.mxu0 0.0
    %2433 = vmatprep.subr.mxu0 0.0
    %2434 = vmatpush1.msra.mxu0 0.0
    %2435 = vmatprep.subr.mxu0 0.0
    %2436 = vmatpush1.msra.mxu0 0.0
    %2437 = vmatprep.subr.mxu0 0.0
    %2438 = vmatpush1.msra.mxu0 0.0
    %2439 = vmatprep.subr.mxu0 0.0
    %2440 = vmatpush1.msra.mxu0 0.0
    %2441 = vmatprep.subr.mxu0 0.0
    %2442 = vmatpush1.msra.mxu0 0.0
    %2443 = vmatprep.subr.mxu0 0.0
    %2444 = vmatpush1.msra.mxu0 0.0
    %2445 = vmatprep.mubr.f32.mxu0 0.0
    %2446 = vmatmul.mubr.f32.gmra.mrb[0].mxu0 %v2380
    %v2447 = vpop.f32.mrb[0].mxu0
    %v2448 = vadd.f32 0.0, %v2447
    %v2449 = vpop.f32.mrb[0].mxu0
    %v2450 = vadd.f32 0.0, %v2449
    %2451 = vdwg.mxu0
    %2452 = vmatprep.subr.mxu0 %v2150
    %2453 = vmatpush1.msra.mxu0 %v2149
    %2454 = vmatprep.subr.mxu0 %v2154
    %2455 = vmatpush1.msra.mxu0 %v2153
    %2456 = vmatprep.subr.mxu0 %v2158
    %2457 = vmatpush1.msra.mxu0 %v2157
    %2458 = vmatprep.subr.mxu0 %v2162
    %2459 = vmatpush1.msra.mxu0 %v2161
    %2460 = vmatprep.subr.mxu0 %v2166
    %2461 = vmatpush1.msra.mxu0 %v2165
    %2462 = vmatprep.subr.mxu0 %v2170
    %2463 = vmatpush1.msra.mxu0 %v2169
    %2464 = vmatprep.subr.mxu0 %v2174
    %2465 = vmatpush1.msra.mxu0 %v2173
    %2466 = vmatprep.subr.mxu0 %v2178
    %2467 = vmatpush1.msra.mxu0 %v2177
    %2468 = vmatprep.subr.mxu0 %v2182
    %2469 = vmatpush1.msra.mxu0 %v2181
    %2470 = vmatprep.subr.mxu0 %v2186
    %2471 = vmatpush1.msra.mxu0 %v2185
    %2472 = vmatprep.subr.mxu0 %v2190
    %2473 = vmatpush1.msra.mxu0 %v2189
    %2474 = vmatprep.subr.mxu0 %v2194
    %2475 = vmatpush1.msra.mxu0 %v2193
    %2476 = vmatprep.subr.mxu0 %v2198
    %2477 = vmatpush1.msra.mxu0 %v2197
    %2478 = vmatprep.subr.mxu0 %v2202
    %2479 = vmatpush1.msra.mxu0 %v2201
    %2480 = vmatprep.subr.mxu0 %v2206
    %2481 = vmatpush1.msra.mxu0 %v2205
    %2482 = vmatprep.subr.mxu0 %v2210
    %2483 = vmatpush1.msra.mxu0 %v2209
    %2484 = vmatprep.subr.mxu0 0.0
    %2485 = vmatpush1.msra.mxu0 0.0
    %2486 = vmatprep.subr.mxu0 0.0
    %2487 = vmatpush1.msra.mxu0 0.0
    %2488 = vmatprep.subr.mxu0 0.0
    %2489 = vmatpush1.msra.mxu0 0.0
    %2490 = vmatprep.subr.mxu0 0.0
    %2491 = vmatpush1.msra.mxu0 0.0
    %2492 = vmatprep.subr.mxu0 0.0
    %2493 = vmatpush1.msra.mxu0 0.0
    %2494 = vmatprep.subr.mxu0 0.0
    %2495 = vmatpush1.msra.mxu0 0.0
    %2496 = vmatprep.subr.mxu0 0.0
    %2497 = vmatpush1.msra.mxu0 0.0
    %2498 = vmatprep.subr.mxu0 0.0
    %2499 = vmatpush1.msra.mxu0 0.0
    %2500 = vmatprep.subr.mxu0 0.0
    %2501 = vmatpush1.msra.mxu0 0.0
    %2502 = vmatprep.subr.mxu0 0.0
    %2503 = vmatpush1.msra.mxu0 0.0
    %2504 = vmatprep.subr.mxu0 0.0
    %2505 = vmatpush1.msra.mxu0 0.0
    %2506 = vmatprep.subr.mxu0 0.0
    %2507 = vmatpush1.msra.mxu0 0.0
    %2508 = vmatprep.subr.mxu0 0.0
    %2509 = vmatpush1.msra.mxu0 0.0
    %2510 = vmatprep.subr.mxu0 0.0
    %2511 = vmatpush1.msra.mxu0 0.0
    %2512 = vmatprep.subr.mxu0 0.0
    %2513 = vmatpush1.msra.mxu0 0.0
    %2514 = vmatprep.subr.mxu0 0.0
    %2515 = vmatpush1.msra.mxu0 0.0
    %2516 = vmatprep.mubr.f32.mxu0 0.0
    %2517 = vmatmul.mubr.f32.gmra.mrb[0].mxu0 %v2380
    %v2518 = vpop.f32.mrb[0].mxu0
    %v2519 = vadd.f32 0.0, %v2518
    %v2520 = vpop.f32.mrb[0].mxu0
    %v2521 = vadd.f32 0.0, %v2520
    %2522 = vdwg.mxu0
    %v2523 = vadd.f32 %v1898, %v2448
    %v2524 = vadd.f32 %v1900, %v2450
    %v2525 = vadd.f32 %v2059, %v2519
    %v2526 = vadd.f32 %v2061, %v2521
    %v2527 = vxor.u32 %v2523, 2147483648
    %v2528 = vmul.f32 %v2527, 1.442695
    %v2529 = vpow.pop %v2528
    %v2530 = vadd.f32 %v2529, 1.0
    %v2531 = vrcp.pop %v2530
    %v2532 = vmul.f32 1.0, %v2531
    %v2533 = vxor.u32 %v2524, 2147483648
    %v2534 = vmul.f32 %v2533, 1.442695
    %v2535 = vpow.pop %v2534
    %v2536 = vadd.f32 %v2535, 1.0
    %v2537 = vrcp.pop %v2536
    %v2538 = vmul.f32 1.0, %v2537
    %v2539 = vtanh.pop %v2525
    %v2540 = vxor.u32 %v2526, 2147483648
    %v2541 = vmul.f32 %v2540, 1.442695
    %v2542 = vpow.pop %v2541
    %v2543 = vadd.f32 %v2542, 1.0
    %v2544 = vrcp.pop %v2543
    %v2545 = vmul.f32 1.0, %v2544
    %v2546 = vmul.f32 %v2538, %v2378
    %v2547 = vmul.f32 %v2532, %v2539
    %v2548 = vadd.f32 %v2546, %v2547
    %v2549 = vtanh.pop %v2548
    %v2550 = vmul.f32 %v2545, %v2549
    %2551 = vmatprep.subr.mxu0 %v2148
    %2552 = vmatpush1.msra.mxu0 %v2147
    %2553 = vmatprep.subr.mxu0 %v2152
    %2554 = vmatpush1.msra.mxu0 %v2151
    %2555 = vmatprep.subr.mxu0 %v2156
    %2556 = vmatpush1.msra.mxu0 %v2155
    %2557 = vmatprep.subr.mxu0 %v2160
    %2558 = vmatpush1.msra.mxu0 %v2159
    %2559 = vmatprep.subr.mxu0 %v2164
    %2560 = vmatpush1.msra.mxu0 %v2163
    %2561 = vmatprep.subr.mxu0 %v2168
    %2562 = vmatpush1.msra.mxu0 %v2167
    %2563 = vmatprep.subr.mxu0 %v2172
    %2564 = vmatpush1.msra.mxu0 %v2171
    %2565 = vmatprep.subr.mxu0 %v2176
    %2566 = vmatpush1.msra.mxu0 %v2175
    %2567 = vmatprep.subr.mxu0 %v2180
    %2568 = vmatpush1.msra.mxu0 %v2179
    %2569 = vmatprep.subr.mxu0 %v2184
    %2570 = vmatpush1.msra.mxu0 %v2183
    %2571 = vmatprep.subr.mxu0 %v2188
    %2572 = vmatpush1.msra.mxu0 %v2187
    %2573 = vmatprep.subr.mxu0 %v2192
    %2574 = vmatpush1.msra.mxu0 %v2191
    %2575 = vmatprep.subr.mxu0 %v2196
    %2576 = vmatpush1.msra.mxu0 %v2195
    %2577 = vmatprep.subr.mxu0 %v2200
    %2578 = vmatpush1.msra.mxu0 %v2199
    %2579 = vmatprep.subr.mxu0 %v2204
    %2580 = vmatpush1.msra.mxu0 %v2203
    %2581 = vmatprep.subr.mxu0 %v2208
    %2582 = vmatpush1.msra.mxu0 %v2207
    %2583 = vmatprep.subr.mxu0 0.0
    %2584 = vmatpush1.msra.mxu0 0.0
    %2585 = vmatprep.subr.mxu0 0.0
    %2586 = vmatpush1.msra.mxu0 0.0
    %2587 = vmatprep.subr.mxu0 0.0
    %2588 = vmatpush1.msra.mxu0 0.0
    %2589 = vmatprep.subr.mxu0 0.0
    %2590 = vmatpush1.msra.mxu0 0.0
    %2591 = vmatprep.subr.mxu0 0.0
    %2592 = vmatpush1.msra.mxu0 0.0
    %2593 = vmatprep.subr.mxu0 0.0
    %2594 = vmatpush1.msra.mxu0 0.0
    %2595 = vmatprep.subr.mxu0 0.0
    %2596 = vmatpush1.msra.mxu0 0.0
    %2597 = vmatprep.subr.mxu0 0.0
    %2598 = vmatpush1.msra.mxu0 0.0
    %2599 = vmatprep.subr.mxu0 0.0
    %2600 = vmatpush1.msra.mxu0 0.0
    %2601 = vmatprep.subr.mxu0 0.0
    %2602 = vmatpush1.msra.mxu0 0.0
    %2603 = vmatprep.subr.mxu0 0.0
    %2604 = vmatpush1.msra.mxu0 0.0
    %2605 = vmatprep.subr.mxu0 0.0
    %2606 = vmatpush1.msra.mxu0 0.0
    %2607 = vmatprep.subr.mxu0 0.0
    %2608 = vmatpush1.msra.mxu0 0.0
    %2609 = vmatprep.subr.mxu0 0.0
    %2610 = vmatpush1.msra.mxu0 0.0
    %2611 = vmatprep.subr.mxu0 0.0
    %2612 = vmatpush1.msra.mxu0 0.0
    %2613 = vmatprep.subr.mxu0 0.0
    %2614 = vmatpush1.msra.mxu0 0.0
    %2615 = vmatprep.mubr.f32.mxu0 0.0
    %2616 = vmatmul.mubr.f32.gmra.mrb[0].mxu0 %v2550
    %v2617 = vpop.f32.mrb[0].mxu0
    %v2618 = vadd.f32 0.0, %v2617
    %v2619 = vpop.f32.mrb[0].mxu0
    %v2620 = vadd.f32 0.0, %v2619
    %2621 = vdwg.mxu0
    %2622 = vmatprep.subr.mxu0 %v2150
    %2623 = vmatpush1.msra.mxu0 %v2149
    %2624 = vmatprep.subr.mxu0 %v2154
    %2625 = vmatpush1.msra.mxu0 %v2153
    %2626 = vmatprep.subr.mxu0 %v2158
    %2627 = vmatpush1.msra.mxu0 %v2157
    %2628 = vmatprep.subr.mxu0 %v2162
    %2629 = vmatpush1.msra.mxu0 %v2161
    %2630 = vmatprep.subr.mxu0 %v2166
    %2631 = vmatpush1.msra.mxu0 %v2165
    %2632 = vmatprep.subr.mxu0 %v2170
    %2633 = vmatpush1.msra.mxu0 %v2169
    %2634 = vmatprep.subr.mxu0 %v2174
    %2635 = vmatpush1.msra.mxu0 %v2173
    %2636 = vmatprep.subr.mxu0 %v2178
    %2637 = vmatpush1.msra.mxu0 %v2177
    %2638 = vmatprep.subr.mxu0 %v2182
    %2639 = vmatpush1.msra.mxu0 %v2181
    %2640 = vmatprep.subr.mxu0 %v2186
    %2641 = vmatpush1.msra.mxu0 %v2185
    %2642 = vmatprep.subr.mxu0 %v2190
    %2643 = vmatpush1.msra.mxu0 %v2189
    %2644 = vmatprep.subr.mxu0 %v2194
    %2645 = vmatpush1.msra.mxu0 %v2193
    %2646 = vmatprep.subr.mxu0 %v2198
    %2647 = vmatpush1.msra.mxu0 %v2197
    %2648 = vmatprep.subr.mxu0 %v2202
    %2649 = vmatpush1.msra.mxu0 %v2201
    %2650 = vmatprep.subr.mxu0 %v2206
    %2651 = vmatpush1.msra.mxu0 %v2205
    %2652 = vmatprep.subr.mxu0 %v2210
    %2653 = vmatpush1.msra.mxu0 %v2209
    %2654 = vmatprep.subr.mxu0 0.0
    %2655 = vmatpush1.msra.mxu0 0.0
    %2656 = vmatprep.subr.mxu0 0.0
    %2657 = vmatpush1.msra.mxu0 0.0
    %2658 = vmatprep.subr.mxu0 0.0
    %2659 = vmatpush1.msra.mxu0 0.0
    %2660 = vmatprep.subr.mxu0 0.0
    %2661 = vmatpush1.msra.mxu0 0.0
    %2662 = vmatprep.subr.mxu0 0.0
    %2663 = vmatpush1.msra.mxu0 0.0
    %2664 = vmatprep.subr.mxu0 0.0
    %2665 = vmatpush1.msra.mxu0 0.0
    %2666 = vmatprep.subr.mxu0 0.0
    %2667 = vmatpush1.msra.mxu0 0.0
    %2668 = vmatprep.subr.mxu0 0.0
    %2669 = vmatpush1.msra.mxu0 0.0
    %2670 = vmatprep.subr.mxu0 0.0
    %2671 = vmatpush1.msra.mxu0 0.0
    %2672 = vmatprep.subr.mxu0 0.0
    %2673 = vmatpush1.msra.mxu0 0.0
    %2674 = vmatprep.subr.mxu0 0.0
    %2675 = vmatpush1.msra.mxu0 0.0
    %2676 = vmatprep.subr.mxu0 0.0
    %2677 = vmatpush1.msra.mxu0 0.0
    %2678 = vmatprep.subr.mxu0 0.0
    %2679 = vmatpush1.msra.mxu0 0.0
    %2680 = vmatprep.subr.mxu0 0.0
    %2681 = vmatpush1.msra.mxu0 0.0
    %2682 = vmatprep.subr.mxu0 0.0
    %2683 = vmatpush1.msra.mxu0 0.0
    %2684 = vmatprep.subr.mxu0 0.0
    %2685 = vmatpush1.msra.mxu0 0.0
    %2686 = vmatprep.mubr.f32.mxu0 0.0
    %2687 = vmatmul.mubr.f32.gmra.mrb[0].mxu0 %v2550
    %v2688 = vpop.f32.mrb[0].mxu0
    %v2689 = vadd.f32 0.0, %v2688
    %v2690 = vpop.f32.mrb[0].mxu0
    %v2691 = vadd.f32 0.0, %v2690
    %2692 = vdwg.mxu0
    %v2693 = vadd.f32 %v1904, %v2618
    %v2694 = vadd.f32 %v1906, %v2620
    %v2695 = vadd.f32 %v2065, %v2689
    %v2696 = vadd.f32 %v2067, %v2691
    %v2697 = vxor.u32 %v2693, 2147483648
    %v2698 = vmul.f32 %v2697, 1.442695
    %v2699 = vpow.pop %v2698
    %v2700 = vadd.f32 %v2699, 1.0
    %v2701 = vrcp.pop %v2700
    %v2702 = vmul.f32 1.0, %v2701
    %v2703 = vxor.u32 %v2694, 2147483648
    %v2704 = vmul.f32 %v2703, 1.442695
    %v2705 = vpow.pop %v2704
    %v2706 = vadd.f32 %v2705, 1.0
    %v2707 = vrcp.pop %v2706
    %v2708 = vmul.f32 1.0, %v2707
    %v2709 = vtanh.pop %v2695
    %v2710 = vxor.u32 %v2696, 2147483648
    %v2711 = vmul.f32 %v2710, 1.442695
    %v2712 = vpow.pop %v2711
    %v2713 = vadd.f32 %v2712, 1.0
    %v2714 = vrcp.pop %v2713
    %v2715 = vmul.f32 1.0, %v2714
    %v2716 = vmul.f32 %v2708, %v2548
    %v2717 = vmul.f32 %v2702, %v2709
    %v2718 = vadd.f32 %v2716, %v2717
    %v2719 = vtanh.pop %v2718
    %v2720 = vmul.f32 %v2715, %v2719
    %2721 = vmatprep.subr.mxu0 %v2148
    %2722 = vmatpush1.msra.mxu0 %v2147
    %2723 = vmatprep.subr.mxu0 %v2152
    %2724 = vmatpush1.msra.mxu0 %v2151
    %2725 = vmatprep.subr.mxu0 %v2156
    %2726 = vmatpush1.msra.mxu0 %v2155
    %2727 = vmatprep.subr.mxu0 %v2160
    %2728 = vmatpush1.msra.mxu0 %v2159
    %2729 = vmatprep.subr.mxu0 %v2164
    %2730 = vmatpush1.msra.mxu0 %v2163
    %2731 = vmatprep.subr.mxu0 %v2168
    %2732 = vmatpush1.msra.mxu0 %v2167
    %2733 = vmatprep.subr.mxu0 %v2172
    %2734 = vmatpush1.msra.mxu0 %v2171
    %2735 = vmatprep.subr.mxu0 %v2176
    %2736 = vmatpush1.msra.mxu0 %v2175
    %2737 = vmatprep.subr.mxu0 %v2180
    %2738 = vmatpush1.msra.mxu0 %v2179
    %2739 = vmatprep.subr.mxu0 %v2184
    %2740 = vmatpush1.msra.mxu0 %v2183
    %2741 = vmatprep.subr.mxu0 %v2188
    %2742 = vmatpush1.msra.mxu0 %v2187
    %2743 = vmatprep.subr.mxu0 %v2192
    %2744 = vmatpush1.msra.mxu0 %v2191
    %2745 = vmatprep.subr.mxu0 %v2196
    %2746 = vmatpush1.msra.mxu0 %v2195
    %2747 = vmatprep.subr.mxu0 %v2200
    %2748 = vmatpush1.msra.mxu0 %v2199
    %2749 = vmatprep.subr.mxu0 %v2204
    %2750 = vmatpush1.msra.mxu0 %v2203
    %2751 = vmatprep.subr.mxu0 %v2208
    %2752 = vmatpush1.msra.mxu0 %v2207
    %2753 = vmatprep.subr.mxu0 0.0
    %2754 = vmatpush1.msra.mxu0 0.0
    %2755 = vmatprep.subr.mxu0 0.0
    %2756 = vmatpush1.msra.mxu0 0.0
    %2757 = vmatprep.subr.mxu0 0.0
    %2758 = vmatpush1.msra.mxu0 0.0
    %2759 = vmatprep.subr.mxu0 0.0
    %2760 = vmatpush1.msra.mxu0 0.0
    %2761 = vmatprep.subr.mxu0 0.0
    %2762 = vmatpush1.msra.mxu0 0.0
    %2763 = vmatprep.subr.mxu0 0.0
    %2764 = vmatpush1.msra.mxu0 0.0
    %2765 = vmatprep.subr.mxu0 0.0
    %2766 = vmatpush1.msra.mxu0 0.0
    %2767 = vmatprep.subr.mxu0 0.0
    %2768 = vmatpush1.msra.mxu0 0.0
    %2769 = vmatprep.subr.mxu0 0.0
    %2770 = vmatpush1.msra.mxu0 0.0
    %2771 = vmatprep.subr.mxu0 0.0
    %2772 = vmatpush1.msra.mxu0 0.0
    %2773 = vmatprep.subr.mxu0 0.0
    %2774 = vmatpush1.msra.mxu0 0.0
    %2775 = vmatprep.subr.mxu0 0.0
    %2776 = vmatpush1.msra.mxu0 0.0
    %2777 = vmatprep.subr.mxu0 0.0
    %2778 = vmatpush1.msra.mxu0 0.0
    %2779 = vmatprep.subr.mxu0 0.0
    %2780 = vmatpush1.msra.mxu0 0.0
    %2781 = vmatprep.subr.mxu0 0.0
    %2782 = vmatpush1.msra.mxu0 0.0
    %2783 = vmatprep.subr.mxu0 0.0
    %2784 = vmatpush1.msra.mxu0 0.0
    %2785 = vmatprep.mubr.f32.mxu0 0.0
    %2786 = vmatmul.mubr.f32.gmra.mrb[0].mxu0 %v2720
    %v2787 = vpop.f32.mrb[0].mxu0
    %v2788 = vadd.f32 0.0, %v2787
    %v2789 = vpop.f32.mrb[0].mxu0
    %v2790 = vadd.f32 0.0, %v2789
    %2791 = vdwg.mxu0
    %2792 = vmatprep.subr.mxu0 %v2150
    %2793 = vmatpush1.msra.mxu0 %v2149
    %2794 = vmatprep.subr.mxu0 %v2154
    %2795 = vmatpush1.msra.mxu0 %v2153
    %2796 = vmatprep.subr.mxu0 %v2158
    %2797 = vmatpush1.msra.mxu0 %v2157
    %2798 = vmatprep.subr.mxu0 %v2162
    %2799 = vmatpush1.msra.mxu0 %v2161
    %2800 = vmatprep.subr.mxu0 %v2166
    %2801 = vmatpush1.msra.mxu0 %v2165
    %2802 = vmatprep.subr.mxu0 %v2170
    %2803 = vmatpush1.msra.mxu0 %v2169
    %2804 = vmatprep.subr.mxu0 %v2174
    %2805 = vmatpush1.msra.mxu0 %v2173
    %2806 = vmatprep.subr.mxu0 %v2178
    %2807 = vmatpush1.msra.mxu0 %v2177
    %2808 = vmatprep.subr.mxu0 %v2182
    %2809 = vmatpush1.msra.mxu0 %v2181
    %2810 = vmatprep.subr.mxu0 %v2186
    %2811 = vmatpush1.msra.mxu0 %v2185
    %2812 = vmatprep.subr.mxu0 %v2190
    %2813 = vmatpush1.msra.mxu0 %v2189
    %2814 = vmatprep.subr.mxu0 %v2194
    %2815 = vmatpush1.msra.mxu0 %v2193
    %2816 = vmatprep.subr.mxu0 %v2198
    %2817 = vmatpush1.msra.mxu0 %v2197
    %2818 = vmatprep.subr.mxu0 %v2202
    %2819 = vmatpush1.msra.mxu0 %v2201
    %2820 = vmatprep.subr.mxu0 %v2206
    %2821 = vmatpush1.msra.mxu0 %v2205
    %2822 = vmatprep.subr.mxu0 %v2210
    %2823 = vmatpush1.msra.mxu0 %v2209
    %2824 = vmatprep.subr.mxu0 0.0
    %2825 = vmatpush1.msra.mxu0 0.0
    %2826 = vmatprep.subr.mxu0 0.0
    %2827 = vmatpush1.msra.mxu0 0.0
    %2828 = vmatprep.subr.mxu0 0.0
    %2829 = vmatpush1.msra.mxu0 0.0
    %2830 = vmatprep.subr.mxu0 0.0
    %2831 = vmatpush1.msra.mxu0 0.0
    %2832 = vmatprep.subr.mxu0 0.0
    %2833 = vmatpush1.msra.mxu0 0.0
    %2834 = vmatprep.subr.mxu0 0.0
    %2835 = vmatpush1.msra.mxu0 0.0
    %2836 = vmatprep.subr.mxu0 0.0
    %2837 = vmatpush1.msra.mxu0 0.0
    %2838 = vmatprep.subr.mxu0 0.0
    %2839 = vmatpush1.msra.mxu0 0.0
    %2840 = vmatprep.subr.mxu0 0.0
    %2841 = vmatpush1.msra.mxu0 0.0
    %2842 = vmatprep.subr.mxu0 0.0
    %2843 = vmatpush1.msra.mxu0 0.0
    %2844 = vmatprep.subr.mxu0 0.0
    %2845 = vmatpush1.msra.mxu0 0.0
    %2846 = vmatprep.subr.mxu0 0.0
    %2847 = vmatpush1.msra.mxu0 0.0
    %2848 = vmatprep.subr.mxu0 0.0
    %2849 = vmatpush1.msra.mxu0 0.0
    %2850 = vmatprep.subr.mxu0 0.0
    %2851 = vmatpush1.msra.mxu0 0.0
    %2852 = vmatprep.subr.mxu0 0.0
    %2853 = vmatpush1.msra.mxu0 0.0
    %2854 = vmatprep.subr.mxu0 0.0
    %2855 = vmatpush1.msra.mxu0 0.0
    %2856 = vmatprep.mubr.f32.mxu0 0.0
    %2857 = vmatmul.mubr.f32.gmra.mrb[0].mxu0 %v2720
    %v2858 = vpop.f32.mrb[0].mxu0
    %v2859 = vadd.f32 0.0, %v2858
    %v2860 = vpop.f32.mrb[0].mxu0
    %v2861 = vadd.f32 0.0, %v2860
    %2862 = vdwg.mxu0
    %v2863 = vadd.f32 %v1910, %v2788
    %v2864 = vadd.f32 %v1912, %v2790
    %v2865 = vadd.f32 %v2071, %v2859
    %v2866 = vadd.f32 %v2073, %v2861
    %v2867 = vxor.u32 %v2863, 2147483648
    %v2868 = vmul.f32 %v2867, 1.442695
    %v2869 = vpow.pop %v2868
    %v2870 = vadd.f32 %v2869, 1.0
    %v2871 = vrcp.pop %v2870
    %v2872 = vmul.f32 1.0, %v2871
    %v2873 = vxor.u32 %v2864, 2147483648
    %v2874 = vmul.f32 %v2873, 1.442695
    %v2875 = vpow.pop %v2874
    %v2876 = vadd.f32 %v2875, 1.0
    %v2877 = vrcp.pop %v2876
    %v2878 = vmul.f32 1.0, %v2877
    %v2879 = vtanh.pop %v2865
    %v2880 = vxor.u32 %v2866, 2147483648
    %v2881 = vmul.f32 %v2880, 1.442695
    %v2882 = vpow.pop %v2881
    %v2883 = vadd.f32 %v2882, 1.0
    %v2884 = vrcp.pop %v2883
    %v2885 = vmul.f32 1.0, %v2884
    %v2886 = vmul.f32 %v2878, %v2718
    %v2887 = vmul.f32 %v2872, %v2879
    %v2888 = vadd.f32 %v2886, %v2887
    %v2889 = vtanh.pop %v2888
    %v2890 = vmul.f32 %v2885, %v2889
    %2891 = vmatprep.subr.mxu0 %v2148
    %2892 = vmatpush1.msra.mxu0 %v2147
    %2893 = vmatprep.subr.mxu0 %v2152
    %2894 = vmatpush1.msra.mxu0 %v2151
    %2895 = vmatprep.subr.mxu0 %v2156
    %2896 = vmatpush1.msra.mxu0 %v2155
    %2897 = vmatprep.subr.mxu0 %v2160
    %2898 = vmatpush1.msra.mxu0 %v2159
    %2899 = vmatprep.subr.mxu0 %v2164
    %2900 = vmatpush1.msra.mxu0 %v2163
    %2901 = vmatprep.subr.mxu0 %v2168
    %2902 = vmatpush1.msra.mxu0 %v2167
    %2903 = vmatprep.subr.mxu0 %v2172
    %2904 = vmatpush1.msra.mxu0 %v2171
    %2905 = vmatprep.subr.mxu0 %v2176
    %2906 = vmatpush1.msra.mxu0 %v2175
    %2907 = vmatprep.subr.mxu0 %v2180
    %2908 = vmatpush1.msra.mxu0 %v2179
    %2909 = vmatprep.subr.mxu0 %v2184
    %2910 = vmatpush1.msra.mxu0 %v2183
    %2911 = vmatprep.subr.mxu0 %v2188
    %2912 = vmatpush1.msra.mxu0 %v2187
    %2913 = vmatprep.subr.mxu0 %v2192
    %2914 = vmatpush1.msra.mxu0 %v2191
    %2915 = vmatprep.subr.mxu0 %v2196
    %2916 = vmatpush1.msra.mxu0 %v2195
    %2917 = vmatprep.subr.mxu0 %v2200
    %2918 = vmatpush1.msra.mxu0 %v2199
    %2919 = vmatprep.subr.mxu0 %v2204
    %2920 = vmatpush1.msra.mxu0 %v2203
    %2921 = vmatprep.subr.mxu0 %v2208
    %2922 = vmatpush1.msra.mxu0 %v2207
    %2923 = vmatprep.subr.mxu0 0.0
    %2924 = vmatpush1.msra.mxu0 0.0
    %2925 = vmatprep.subr.mxu0 0.0
    %2926 = vmatpush1.msra.mxu0 0.0
    %2927 = vmatprep.subr.mxu0 0.0
    %2928 = vmatpush1.msra.mxu0 0.0
    %2929 = vmatprep.subr.mxu0 0.0
    %2930 = vmatpush1.msra.mxu0 0.0
    %2931 = vmatprep.subr.mxu0 0.0
    %2932 = vmatpush1.msra.mxu0 0.0
    %2933 = vmatprep.subr.mxu0 0.0
    %2934 = vmatpush1.msra.mxu0 0.0
    %2935 = vmatprep.subr.mxu0 0.0
    %2936 = vmatpush1.msra.mxu0 0.0
    %2937 = vmatprep.subr.mxu0 0.0
    %2938 = vmatpush1.msra.mxu0 0.0
    %2939 = vmatprep.subr.mxu0 0.0
    %2940 = vmatpush1.msra.mxu0 0.0
    %2941 = vmatprep.subr.mxu0 0.0
    %2942 = vmatpush1.msra.mxu0 0.0
    %2943 = vmatprep.subr.mxu0 0.0
    %2944 = vmatpush1.msra.mxu0 0.0
    %2945 = vmatprep.subr.mxu0 0.0
    %2946 = vmatpush1.msra.mxu0 0.0
    %2947 = vmatprep.subr.mxu0 0.0
    %2948 = vmatpush1.msra.mxu0 0.0
    %2949 = vmatprep.subr.mxu0 0.0
    %2950 = vmatpush1.msra.mxu0 0.0
    %2951 = vmatprep.subr.mxu0 0.0
    %2952 = vmatpush1.msra.mxu0 0.0
    %2953 = vmatprep.subr.mxu0 0.0
    %2954 = vmatpush1.msra.mxu0 0.0
    %2955 = vmatprep.mubr.f32.mxu0 0.0
    %2956 = vmatmul.mubr.f32.gmra.mrb[0].mxu0 %v2890
    %v2957 = vpop.f32.mrb[0].mxu0
    %v2958 = vadd.f32 0.0, %v2957
    %v2959 = vpop.f32.mrb[0].mxu0
    %v2960 = vadd.f32 0.0, %v2959
    %2961 = vdwg.mxu0
    %2962 = vmatprep.subr.mxu0 %v2150
    %2963 = vmatpush1.msra.mxu0 %v2149
    %2964 = vmatprep.subr.mxu0 %v2154
    %2965 = vmatpush1.msra.mxu0 %v2153
    %2966 = vmatprep.subr.mxu0 %v2158
    %2967 = vmatpush1.msra.mxu0 %v2157
    %2968 = vmatprep.subr.mxu0 %v2162
    %2969 = vmatpush1.msra.mxu0 %v2161
    %2970 = vmatprep.subr.mxu0 %v2166
    %2971 = vmatpush1.msra.mxu0 %v2165
    %2972 = vmatprep.subr.mxu0 %v2170
    %2973 = vmatpush1.msra.mxu0 %v2169
    %2974 = vmatprep.subr.mxu0 %v2174
    %2975 = vmatpush1.msra.mxu0 %v2173
    %2976 = vmatprep.subr.mxu0 %v2178
    %2977 = vmatpush1.msra.mxu0 %v2177
    %2978 = vmatprep.subr.mxu0 %v2182
    %2979 = vmatpush1.msra.mxu0 %v2181
    %2980 = vmatprep.subr.mxu0 %v2186
    %2981 = vmatpush1.msra.mxu0 %v2185
    %2982 = vmatprep.subr.mxu0 %v2190
    %2983 = vmatpush1.msra.mxu0 %v2189
    %2984 = vmatprep.subr.mxu0 %v2194
    %2985 = vmatpush1.msra.mxu0 %v2193
    %2986 = vmatprep.subr.mxu0 %v2198
    %2987 = vmatpush1.msra.mxu0 %v2197
    %2988 = vmatprep.subr.mxu0 %v2202
    %2989 = vmatpush1.msra.mxu0 %v2201
    %2990 = vmatprep.subr.mxu0 %v2206
    %2991 = vmatpush1.msra.mxu0 %v2205
    %2992 = vmatprep.subr.mxu0 %v2210
    %2993 = vmatpush1.msra.mxu0 %v2209
    %2994 = vmatprep.subr.mxu0 0.0
    %2995 = vmatpush1.msra.mxu0 0.0
    %2996 = vmatprep.subr.mxu0 0.0
    %2997 = vmatpush1.msra.mxu0 0.0
    %2998 = vmatprep.subr.mxu0 0.0
    %2999 = vmatpush1.msra.mxu0 0.0
    %3000 = vmatprep.subr.mxu0 0.0
    %3001 = vmatpush1.msra.mxu0 0.0
    %3002 = vmatprep.subr.mxu0 0.0
    %3003 = vmatpush1.msra.mxu0 0.0
    %3004 = vmatprep.subr.mxu0 0.0
    %3005 = vmatpush1.msra.mxu0 0.0
    %3006 = vmatprep.subr.mxu0 0.0
    %3007 = vmatpush1.msra.mxu0 0.0
    %3008 = vmatprep.subr.mxu0 0.0
    %3009 = vmatpush1.msra.mxu0 0.0
    %3010 = vmatprep.subr.mxu0 0.0
    %3011 = vmatpush1.msra.mxu0 0.0
    %3012 = vmatprep.subr.mxu0 0.0
    %3013 = vmatpush1.msra.mxu0 0.0
    %3014 = vmatprep.subr.mxu0 0.0
    %3015 = vmatpush1.msra.mxu0 0.0
    %3016 = vmatprep.subr.mxu0 0.0
    %3017 = vmatpush1.msra.mxu0 0.0
    %3018 = vmatprep.subr.mxu0 0.0
    %3019 = vmatpush1.msra.mxu0 0.0
    %3020 = vmatprep.subr.mxu0 0.0
    %3021 = vmatpush1.msra.mxu0 0.0
    %3022 = vmatprep.subr.mxu0 0.0
    %3023 = vmatpush1.msra.mxu0 0.0
    %3024 = vmatprep.subr.mxu0 0.0
    %3025 = vmatpush1.msra.mxu0 0.0
    %3026 = vmatprep.mubr.f32.mxu0 0.0
    %3027 = vmatmul.mubr.f32.gmra.mrb[0].mxu0 %v2890
    %v3028 = vpop.f32.mrb[0].mxu0
    %v3029 = vadd.f32 0.0, %v3028
    %v3030 = vpop.f32.mrb[0].mxu0
    %v3031 = vadd.f32 0.0, %v3030
    %3032 = vdwg.mxu0
    %v3033 = vadd.f32 %v1916, %v2958
    %v3034 = vadd.f32 %v1918, %v2960
    %v3035 = vadd.f32 %v2077, %v3029
    %v3036 = vadd.f32 %v2079, %v3031
    %v3037 = vxor.u32 %v3033, 2147483648
    %v3038 = vmul.f32 %v3037, 1.442695
    %v3039 = vpow.pop %v3038
    %v3040 = vadd.f32 %v3039, 1.0
    %v3041 = vrcp.pop %v3040
    %v3042 = vmul.f32 1.0, %v3041
    %v3043 = vxor.u32 %v3034, 2147483648
    %v3044 = vmul.f32 %v3043, 1.442695
    %v3045 = vpow.pop %v3044
    %v3046 = vadd.f32 %v3045, 1.0
    %v3047 = vrcp.pop %v3046
    %v3048 = vmul.f32 1.0, %v3047
    %v3049 = vtanh.pop %v3035
    %v3050 = vxor.u32 %v3036, 2147483648
    %v3051 = vmul.f32 %v3050, 1.442695
    %v3052 = vpow.pop %v3051
    %v3053 = vadd.f32 %v3052, 1.0
    %v3054 = vrcp.pop %v3053
    %v3055 = vmul.f32 1.0, %v3054
    %v3056 = vmul.f32 %v3048, %v2888
    %v3057 = vmul.f32 %v3042, %v3049
    %v3058 = vadd.f32 %v3056, %v3057
    %v3059 = vtanh.pop %v3058
    %v3060 = vmul.f32 %v3055, %v3059
    %3061 = vmatprep.subr.mxu0 %v2148
    %3062 = vmatpush1.msra.mxu0 %v2147
    %3063 = vmatprep.subr.mxu0 %v2152
    %3064 = vmatpush1.msra.mxu0 %v2151
    %3065 = vmatprep.subr.mxu0 %v2156
    %3066 = vmatpush1.msra.mxu0 %v2155
    %3067 = vmatprep.subr.mxu0 %v2160
    %3068 = vmatpush1.msra.mxu0 %v2159
    %3069 = vmatprep.subr.mxu0 %v2164
    %3070 = vmatpush1.msra.mxu0 %v2163
    %3071 = vmatprep.subr.mxu0 %v2168
    %3072 = vmatpush1.msra.mxu0 %v2167
    %3073 = vmatprep.subr.mxu0 %v2172
    %3074 = vmatpush1.msra.mxu0 %v2171
    %3075 = vmatprep.subr.mxu0 %v2176
    %3076 = vmatpush1.msra.mxu0 %v2175
    %3077 = vmatprep.subr.mxu0 %v2180
    %3078 = vmatpush1.msra.mxu0 %v2179
    %3079 = vmatprep.subr.mxu0 %v2184
    %3080 = vmatpush1.msra.mxu0 %v2183
    %3081 = vmatprep.subr.mxu0 %v2188
    %3082 = vmatpush1.msra.mxu0 %v2187
    %3083 = vmatprep.subr.mxu0 %v2192
    %3084 = vmatpush1.msra.mxu0 %v2191
    %3085 = vmatprep.subr.mxu0 %v2196
    %3086 = vmatpush1.msra.mxu0 %v2195
    %3087 = vmatprep.subr.mxu0 %v2200
    %3088 = vmatpush1.msra.mxu0 %v2199
    %3089 = vmatprep.subr.mxu0 %v2204
    %3090 = vmatpush1.msra.mxu0 %v2203
    %3091 = vmatprep.subr.mxu0 %v2208
    %3092 = vmatpush1.msra.mxu0 %v2207
    %3093 = vmatprep.subr.mxu0 0.0
    %3094 = vmatpush1.msra.mxu0 0.0
    %3095 = vmatprep.subr.mxu0 0.0
    %3096 = vmatpush1.msra.mxu0 0.0
    %3097 = vmatprep.subr.mxu0 0.0
    %3098 = vmatpush1.msra.mxu0 0.0
    %3099 = vmatprep.subr.mxu0 0.0
    %3100 = vmatpush1.msra.mxu0 0.0
    %3101 = vmatprep.subr.mxu0 0.0
    %3102 = vmatpush1.msra.mxu0 0.0
    %3103 = vmatprep.subr.mxu0 0.0
    %3104 = vmatpush1.msra.mxu0 0.0
    %3105 = vmatprep.subr.mxu0 0.0
    %3106 = vmatpush1.msra.mxu0 0.0
    %3107 = vmatprep.subr.mxu0 0.0
    %3108 = vmatpush1.msra.mxu0 0.0
    %3109 = vmatprep.subr.mxu0 0.0
    %3110 = vmatpush1.msra.mxu0 0.0
    %3111 = vmatprep.subr.mxu0 0.0
    %3112 = vmatpush1.msra.mxu0 0.0
    %3113 = vmatprep.subr.mxu0 0.0
    %3114 = vmatpush1.msra.mxu0 0.0
    %3115 = vmatprep.subr.mxu0 0.0
    %3116 = vmatpush1.msra.mxu0 0.0
    %3117 = vmatprep.subr.mxu0 0.0
    %3118 = vmatpush1.msra.mxu0 0.0
    %3119 = vmatprep.subr.mxu0 0.0
    %3120 = vmatpush1.msra.mxu0 0.0
    %3121 = vmatprep.subr.mxu0 0.0
    %3122 = vmatpush1.msra.mxu0 0.0
    %3123 = vmatprep.subr.mxu0 0.0
    %3124 = vmatpush1.msra.mxu0 0.0
    %3125 = vmatprep.mubr.f32.mxu0 0.0
    %3126 = vmatmul.mubr.f32.gmra.mrb[0].mxu0 %v3060
    %v3127 = vpop.f32.mrb[0].mxu0
    %v3128 = vadd.f32 0.0, %v3127
    %v3129 = vpop.f32.mrb[0].mxu0
    %v3130 = vadd.f32 0.0, %v3129
    %3131 = vdwg.mxu0
    %3132 = vmatprep.subr.mxu0 %v2150
    %3133 = vmatpush1.msra.mxu0 %v2149
    %3134 = vmatprep.subr.mxu0 %v2154
    %3135 = vmatpush1.msra.mxu0 %v2153
    %3136 = vmatprep.subr.mxu0 %v2158
    %3137 = vmatpush1.msra.mxu0 %v2157
    %3138 = vmatprep.subr.mxu0 %v2162
    %3139 = vmatpush1.msra.mxu0 %v2161
    %3140 = vmatprep.subr.mxu0 %v2166
    %3141 = vmatpush1.msra.mxu0 %v2165
    %3142 = vmatprep.subr.mxu0 %v2170
    %3143 = vmatpush1.msra.mxu0 %v2169
    %3144 = vmatprep.subr.mxu0 %v2174
    %3145 = vmatpush1.msra.mxu0 %v2173
    %3146 = vmatprep.subr.mxu0 %v2178
    %3147 = vmatpush1.msra.mxu0 %v2177
    %3148 = vmatprep.subr.mxu0 %v2182
    %3149 = vmatpush1.msra.mxu0 %v2181
    %3150 = vmatprep.subr.mxu0 %v2186
    %3151 = vmatpush1.msra.mxu0 %v2185
    %3152 = vmatprep.subr.mxu0 %v2190
    %3153 = vmatpush1.msra.mxu0 %v2189
    %3154 = vmatprep.subr.mxu0 %v2194
    %3155 = vmatpush1.msra.mxu0 %v2193
    %3156 = vmatprep.subr.mxu0 %v2198
    %3157 = vmatpush1.msra.mxu0 %v2197
    %3158 = vmatprep.subr.mxu0 %v2202
    %3159 = vmatpush1.msra.mxu0 %v2201
    %3160 = vmatprep.subr.mxu0 %v2206
    %3161 = vmatpush1.msra.mxu0 %v2205
    %3162 = vmatprep.subr.mxu0 %v2210
    %3163 = vmatpush1.msra.mxu0 %v2209
    %3164 = vmatprep.subr.mxu0 0.0
    %3165 = vmatpush1.msra.mxu0 0.0
    %3166 = vmatprep.subr.mxu0 0.0
    %3167 = vmatpush1.msra.mxu0 0.0
    %3168 = vmatprep.subr.mxu0 0.0
    %3169 = vmatpush1.msra.mxu0 0.0
    %3170 = vmatprep.subr.mxu0 0.0
    %3171 = vmatpush1.msra.mxu0 0.0
    %3172 = vmatprep.subr.mxu0 0.0
    %3173 = vmatpush1.msra.mxu0 0.0
    %3174 = vmatprep.subr.mxu0 0.0
    %3175 = vmatpush1.msra.mxu0 0.0
    %3176 = vmatprep.subr.mxu0 0.0
    %3177 = vmatpush1.msra.mxu0 0.0
    %3178 = vmatprep.subr.mxu0 0.0
    %3179 = vmatpush1.msra.mxu0 0.0
    %3180 = vmatprep.subr.mxu0 0.0
    %3181 = vmatpush1.msra.mxu0 0.0
    %3182 = vmatprep.subr.mxu0 0.0
    %3183 = vmatpush1.msra.mxu0 0.0
    %3184 = vmatprep.subr.mxu0 0.0
    %3185 = vmatpush1.msra.mxu0 0.0
    %3186 = vmatprep.subr.mxu0 0.0
    %3187 = vmatpush1.msra.mxu0 0.0
    %3188 = vmatprep.subr.mxu0 0.0
    %3189 = vmatpush1.msra.mxu0 0.0
    %3190 = vmatprep.subr.mxu0 0.0
    %3191 = vmatpush1.msra.mxu0 0.0
    %3192 = vmatprep.subr.mxu0 0.0
    %3193 = vmatpush1.msra.mxu0 0.0
    %3194 = vmatprep.subr.mxu0 0.0
    %3195 = vmatpush1.msra.mxu0 0.0
    %3196 = vmatprep.mubr.f32.mxu0 0.0
    %3197 = vmatmul.mubr.f32.gmra.mrb[0].mxu0 %v3060
    %v3198 = vpop.f32.mrb[0].mxu0
    %v3199 = vadd.f32 0.0, %v3198
    %v3200 = vpop.f32.mrb[0].mxu0
    %v3201 = vadd.f32 0.0, %v3200
    %3202 = vdwg.mxu0
    %v3203 = vadd.f32 %v1922, %v3128
    %v3204 = vadd.f32 %v1924, %v3130
    %v3205 = vadd.f32 %v2083, %v3199
    %v3206 = vadd.f32 %v2085, %v3201
    %v3207 = vxor.u32 %v3203, 2147483648
    %v3208 = vmul.f32 %v3207, 1.442695
    %v3209 = vpow.pop %v3208
    %v3210 = vadd.f32 %v3209, 1.0
    %v3211 = vrcp.pop %v3210
    %v3212 = vmul.f32 1.0, %v3211
    %v3213 = vxor.u32 %v3204, 2147483648
    %v3214 = vmul.f32 %v3213, 1.442695
    %v3215 = vpow.pop %v3214
    %v3216 = vadd.f32 %v3215, 1.0
    %v3217 = vrcp.pop %v3216
    %v3218 = vmul.f32 1.0, %v3217
    %v3219 = vtanh.pop %v3205
    %v3220 = vxor.u32 %v3206, 2147483648
    %v3221 = vmul.f32 %v3220, 1.442695
    %v3222 = vpow.pop %v3221
    %v3223 = vadd.f32 %v3222, 1.0
    %v3224 = vrcp.pop %v3223
    %v3225 = vmul.f32 1.0, %v3224
    %v3226 = vmul.f32 %v3218, %v3058
    %v3227 = vmul.f32 %v3212, %v3219
    %v3228 = vadd.f32 %v3226, %v3227
    %v3229 = vtanh.pop %v3228
    %v3230 = vmul.f32 %v3225, %v3229
    %3231 = vmatprep.subr.mxu0 %v2148
    %3232 = vmatpush1.msra.mxu0 %v2147
    %3233 = vmatprep.subr.mxu0 %v2152
    %3234 = vmatpush1.msra.mxu0 %v2151
    %3235 = vmatprep.subr.mxu0 %v2156
    %3236 = vmatpush1.msra.mxu0 %v2155
    %3237 = vmatprep.subr.mxu0 %v2160
    %3238 = vmatpush1.msra.mxu0 %v2159
    %3239 = vmatprep.subr.mxu0 %v2164
    %3240 = vmatpush1.msra.mxu0 %v2163
    %3241 = vmatprep.subr.mxu0 %v2168
    %3242 = vmatpush1.msra.mxu0 %v2167
    %3243 = vmatprep.subr.mxu0 %v2172
    %3244 = vmatpush1.msra.mxu0 %v2171
    %3245 = vmatprep.subr.mxu0 %v2176
    %3246 = vmatpush1.msra.mxu0 %v2175
    %3247 = vmatprep.subr.mxu0 %v2180
    %3248 = vmatpush1.msra.mxu0 %v2179
    %3249 = vmatprep.subr.mxu0 %v2184
    %3250 = vmatpush1.msra.mxu0 %v2183
    %3251 = vmatprep.subr.mxu0 %v2188
    %3252 = vmatpush1.msra.mxu0 %v2187
    %3253 = vmatprep.subr.mxu0 %v2192
    %3254 = vmatpush1.msra.mxu0 %v2191
    %3255 = vmatprep.subr.mxu0 %v2196
    %3256 = vmatpush1.msra.mxu0 %v2195
    %3257 = vmatprep.subr.mxu0 %v2200
    %3258 = vmatpush1.msra.mxu0 %v2199
    %3259 = vmatprep.subr.mxu0 %v2204
    %3260 = vmatpush1.msra.mxu0 %v2203
    %3261 = vmatprep.subr.mxu0 %v2208
    %3262 = vmatpush1.msra.mxu0 %v2207
    %3263 = vmatprep.subr.mxu0 0.0
    %3264 = vmatpush1.msra.mxu0 0.0
    %3265 = vmatprep.subr.mxu0 0.0
    %3266 = vmatpush1.msra.mxu0 0.0
    %3267 = vmatprep.subr.mxu0 0.0
    %3268 = vmatpush1.msra.mxu0 0.0
    %3269 = vmatprep.subr.mxu0 0.0
    %3270 = vmatpush1.msra.mxu0 0.0
    %3271 = vmatprep.subr.mxu0 0.0
    %3272 = vmatpush1.msra.mxu0 0.0
    %3273 = vmatprep.subr.mxu0 0.0
    %3274 = vmatpush1.msra.mxu0 0.0
    %3275 = vmatprep.subr.mxu0 0.0
    %3276 = vmatpush1.msra.mxu0 0.0
    %3277 = vmatprep.subr.mxu0 0.0
    %3278 = vmatpush1.msra.mxu0 0.0
    %3279 = vmatprep.subr.mxu0 0.0
    %3280 = vmatpush1.msra.mxu0 0.0
    %3281 = vmatprep.subr.mxu0 0.0
    %3282 = vmatpush1.msra.mxu0 0.0
    %3283 = vmatprep.subr.mxu0 0.0
    %3284 = vmatpush1.msra.mxu0 0.0
    %3285 = vmatprep.subr.mxu0 0.0
    %3286 = vmatpush1.msra.mxu0 0.0
    %3287 = vmatprep.subr.mxu0 0.0
    %3288 = vmatpush1.msra.mxu0 0.0
    %3289 = vmatprep.subr.mxu0 0.0
    %3290 = vmatpush1.msra.mxu0 0.0
    %3291 = vmatprep.subr.mxu0 0.0
    %3292 = vmatpush1.msra.mxu0 0.0
    %3293 = vmatprep.subr.mxu0 0.0
    %3294 = vmatpush1.msra.mxu0 0.0
    %3295 = vmatprep.mubr.f32.mxu0 0.0
    %3296 = vmatmul.mubr.f32.gmra.mrb[0].mxu0 %v3230
    %v3297 = vpop.f32.mrb[0].mxu0
    %v3298 = vadd.f32 0.0, %v3297
    %v3299 = vpop.f32.mrb[0].mxu0
    %v3300 = vadd.f32 0.0, %v3299
    %3301 = vdwg.mxu0
    %3302 = vmatprep.subr.mxu0 %v2150
    %3303 = vmatpush1.msra.mxu0 %v2149
    %3304 = vmatprep.subr.mxu0 %v2154
    %3305 = vmatpush1.msra.mxu0 %v2153
    %3306 = vmatprep.subr.mxu0 %v2158
    %3307 = vmatpush1.msra.mxu0 %v2157
    %3308 = vmatprep.subr.mxu0 %v2162
    %3309 = vmatpush1.msra.mxu0 %v2161
    %3310 = vmatprep.subr.mxu0 %v2166
    %3311 = vmatpush1.msra.mxu0 %v2165
    %3312 = vmatprep.subr.mxu0 %v2170
    %3313 = vmatpush1.msra.mxu0 %v2169
    %3314 = vmatprep.subr.mxu0 %v2174
    %3315 = vmatpush1.msra.mxu0 %v2173
    %3316 = vmatprep.subr.mxu0 %v2178
    %3317 = vmatpush1.msra.mxu0 %v2177
    %3318 = vmatprep.subr.mxu0 %v2182
    %3319 = vmatpush1.msra.mxu0 %v2181
    %3320 = vmatprep.subr.mxu0 %v2186
    %3321 = vmatpush1.msra.mxu0 %v2185
    %3322 = vmatprep.subr.mxu0 %v2190
    %3323 = vmatpush1.msra.mxu0 %v2189
    %3324 = vmatprep.subr.mxu0 %v2194
    %3325 = vmatpush1.msra.mxu0 %v2193
    %3326 = vmatprep.subr.mxu0 %v2198
    %3327 = vmatpush1.msra.mxu0 %v2197
    %3328 = vmatprep.subr.mxu0 %v2202
    %3329 = vmatpush1.msra.mxu0 %v2201
    %3330 = vmatprep.subr.mxu0 %v2206
    %3331 = vmatpush1.msra.mxu0 %v2205
    %3332 = vmatprep.subr.mxu0 %v2210
    %3333 = vmatpush1.msra.mxu0 %v2209
    %3334 = vmatprep.subr.mxu0 0.0
    %3335 = vmatpush1.msra.mxu0 0.0
    %3336 = vmatprep.subr.mxu0 0.0
    %3337 = vmatpush1.msra.mxu0 0.0
    %3338 = vmatprep.subr.mxu0 0.0
    %3339 = vmatpush1.msra.mxu0 0.0
    %3340 = vmatprep.subr.mxu0 0.0
    %3341 = vmatpush1.msra.mxu0 0.0
    %3342 = vmatprep.subr.mxu0 0.0
    %3343 = vmatpush1.msra.mxu0 0.0
    %3344 = vmatprep.subr.mxu0 0.0
    %3345 = vmatpush1.msra.mxu0 0.0
    %3346 = vmatprep.subr.mxu0 0.0
    %3347 = vmatpush1.msra.mxu0 0.0
    %3348 = vmatprep.subr.mxu0 0.0
    %3349 = vmatpush1.msra.mxu0 0.0
    %3350 = vmatprep.subr.mxu0 0.0
    %3351 = vmatpush1.msra.mxu0 0.0
    %3352 = vmatprep.subr.mxu0 0.0
    %3353 = vmatpush1.msra.mxu0 0.0
    %3354 = vmatprep.subr.mxu0 0.0
    %3355 = vmatpush1.msra.mxu0 0.0
    %3356 = vmatprep.subr.mxu0 0.0
    %3357 = vmatpush1.msra.mxu0 0.0
    %3358 = vmatprep.subr.mxu0 0.0
    %3359 = vmatpush1.msra.mxu0 0.0
    %3360 = vmatprep.subr.mxu0 0.0
    %3361 = vmatpush1.msra.mxu0 0.0
    %3362 = vmatprep.subr.mxu0 0.0
    %3363 = vmatpush1.msra.mxu0 0.0
    %3364 = vmatprep.subr.mxu0 0.0
    %3365 = vmatpush1.msra.mxu0 0.0
    %3366 = vmatprep.mubr.f32.mxu0 0.0
    %3367 = vmatmul.mubr.f32.gmra.mrb[0].mxu0 %v3230
    %v3368 = vpop.f32.mrb[0].mxu0
    %v3369 = vadd.f32 0.0, %v3368
    %v3370 = vpop.f32.mrb[0].mxu0
    %v3371 = vadd.f32 0.0, %v3370
    %3372 = vdwg.mxu0
    %v3373 = vadd.f32 %v1928, %v3298
    %v3374 = vadd.f32 %v1930, %v3300
    %v3375 = vadd.f32 %v2089, %v3369
    %v3376 = vadd.f32 %v2091, %v3371
    %v3377 = vxor.u32 %v3373, 2147483648
    %v3378 = vmul.f32 %v3377, 1.442695
    %v3379 = vpow.pop %v3378
    %v3380 = vadd.f32 %v3379, 1.0
    %v3381 = vrcp.pop %v3380
    %v3382 = vmul.f32 1.0, %v3381
    %v3383 = vxor.u32 %v3374, 2147483648
    %v3384 = vmul.f32 %v3383, 1.442695
    %v3385 = vpow.pop %v3384
    %v3386 = vadd.f32 %v3385, 1.0
    %v3387 = vrcp.pop %v3386
    %v3388 = vmul.f32 1.0, %v3387
    %v3389 = vtanh.pop %v3375
    %v3390 = vxor.u32 %v3376, 2147483648
    %v3391 = vmul.f32 %v3390, 1.442695
    %v3392 = vpow.pop %v3391
    %v3393 = vadd.f32 %v3392, 1.0
    %v3394 = vrcp.pop %v3393
    %v3395 = vmul.f32 1.0, %v3394
    %v3396 = vmul.f32 %v3388, %v3228
    %v3397 = vmul.f32 %v3382, %v3389
    %v3398 = vadd.f32 %v3396, %v3397
    %v3399 = vtanh.pop %v3398
    %v3400 = vmul.f32 %v3395, %v3399
    %3401 = vmatprep.subr.mxu0 %v2148
    %3402 = vmatpush1.msra.mxu0 %v2147
    %3403 = vmatprep.subr.mxu0 %v2152
    %3404 = vmatpush1.msra.mxu0 %v2151
    %3405 = vmatprep.subr.mxu0 %v2156
    %3406 = vmatpush1.msra.mxu0 %v2155
    %3407 = vmatprep.subr.mxu0 %v2160
    %3408 = vmatpush1.msra.mxu0 %v2159
    %3409 = vmatprep.subr.mxu0 %v2164
    %3410 = vmatpush1.msra.mxu0 %v2163
    %3411 = vmatprep.subr.mxu0 %v2168
    %3412 = vmatpush1.msra.mxu0 %v2167
    %3413 = vmatprep.subr.mxu0 %v2172
    %3414 = vmatpush1.msra.mxu0 %v2171
    %3415 = vmatprep.subr.mxu0 %v2176
    %3416 = vmatpush1.msra.mxu0 %v2175
    %3417 = vmatprep.subr.mxu0 %v2180
    %3418 = vmatpush1.msra.mxu0 %v2179
    %3419 = vmatprep.subr.mxu0 %v2184
    %3420 = vmatpush1.msra.mxu0 %v2183
    %3421 = vmatprep.subr.mxu0 %v2188
    %3422 = vmatpush1.msra.mxu0 %v2187
    %3423 = vmatprep.subr.mxu0 %v2192
    %3424 = vmatpush1.msra.mxu0 %v2191
    %3425 = vmatprep.subr.mxu0 %v2196
    %3426 = vmatpush1.msra.mxu0 %v2195
    %3427 = vmatprep.subr.mxu0 %v2200
    %3428 = vmatpush1.msra.mxu0 %v2199
    %3429 = vmatprep.subr.mxu0 %v2204
    %3430 = vmatpush1.msra.mxu0 %v2203
    %3431 = vmatprep.subr.mxu0 %v2208
    %3432 = vmatpush1.msra.mxu0 %v2207
    %3433 = vmatprep.subr.mxu0 0.0
    %3434 = vmatpush1.msra.mxu0 0.0
    %3435 = vmatprep.subr.mxu0 0.0
    %3436 = vmatpush1.msra.mxu0 0.0
    %3437 = vmatprep.subr.mxu0 0.0
    %3438 = vmatpush1.msra.mxu0 0.0
    %3439 = vmatprep.subr.mxu0 0.0
    %3440 = vmatpush1.msra.mxu0 0.0
    %3441 = vmatprep.subr.mxu0 0.0
    %3442 = vmatpush1.msra.mxu0 0.0
    %3443 = vmatprep.subr.mxu0 0.0
    %3444 = vmatpush1.msra.mxu0 0.0
    %3445 = vmatprep.subr.mxu0 0.0
    %3446 = vmatpush1.msra.mxu0 0.0
    %3447 = vmatprep.subr.mxu0 0.0
    %3448 = vmatpush1.msra.mxu0 0.0
    %3449 = vmatprep.subr.mxu0 0.0
    %3450 = vmatpush1.msra.mxu0 0.0
    %3451 = vmatprep.subr.mxu0 0.0
    %3452 = vmatpush1.msra.mxu0 0.0
    %3453 = vmatprep.subr.mxu0 0.0
    %3454 = vmatpush1.msra.mxu0 0.0
    %3455 = vmatprep.subr.mxu0 0.0
    %3456 = vmatpush1.msra.mxu0 0.0
    %3457 = vmatprep.subr.mxu0 0.0
    %3458 = vmatpush1.msra.mxu0 0.0
    %3459 = vmatprep.subr.mxu0 0.0
    %3460 = vmatpush1.msra.mxu0 0.0
    %3461 = vmatprep.subr.mxu0 0.0
    %3462 = vmatpush1.msra.mxu0 0.0
    %3463 = vmatprep.subr.mxu0 0.0
    %3464 = vmatpush1.msra.mxu0 0.0
    %3465 = vmatprep.mubr.f32.mxu0 0.0
    %3466 = vmatmul.mubr.f32.gmra.mrb[0].mxu0 %v3400
    %v3467 = vpop.f32.mrb[0].mxu0
    %v3468 = vadd.f32 0.0, %v3467
    %v3469 = vpop.f32.mrb[0].mxu0
    %v3470 = vadd.f32 0.0, %v3469
    %3471 = vdwg.mxu0
    %3472 = vmatprep.subr.mxu0 %v2150
    %3473 = vmatpush1.msra.mxu0 %v2149
    %3474 = vmatprep.subr.mxu0 %v2154
    %3475 = vmatpush1.msra.mxu0 %v2153
    %3476 = vmatprep.subr.mxu0 %v2158
    %3477 = vmatpush1.msra.mxu0 %v2157
    %3478 = vmatprep.subr.mxu0 %v2162
    %3479 = vmatpush1.msra.mxu0 %v2161
    %3480 = vmatprep.subr.mxu0 %v2166
    %3481 = vmatpush1.msra.mxu0 %v2165
    %3482 = vmatprep.subr.mxu0 %v2170
    %3483 = vmatpush1.msra.mxu0 %v2169
    %3484 = vmatprep.subr.mxu0 %v2174
    %3485 = vmatpush1.msra.mxu0 %v2173
    %3486 = vmatprep.subr.mxu0 %v2178
    %3487 = vmatpush1.msra.mxu0 %v2177
    %3488 = vmatprep.subr.mxu0 %v2182
    %3489 = vmatpush1.msra.mxu0 %v2181
    %3490 = vmatprep.subr.mxu0 %v2186
    %3491 = vmatpush1.msra.mxu0 %v2185
    %3492 = vmatprep.subr.mxu0 %v2190
    %3493 = vmatpush1.msra.mxu0 %v2189
    %3494 = vmatprep.subr.mxu0 %v2194
    %3495 = vmatpush1.msra.mxu0 %v2193
    %3496 = vmatprep.subr.mxu0 %v2198
    %3497 = vmatpush1.msra.mxu0 %v2197
    %3498 = vmatprep.subr.mxu0 %v2202
    %3499 = vmatpush1.msra.mxu0 %v2201
    %3500 = vmatprep.subr.mxu0 %v2206
    %3501 = vmatpush1.msra.mxu0 %v2205
    %3502 = vmatprep.subr.mxu0 %v2210
    %3503 = vmatpush1.msra.mxu0 %v2209
    %3504 = vmatprep.subr.mxu0 0.0
    %3505 = vmatpush1.msra.mxu0 0.0
    %3506 = vmatprep.subr.mxu0 0.0
    %3507 = vmatpush1.msra.mxu0 0.0
    %3508 = vmatprep.subr.mxu0 0.0
    %3509 = vmatpush1.msra.mxu0 0.0
    %3510 = vmatprep.subr.mxu0 0.0
    %3511 = vmatpush1.msra.mxu0 0.0
    %3512 = vmatprep.subr.mxu0 0.0
    %3513 = vmatpush1.msra.mxu0 0.0
    %3514 = vmatprep.subr.mxu0 0.0
    %3515 = vmatpush1.msra.mxu0 0.0
    %3516 = vmatprep.subr.mxu0 0.0
    %3517 = vmatpush1.msra.mxu0 0.0
    %3518 = vmatprep.subr.mxu0 0.0
    %3519 = vmatpush1.msra.mxu0 0.0
    %3520 = vmatprep.subr.mxu0 0.0
    %3521 = vmatpush1.msra.mxu0 0.0
    %3522 = vmatprep.subr.mxu0 0.0
    %3523 = vmatpush1.msra.mxu0 0.0
    %3524 = vmatprep.subr.mxu0 0.0
    %3525 = vmatpush1.msra.mxu0 0.0
    %3526 = vmatprep.subr.mxu0 0.0
    %3527 = vmatpush1.msra.mxu0 0.0
    %3528 = vmatprep.subr.mxu0 0.0
    %3529 = vmatpush1.msra.mxu0 0.0
    %3530 = vmatprep.subr.mxu0 0.0
    %3531 = vmatpush1.msra.mxu0 0.0
    %3532 = vmatprep.subr.mxu0 0.0
    %3533 = vmatpush1.msra.mxu0 0.0
    %3534 = vmatprep.subr.mxu0 0.0
    %3535 = vmatpush1.msra.mxu0 0.0
    %3536 = vmatprep.mubr.f32.mxu0 0.0
    %3537 = vmatmul.mubr.f32.gmra.mrb[0].mxu0 %v3400
    %v3538 = vpop.f32.mrb[0].mxu0
    %v3539 = vadd.f32 0.0, %v3538
    %v3540 = vpop.f32.mrb[0].mxu0
    %v3541 = vadd.f32 0.0, %v3540
    %3542 = vdwg.mxu0
    %v3543 = vadd.f32 %v1934, %v3468
    %v3544 = vadd.f32 %v1936, %v3470
    %v3545 = vadd.f32 %v2095, %v3539
    %v3546 = vadd.f32 %v2097, %v3541
    %v3547 = vxor.u32 %v3543, 2147483648
    %v3548 = vmul.f32 %v3547, 1.442695
    %v3549 = vpow.pop %v3548
    %v3550 = vadd.f32 %v3549, 1.0
    %v3551 = vrcp.pop %v3550
    %v3552 = vmul.f32 1.0, %v3551
    %v3553 = vxor.u32 %v3544, 2147483648
    %v3554 = vmul.f32 %v3553, 1.442695
    %v3555 = vpow.pop %v3554
    %v3556 = vadd.f32 %v3555, 1.0
    %v3557 = vrcp.pop %v3556
    %v3558 = vmul.f32 1.0, %v3557
    %v3559 = vtanh.pop %v3545
    %v3560 = vxor.u32 %v3546, 2147483648
    %v3561 = vmul.f32 %v3560, 1.442695
    %v3562 = vpow.pop %v3561
    %v3563 = vadd.f32 %v3562, 1.0
    %v3564 = vrcp.pop %v3563
    %v3565 = vmul.f32 1.0, %v3564
    %v3566 = vmul.f32 %v3558, %v3398
    %v3567 = vmul.f32 %v3552, %v3559
    %v3568 = vadd.f32 %v3566, %v3567
    %v3569 = vtanh.pop %v3568
    %v3570 = vmul.f32 %v3565, %v3569
    %3571 = vmatprep.subr.mxu0 %v2148
    %3572 = vmatpush1.msra.mxu0 %v2147
    %3573 = vmatprep.subr.mxu0 %v2152
    %3574 = vmatpush1.msra.mxu0 %v2151
    %3575 = vmatprep.subr.mxu0 %v2156
    %3576 = vmatpush1.msra.mxu0 %v2155
    %3577 = vmatprep.subr.mxu0 %v2160
    %3578 = vmatpush1.msra.mxu0 %v2159
    %3579 = vmatprep.subr.mxu0 %v2164
    %3580 = vmatpush1.msra.mxu0 %v2163
    %3581 = vmatprep.subr.mxu0 %v2168
    %3582 = vmatpush1.msra.mxu0 %v2167
    %3583 = vmatprep.subr.mxu0 %v2172
    %3584 = vmatpush1.msra.mxu0 %v2171
    %3585 = vmatprep.subr.mxu0 %v2176
    %3586 = vmatpush1.msra.mxu0 %v2175
    %3587 = vmatprep.subr.mxu0 %v2180
    %3588 = vmatpush1.msra.mxu0 %v2179
    %3589 = vmatprep.subr.mxu0 %v2184
    %3590 = vmatpush1.msra.mxu0 %v2183
    %3591 = vmatprep.subr.mxu0 %v2188
    %3592 = vmatpush1.msra.mxu0 %v2187
    %3593 = vmatprep.subr.mxu0 %v2192
    %3594 = vmatpush1.msra.mxu0 %v2191
    %3595 = vmatprep.subr.mxu0 %v2196
    %3596 = vmatpush1.msra.mxu0 %v2195
    %3597 = vmatprep.subr.mxu0 %v2200
    %3598 = vmatpush1.msra.mxu0 %v2199
    %3599 = vmatprep.subr.mxu0 %v2204
    %3600 = vmatpush1.msra.mxu0 %v2203
    %3601 = vmatprep.subr.mxu0 %v2208
    %3602 = vmatpush1.msra.mxu0 %v2207
    %3603 = vmatprep.subr.mxu0 0.0
    %3604 = vmatpush1.msra.mxu0 0.0
    %3605 = vmatprep.subr.mxu0 0.0
    %3606 = vmatpush1.msra.mxu0 0.0
    %3607 = vmatprep.subr.mxu0 0.0
    %3608 = vmatpush1.msra.mxu0 0.0
    %3609 = vmatprep.subr.mxu0 0.0
    %3610 = vmatpush1.msra.mxu0 0.0
    %3611 = vmatprep.subr.mxu0 0.0
    %3612 = vmatpush1.msra.mxu0 0.0
    %3613 = vmatprep.subr.mxu0 0.0
    %3614 = vmatpush1.msra.mxu0 0.0
    %3615 = vmatprep.subr.mxu0 0.0
    %3616 = vmatpush1.msra.mxu0 0.0
    %3617 = vmatprep.subr.mxu0 0.0
    %3618 = vmatpush1.msra.mxu0 0.0
    %3619 = vmatprep.subr.mxu0 0.0
    %3620 = vmatpush1.msra.mxu0 0.0
    %3621 = vmatprep.subr.mxu0 0.0
    %3622 = vmatpush1.msra.mxu0 0.0
    %3623 = vmatprep.subr.mxu0 0.0
    %3624 = vmatpush1.msra.mxu0 0.0
    %3625 = vmatprep.subr.mxu0 0.0
    %3626 = vmatpush1.msra.mxu0 0.0
    %3627 = vmatprep.subr.mxu0 0.0
    %3628 = vmatpush1.msra.mxu0 0.0
    %3629 = vmatprep.subr.mxu0 0.0
    %3630 = vmatpush1.msra.mxu0 0.0
    %3631 = vmatprep.subr.mxu0 0.0
    %3632 = vmatpush1.msra.mxu0 0.0
    %3633 = vmatprep.subr.mxu0 0.0
    %3634 = vmatpush1.msra.mxu0 0.0
    %3635 = vmatprep.mubr.f32.mxu0 0.0
    %3636 = vmatmul.mubr.f32.gmra.mrb[0].mxu0 %v3570
    %v3637 = vpop.f32.mrb[0].mxu0
    %v3638 = vadd.f32 0.0, %v3637
    %v3639 = vpop.f32.mrb[0].mxu0
    %v3640 = vadd.f32 0.0, %v3639
    %3641 = vdwg.mxu0
    %3642 = vmatprep.subr.mxu0 %v2150
    %3643 = vmatpush1.msra.mxu0 %v2149
    %3644 = vmatprep.subr.mxu0 %v2154
    %3645 = vmatpush1.msra.mxu0 %v2153
    %3646 = vmatprep.subr.mxu0 %v2158
    %3647 = vmatpush1.msra.mxu0 %v2157
    %3648 = vmatprep.subr.mxu0 %v2162
    %3649 = vmatpush1.msra.mxu0 %v2161
    %3650 = vmatprep.subr.mxu0 %v2166
    %3651 = vmatpush1.msra.mxu0 %v2165
    %3652 = vmatprep.subr.mxu0 %v2170
    %3653 = vmatpush1.msra.mxu0 %v2169
    %3654 = vmatprep.subr.mxu0 %v2174
    %3655 = vmatpush1.msra.mxu0 %v2173
    %3656 = vmatprep.subr.mxu0 %v2178
    %3657 = vmatpush1.msra.mxu0 %v2177
    %3658 = vmatprep.subr.mxu0 %v2182
    %3659 = vmatpush1.msra.mxu0 %v2181
    %3660 = vmatprep.subr.mxu0 %v2186
    %3661 = vmatpush1.msra.mxu0 %v2185
    %3662 = vmatprep.subr.mxu0 %v2190
    %3663 = vmatpush1.msra.mxu0 %v2189
    %3664 = vmatprep.subr.mxu0 %v2194
    %3665 = vmatpush1.msra.mxu0 %v2193
    %3666 = vmatprep.subr.mxu0 %v2198
    %3667 = vmatpush1.msra.mxu0 %v2197
    %3668 = vmatprep.subr.mxu0 %v2202
    %3669 = vmatpush1.msra.mxu0 %v2201
    %3670 = vmatprep.subr.mxu0 %v2206
    %3671 = vmatpush1.msra.mxu0 %v2205
    %3672 = vmatprep.subr.mxu0 %v2210
    %3673 = vmatpush1.msra.mxu0 %v2209
    %3674 = vmatprep.subr.mxu0 0.0
    %3675 = vmatpush1.msra.mxu0 0.0
    %3676 = vmatprep.subr.mxu0 0.0
    %3677 = vmatpush1.msra.mxu0 0.0
    %3678 = vmatprep.subr.mxu0 0.0
    %3679 = vmatpush1.msra.mxu0 0.0
    %3680 = vmatprep.subr.mxu0 0.0
    %3681 = vmatpush1.msra.mxu0 0.0
    %3682 = vmatprep.subr.mxu0 0.0
    %3683 = vmatpush1.msra.mxu0 0.0
    %3684 = vmatprep.subr.mxu0 0.0
    %3685 = vmatpush1.msra.mxu0 0.0
    %3686 = vmatprep.subr.mxu0 0.0
    %3687 = vmatpush1.msra.mxu0 0.0
    %3688 = vmatprep.subr.mxu0 0.0
    %3689 = vmatpush1.msra.mxu0 0.0
    %3690 = vmatprep.subr.mxu0 0.0
    %3691 = vmatpush1.msra.mxu0 0.0
    %3692 = vmatprep.subr.mxu0 0.0
    %3693 = vmatpush1.msra.mxu0 0.0
    %3694 = vmatprep.subr.mxu0 0.0
    %3695 = vmatpush1.msra.mxu0 0.0
    %3696 = vmatprep.subr.mxu0 0.0
    %3697 = vmatpush1.msra.mxu0 0.0
    %3698 = vmatprep.subr.mxu0 0.0
    %3699 = vmatpush1.msra.mxu0 0.0
    %3700 = vmatprep.subr.mxu0 0.0
    %3701 = vmatpush1.msra.mxu0 0.0
    %3702 = vmatprep.subr.mxu0 0.0
    %3703 = vmatpush1.msra.mxu0 0.0
    %3704 = vmatprep.subr.mxu0 0.0
    %3705 = vmatpush1.msra.mxu0 0.0
    %3706 = vmatprep.mubr.f32.mxu0 0.0
    %3707 = vmatmul.mubr.f32.gmra.mrb[0].mxu0 %v3570
    %v3708 = vpop.f32.mrb[0].mxu0
    %v3709 = vadd.f32 0.0, %v3708
    %v3710 = vpop.f32.mrb[0].mxu0
    %v3711 = vadd.f32 0.0, %v3710
    %3712 = vdwg.mxu0
    %v3713 = vadd.f32 %v1940, %v3638
    %v3714 = vadd.f32 %v1942, %v3640
    %v3715 = vadd.f32 %v2101, %v3709
    %v3716 = vadd.f32 %v2103, %v3711
    %v3717 = vxor.u32 %v3713, 2147483648
    %v3718 = vmul.f32 %v3717, 1.442695
    %v3719 = vpow.pop %v3718
    %v3720 = vadd.f32 %v3719, 1.0
    %v3721 = vrcp.pop %v3720
    %v3722 = vmul.f32 1.0, %v3721
    %v3723 = vxor.u32 %v3714, 2147483648
    %v3724 = vmul.f32 %v3723, 1.442695
    %v3725 = vpow.pop %v3724
    %v3726 = vadd.f32 %v3725, 1.0
    %v3727 = vrcp.pop %v3726
    %v3728 = vmul.f32 1.0, %v3727
    %v3729 = vtanh.pop %v3715
    %v3730 = vxor.u32 %v3716, 2147483648
    %v3731 = vmul.f32 %v3730, 1.442695
    %v3732 = vpow.pop %v3731
    %v3733 = vadd.f32 %v3732, 1.0
    %v3734 = vrcp.pop %v3733
    %v3735 = vmul.f32 1.0, %v3734
    %v3736 = vmul.f32 %v3728, %v3568
    %v3737 = vmul.f32 %v3722, %v3729
    %v3738 = vadd.f32 %v3736, %v3737
    %v3739 = vtanh.pop %v3738
    %v3740 = vmul.f32 %v3735, %v3739
    %3741 = vmatprep.subr.mxu0 %v2148
    %3742 = vmatpush1.msra.mxu0 %v2147
    %3743 = vmatprep.subr.mxu0 %v2152
    %3744 = vmatpush1.msra.mxu0 %v2151
    %3745 = vmatprep.subr.mxu0 %v2156
    %3746 = vmatpush1.msra.mxu0 %v2155
    %3747 = vmatprep.subr.mxu0 %v2160
    %3748 = vmatpush1.msra.mxu0 %v2159
    %3749 = vmatprep.subr.mxu0 %v2164
    %3750 = vmatpush1.msra.mxu0 %v2163
    %3751 = vmatprep.subr.mxu0 %v2168
    %3752 = vmatpush1.msra.mxu0 %v2167
    %3753 = vmatprep.subr.mxu0 %v2172
    %3754 = vmatpush1.msra.mxu0 %v2171
    %3755 = vmatprep.subr.mxu0 %v2176
    %3756 = vmatpush1.msra.mxu0 %v2175
    %3757 = vmatprep.subr.mxu0 %v2180
    %3758 = vmatpush1.msra.mxu0 %v2179
    %3759 = vmatprep.subr.mxu0 %v2184
    %3760 = vmatpush1.msra.mxu0 %v2183
    %3761 = vmatprep.subr.mxu0 %v2188
    %3762 = vmatpush1.msra.mxu0 %v2187
    %3763 = vmatprep.subr.mxu0 %v2192
    %3764 = vmatpush1.msra.mxu0 %v2191
    %3765 = vmatprep.subr.mxu0 %v2196
    %3766 = vmatpush1.msra.mxu0 %v2195
    %3767 = vmatprep.subr.mxu0 %v2200
    %3768 = vmatpush1.msra.mxu0 %v2199
    %3769 = vmatprep.subr.mxu0 %v2204
    %3770 = vmatpush1.msra.mxu0 %v2203
    %3771 = vmatprep.subr.mxu0 %v2208
    %3772 = vmatpush1.msra.mxu0 %v2207
    %3773 = vmatprep.subr.mxu0 0.0
    %3774 = vmatpush1.msra.mxu0 0.0
    %3775 = vmatprep.subr.mxu0 0.0
    %3776 = vmatpush1.msra.mxu0 0.0
    %3777 = vmatprep.subr.mxu0 0.0
    %3778 = vmatpush1.msra.mxu0 0.0
    %3779 = vmatprep.subr.mxu0 0.0
    %3780 = vmatpush1.msra.mxu0 0.0
    %3781 = vmatprep.subr.mxu0 0.0
    %3782 = vmatpush1.msra.mxu0 0.0
    %3783 = vmatprep.subr.mxu0 0.0
    %3784 = vmatpush1.msra.mxu0 0.0
    %3785 = vmatprep.subr.mxu0 0.0
    %3786 = vmatpush1.msra.mxu0 0.0
    %3787 = vmatprep.subr.mxu0 0.0
    %3788 = vmatpush1.msra.mxu0 0.0
    %3789 = vmatprep.subr.mxu0 0.0
    %3790 = vmatpush1.msra.mxu0 0.0
    %3791 = vmatprep.subr.mxu0 0.0
    %3792 = vmatpush1.msra.mxu0 0.0
    %3793 = vmatprep.subr.mxu0 0.0
    %3794 = vmatpush1.msra.mxu0 0.0
    %3795 = vmatprep.subr.mxu0 0.0
    %3796 = vmatpush1.msra.mxu0 0.0
    %3797 = vmatprep.subr.mxu0 0.0
    %3798 = vmatpush1.msra.mxu0 0.0
    %3799 = vmatprep.subr.mxu0 0.0
    %3800 = vmatpush1.msra.mxu0 0.0
    %3801 = vmatprep.subr.mxu0 0.0
    %3802 = vmatpush1.msra.mxu0 0.0
    %3803 = vmatprep.subr.mxu0 0.0
    %3804 = vmatpush1.msra.mxu0 0.0
    %3805 = vmatprep.mubr.f32.mxu0 0.0
    %3806 = vmatmul.mubr.f32.gmra.mrb[0].mxu0 %v3740
    %v3807 = vpop.f32.mrb[0].mxu0
    %v3808 = vadd.f32 0.0, %v3807
    %v3809 = vpop.f32.mrb[0].mxu0
    %v3810 = vadd.f32 0.0, %v3809
    %3811 = vdwg.mxu0
    %3812 = vmatprep.subr.mxu0 %v2150
    %3813 = vmatpush1.msra.mxu0 %v2149
    %3814 = vmatprep.subr.mxu0 %v2154
    %3815 = vmatpush1.msra.mxu0 %v2153
    %3816 = vmatprep.subr.mxu0 %v2158
    %3817 = vmatpush1.msra.mxu0 %v2157
    %3818 = vmatprep.subr.mxu0 %v2162
    %3819 = vmatpush1.msra.mxu0 %v2161
    %3820 = vmatprep.subr.mxu0 %v2166
    %3821 = vmatpush1.msra.mxu0 %v2165
    %3822 = vmatprep.subr.mxu0 %v2170
    %3823 = vmatpush1.msra.mxu0 %v2169
    %3824 = vmatprep.subr.mxu0 %v2174
    %3825 = vmatpush1.msra.mxu0 %v2173
    %3826 = vmatprep.subr.mxu0 %v2178
    %3827 = vmatpush1.msra.mxu0 %v2177
    %3828 = vmatprep.subr.mxu0 %v2182
    %3829 = vmatpush1.msra.mxu0 %v2181
    %3830 = vmatprep.subr.mxu0 %v2186
    %3831 = vmatpush1.msra.mxu0 %v2185
    %3832 = vmatprep.subr.mxu0 %v2190
    %3833 = vmatpush1.msra.mxu0 %v2189
    %3834 = vmatprep.subr.mxu0 %v2194
    %3835 = vmatpush1.msra.mxu0 %v2193
    %3836 = vmatprep.subr.mxu0 %v2198
    %3837 = vmatpush1.msra.mxu0 %v2197
    %3838 = vmatprep.subr.mxu0 %v2202
    %3839 = vmatpush1.msra.mxu0 %v2201
    %3840 = vmatprep.subr.mxu0 %v2206
    %3841 = vmatpush1.msra.mxu0 %v2205
    %3842 = vmatprep.subr.mxu0 %v2210
    %3843 = vmatpush1.msra.mxu0 %v2209
    %3844 = vmatprep.subr.mxu0 0.0
    %3845 = vmatpush1.msra.mxu0 0.0
    %3846 = vmatprep.subr.mxu0 0.0
    %3847 = vmatpush1.msra.mxu0 0.0
    %3848 = vmatprep.subr.mxu0 0.0
    %3849 = vmatpush1.msra.mxu0 0.0
    %3850 = vmatprep.subr.mxu0 0.0
    %3851 = vmatpush1.msra.mxu0 0.0
    %3852 = vmatprep.subr.mxu0 0.0
    %3853 = vmatpush1.msra.mxu0 0.0
    %3854 = vmatprep.subr.mxu0 0.0
    %3855 = vmatpush1.msra.mxu0 0.0
    %3856 = vmatprep.subr.mxu0 0.0
    %3857 = vmatpush1.msra.mxu0 0.0
    %3858 = vmatprep.subr.mxu0 0.0
    %3859 = vmatpush1.msra.mxu0 0.0
    %3860 = vmatprep.subr.mxu0 0.0
    %3861 = vmatpush1.msra.mxu0 0.0
    %3862 = vmatprep.subr.mxu0 0.0
    %3863 = vmatpush1.msra.mxu0 0.0
    %3864 = vmatprep.subr.mxu0 0.0
    %3865 = vmatpush1.msra.mxu0 0.0
    %3866 = vmatprep.subr.mxu0 0.0
    %3867 = vmatpush1.msra.mxu0 0.0
    %3868 = vmatprep.subr.mxu0 0.0
    %3869 = vmatpush1.msra.mxu0 0.0
    %3870 = vmatprep.subr.mxu0 0.0
    %3871 = vmatpush1.msra.mxu0 0.0
    %3872 = vmatprep.subr.mxu0 0.0
    %3873 = vmatpush1.msra.mxu0 0.0
    %3874 = vmatprep.subr.mxu0 0.0
    %3875 = vmatpush1.msra.mxu0 0.0
    %3876 = vmatprep.mubr.f32.mxu0 0.0
    %3877 = vmatmul.mubr.f32.gmra.mrb[0].mxu0 %v3740
    %v3878 = vpop.f32.mrb[0].mxu0
    %v3879 = vadd.f32 0.0, %v3878
    %v3880 = vpop.f32.mrb[0].mxu0
    %v3881 = vadd.f32 0.0, %v3880
    %3882 = vdwg.mxu0
    %v3883 = vadd.f32 %v1946, %v3808
    %v3884 = vadd.f32 %v1948, %v3810
    %v3885 = vadd.f32 %v2107, %v3879
    %v3886 = vadd.f32 %v2109, %v3881
    %v3887 = vxor.u32 %v3883, 2147483648
    %v3888 = vmul.f32 %v3887, 1.442695
    %v3889 = vpow.pop %v3888
    %v3890 = vadd.f32 %v3889, 1.0
    %v3891 = vrcp.pop %v3890
    %v3892 = vmul.f32 1.0, %v3891
    %v3893 = vxor.u32 %v3884, 2147483648
    %v3894 = vmul.f32 %v3893, 1.442695
    %v3895 = vpow.pop %v3894
    %v3896 = vadd.f32 %v3895, 1.0
    %v3897 = vrcp.pop %v3896
    %v3898 = vmul.f32 1.0, %v3897
    %v3899 = vtanh.pop %v3885
    %v3900 = vxor.u32 %v3886, 2147483648
    %v3901 = vmul.f32 %v3900, 1.442695
    %v3902 = vpow.pop %v3901
    %v3903 = vadd.f32 %v3902, 1.0
    %v3904 = vrcp.pop %v3903
    %v3905 = vmul.f32 1.0, %v3904
    %v3906 = vmul.f32 %v3898, %v3738
    %v3907 = vmul.f32 %v3892, %v3899
    %v3908 = vadd.f32 %v3906, %v3907
    %v3909 = vtanh.pop %v3908
    %v3910 = vmul.f32 %v3905, %v3909
    %3911 = vmatprep.subr.mxu0 %v2148
    %3912 = vmatpush1.msra.mxu0 %v2147
    %3913 = vmatprep.subr.mxu0 %v2152
    %3914 = vmatpush1.msra.mxu0 %v2151
    %3915 = vmatprep.subr.mxu0 %v2156
    %3916 = vmatpush1.msra.mxu0 %v2155
    %3917 = vmatprep.subr.mxu0 %v2160
    %3918 = vmatpush1.msra.mxu0 %v2159
    %3919 = vmatprep.subr.mxu0 %v2164
    %3920 = vmatpush1.msra.mxu0 %v2163
    %3921 = vmatprep.subr.mxu0 %v2168
    %3922 = vmatpush1.msra.mxu0 %v2167
    %3923 = vmatprep.subr.mxu0 %v2172
    %3924 = vmatpush1.msra.mxu0 %v2171
    %3925 = vmatprep.subr.mxu0 %v2176
    %3926 = vmatpush1.msra.mxu0 %v2175
    %3927 = vmatprep.subr.mxu0 %v2180
    %3928 = vmatpush1.msra.mxu0 %v2179
    %3929 = vmatprep.subr.mxu0 %v2184
    %3930 = vmatpush1.msra.mxu0 %v2183
    %3931 = vmatprep.subr.mxu0 %v2188
    %3932 = vmatpush1.msra.mxu0 %v2187
    %3933 = vmatprep.subr.mxu0 %v2192
    %3934 = vmatpush1.msra.mxu0 %v2191
    %3935 = vmatprep.subr.mxu0 %v2196
    %3936 = vmatpush1.msra.mxu0 %v2195
    %3937 = vmatprep.subr.mxu0 %v2200
    %3938 = vmatpush1.msra.mxu0 %v2199
    %3939 = vmatprep.subr.mxu0 %v2204
    %3940 = vmatpush1.msra.mxu0 %v2203
    %3941 = vmatprep.subr.mxu0 %v2208
    %3942 = vmatpush1.msra.mxu0 %v2207
    %3943 = vmatprep.subr.mxu0 0.0
    %3944 = vmatpush1.msra.mxu0 0.0
    %3945 = vmatprep.subr.mxu0 0.0
    %3946 = vmatpush1.msra.mxu0 0.0
    %3947 = vmatprep.subr.mxu0 0.0
    %3948 = vmatpush1.msra.mxu0 0.0
    %3949 = vmatprep.subr.mxu0 0.0
    %3950 = vmatpush1.msra.mxu0 0.0
    %3951 = vmatprep.subr.mxu0 0.0
    %3952 = vmatpush1.msra.mxu0 0.0
    %3953 = vmatprep.subr.mxu0 0.0
    %3954 = vmatpush1.msra.mxu0 0.0
    %3955 = vmatprep.subr.mxu0 0.0
    %3956 = vmatpush1.msra.mxu0 0.0
    %3957 = vmatprep.subr.mxu0 0.0
    %3958 = vmatpush1.msra.mxu0 0.0
    %3959 = vmatprep.subr.mxu0 0.0
    %3960 = vmatpush1.msra.mxu0 0.0
    %3961 = vmatprep.subr.mxu0 0.0
    %3962 = vmatpush1.msra.mxu0 0.0
    %3963 = vmatprep.subr.mxu0 0.0
    %3964 = vmatpush1.msra.mxu0 0.0
    %3965 = vmatprep.subr.mxu0 0.0
    %3966 = vmatpush1.msra.mxu0 0.0
    %3967 = vmatprep.subr.mxu0 0.0
    %3968 = vmatpush1.msra.mxu0 0.0
    %3969 = vmatprep.subr.mxu0 0.0
    %3970 = vmatpush1.msra.mxu0 0.0
    %3971 = vmatprep.subr.mxu0 0.0
    %3972 = vmatpush1.msra.mxu0 0.0
    %3973 = vmatprep.subr.mxu0 0.0
    %3974 = vmatpush1.msra.mxu0 0.0
    %3975 = vmatprep.mubr.f32.mxu0 0.0
    %3976 = vmatmul.mubr.f32.gmra.mrb[0].mxu0 %v3910
    %v3977 = vpop.f32.mrb[0].mxu0
    %v3978 = vadd.f32 0.0, %v3977
    %v3979 = vpop.f32.mrb[0].mxu0
    %v3980 = vadd.f32 0.0, %v3979
    %3981 = vdwg.mxu0
    %3982 = vmatprep.subr.mxu0 %v2150
    %3983 = vmatpush1.msra.mxu0 %v2149
    %3984 = vmatprep.subr.mxu0 %v2154
    %3985 = vmatpush1.msra.mxu0 %v2153
    %3986 = vmatprep.subr.mxu0 %v2158
    %3987 = vmatpush1.msra.mxu0 %v2157
    %3988 = vmatprep.subr.mxu0 %v2162
    %3989 = vmatpush1.msra.mxu0 %v2161
    %3990 = vmatprep.subr.mxu0 %v2166
    %3991 = vmatpush1.msra.mxu0 %v2165
    %3992 = vmatprep.subr.mxu0 %v2170
    %3993 = vmatpush1.msra.mxu0 %v2169
    %3994 = vmatprep.subr.mxu0 %v2174
    %3995 = vmatpush1.msra.mxu0 %v2173
    %3996 = vmatprep.subr.mxu0 %v2178
    %3997 = vmatpush1.msra.mxu0 %v2177
    %3998 = vmatprep.subr.mxu0 %v2182
    %3999 = vmatpush1.msra.mxu0 %v2181
    %4000 = vmatprep.subr.mxu0 %v2186
    %4001 = vmatpush1.msra.mxu0 %v2185
    %4002 = vmatprep.subr.mxu0 %v2190
    %4003 = vmatpush1.msra.mxu0 %v2189
    %4004 = vmatprep.subr.mxu0 %v2194
    %4005 = vmatpush1.msra.mxu0 %v2193
    %4006 = vmatprep.subr.mxu0 %v2198
    %4007 = vmatpush1.msra.mxu0 %v2197
    %4008 = vmatprep.subr.mxu0 %v2202
    %4009 = vmatpush1.msra.mxu0 %v2201
    %4010 = vmatprep.subr.mxu0 %v2206
    %4011 = vmatpush1.msra.mxu0 %v2205
    %4012 = vmatprep.subr.mxu0 %v2210
    %4013 = vmatpush1.msra.mxu0 %v2209
    %4014 = vmatprep.subr.mxu0 0.0
    %4015 = vmatpush1.msra.mxu0 0.0
    %4016 = vmatprep.subr.mxu0 0.0
    %4017 = vmatpush1.msra.mxu0 0.0
    %4018 = vmatprep.subr.mxu0 0.0
    %4019 = vmatpush1.msra.mxu0 0.0
    %4020 = vmatprep.subr.mxu0 0.0
    %4021 = vmatpush1.msra.mxu0 0.0
    %4022 = vmatprep.subr.mxu0 0.0
    %4023 = vmatpush1.msra.mxu0 0.0
    %4024 = vmatprep.subr.mxu0 0.0
    %4025 = vmatpush1.msra.mxu0 0.0
    %4026 = vmatprep.subr.mxu0 0.0
    %4027 = vmatpush1.msra.mxu0 0.0
    %4028 = vmatprep.subr.mxu0 0.0
    %4029 = vmatpush1.msra.mxu0 0.0
    %4030 = vmatprep.subr.mxu0 0.0
    %4031 = vmatpush1.msra.mxu0 0.0
    %4032 = vmatprep.subr.mxu0 0.0
    %4033 = vmatpush1.msra.mxu0 0.0
    %4034 = vmatprep.subr.mxu0 0.0
    %4035 = vmatpush1.msra.mxu0 0.0
    %4036 = vmatprep.subr.mxu0 0.0
    %4037 = vmatpush1.msra.mxu0 0.0
    %4038 = vmatprep.subr.mxu0 0.0
    %4039 = vmatpush1.msra.mxu0 0.0
    %4040 = vmatprep.subr.mxu0 0.0
    %4041 = vmatpush1.msra.mxu0 0.0
    %4042 = vmatprep.subr.mxu0 0.0
    %4043 = vmatpush1.msra.mxu0 0.0
    %4044 = vmatprep.subr.mxu0 0.0
    %4045 = vmatpush1.msra.mxu0 0.0
    %4046 = vmatprep.mubr.f32.mxu0 0.0
    %4047 = vmatmul.mubr.f32.gmra.mrb[0].mxu0 %v3910
    %v4048 = vpop.f32.mrb[0].mxu0
    %v4049 = vadd.f32 0.0, %v4048
    %v4050 = vpop.f32.mrb[0].mxu0
    %v4051 = vadd.f32 0.0, %v4050
    %4052 = vdwg.mxu0
    %v4053 = vadd.f32 %v1952, %v3978
    %v4054 = vadd.f32 %v1954, %v3980
    %v4055 = vadd.f32 %v2113, %v4049
    %v4056 = vadd.f32 %v2115, %v4051
    %v4057 = vxor.u32 %v4053, 2147483648
    %v4058 = vmul.f32 %v4057, 1.442695
    %v4059 = vpow.pop %v4058
    %v4060 = vadd.f32 %v4059, 1.0
    %v4061 = vrcp.pop %v4060
    %v4062 = vmul.f32 1.0, %v4061
    %v4063 = vxor.u32 %v4054, 2147483648
    %v4064 = vmul.f32 %v4063, 1.442695
    %v4065 = vpow.pop %v4064
    %v4066 = vadd.f32 %v4065, 1.0
    %v4067 = vrcp.pop %v4066
    %v4068 = vmul.f32 1.0, %v4067
    %v4069 = vtanh.pop %v4055
    %v4070 = vxor.u32 %v4056, 2147483648
    %v4071 = vmul.f32 %v4070, 1.442695
    %v4072 = vpow.pop %v4071
    %v4073 = vadd.f32 %v4072, 1.0
    %v4074 = vrcp.pop %v4073
    %v4075 = vmul.f32 1.0, %v4074
    %v4076 = vmul.f32 %v4068, %v3908
    %v4077 = vmul.f32 %v4062, %v4069
    %v4078 = vadd.f32 %v4076, %v4077
    %v4079 = vtanh.pop %v4078
    %v4080 = vmul.f32 %v4075, %v4079
    %4081 = vmatprep.subr.mxu0 %v2148
    %4082 = vmatpush1.msra.mxu0 %v2147
    %4083 = vmatprep.subr.mxu0 %v2152
    %4084 = vmatpush1.msra.mxu0 %v2151
    %4085 = vmatprep.subr.mxu0 %v2156
    %4086 = vmatpush1.msra.mxu0 %v2155
    %4087 = vmatprep.subr.mxu0 %v2160
    %4088 = vmatpush1.msra.mxu0 %v2159
    %4089 = vmatprep.subr.mxu0 %v2164
    %4090 = vmatpush1.msra.mxu0 %v2163
    %4091 = vmatprep.subr.mxu0 %v2168
    %4092 = vmatpush1.msra.mxu0 %v2167
    %4093 = vmatprep.subr.mxu0 %v2172
    %4094 = vmatpush1.msra.mxu0 %v2171
    %4095 = vmatprep.subr.mxu0 %v2176
    %4096 = vmatpush1.msra.mxu0 %v2175
    %4097 = vmatprep.subr.mxu0 %v2180
    %4098 = vmatpush1.msra.mxu0 %v2179
    %4099 = vmatprep.subr.mxu0 %v2184
    %4100 = vmatpush1.msra.mxu0 %v2183
    %4101 = vmatprep.subr.mxu0 %v2188
    %4102 = vmatpush1.msra.mxu0 %v2187
    %4103 = vmatprep.subr.mxu0 %v2192
    %4104 = vmatpush1.msra.mxu0 %v2191
    %4105 = vmatprep.subr.mxu0 %v2196
    %4106 = vmatpush1.msra.mxu0 %v2195
    %4107 = vmatprep.subr.mxu0 %v2200
    %4108 = vmatpush1.msra.mxu0 %v2199
    %4109 = vmatprep.subr.mxu0 %v2204
    %4110 = vmatpush1.msra.mxu0 %v2203
    %4111 = vmatprep.subr.mxu0 %v2208
    %4112 = vmatpush1.msra.mxu0 %v2207
    %4113 = vmatprep.subr.mxu0 0.0
    %4114 = vmatpush1.msra.mxu0 0.0
    %4115 = vmatprep.subr.mxu0 0.0
    %4116 = vmatpush1.msra.mxu0 0.0
    %4117 = vmatprep.subr.mxu0 0.0
    %4118 = vmatpush1.msra.mxu0 0.0
    %4119 = vmatprep.subr.mxu0 0.0
    %4120 = vmatpush1.msra.mxu0 0.0
    %4121 = vmatprep.subr.mxu0 0.0
    %4122 = vmatpush1.msra.mxu0 0.0
    %4123 = vmatprep.subr.mxu0 0.0
    %4124 = vmatpush1.msra.mxu0 0.0
    %4125 = vmatprep.subr.mxu0 0.0
    %4126 = vmatpush1.msra.mxu0 0.0
    %4127 = vmatprep.subr.mxu0 0.0
    %4128 = vmatpush1.msra.mxu0 0.0
    %4129 = vmatprep.subr.mxu0 0.0
    %4130 = vmatpush1.msra.mxu0 0.0
    %4131 = vmatprep.subr.mxu0 0.0
    %4132 = vmatpush1.msra.mxu0 0.0
    %4133 = vmatprep.subr.mxu0 0.0
    %4134 = vmatpush1.msra.mxu0 0.0
    %4135 = vmatprep.subr.mxu0 0.0
    %4136 = vmatpush1.msra.mxu0 0.0
    %4137 = vmatprep.subr.mxu0 0.0
    %4138 = vmatpush1.msra.mxu0 0.0
    %4139 = vmatprep.subr.mxu0 0.0
    %4140 = vmatpush1.msra.mxu0 0.0
    %4141 = vmatprep.subr.mxu0 0.0
    %4142 = vmatpush1.msra.mxu0 0.0
    %4143 = vmatprep.subr.mxu0 0.0
    %4144 = vmatpush1.msra.mxu0 0.0
    %4145 = vmatprep.mubr.f32.mxu0 0.0
    %4146 = vmatmul.mubr.f32.gmra.mrb[0].mxu0 %v4080
    %v4147 = vpop.f32.mrb[0].mxu0
    %v4148 = vadd.f32 0.0, %v4147
    %v4149 = vpop.f32.mrb[0].mxu0
    %v4150 = vadd.f32 0.0, %v4149
    %4151 = vdwg.mxu0
    %4152 = vmatprep.subr.mxu0 %v2150
    %4153 = vmatpush1.msra.mxu0 %v2149
    %4154 = vmatprep.subr.mxu0 %v2154
    %4155 = vmatpush1.msra.mxu0 %v2153
    %4156 = vmatprep.subr.mxu0 %v2158
    %4157 = vmatpush1.msra.mxu0 %v2157
    %4158 = vmatprep.subr.mxu0 %v2162
    %4159 = vmatpush1.msra.mxu0 %v2161
    %4160 = vmatprep.subr.mxu0 %v2166
    %4161 = vmatpush1.msra.mxu0 %v2165
    %4162 = vmatprep.subr.mxu0 %v2170
    %4163 = vmatpush1.msra.mxu0 %v2169
    %4164 = vmatprep.subr.mxu0 %v2174
    %4165 = vmatpush1.msra.mxu0 %v2173
    %4166 = vmatprep.subr.mxu0 %v2178
    %4167 = vmatpush1.msra.mxu0 %v2177
    %4168 = vmatprep.subr.mxu0 %v2182
    %4169 = vmatpush1.msra.mxu0 %v2181
    %4170 = vmatprep.subr.mxu0 %v2186
    %4171 = vmatpush1.msra.mxu0 %v2185
    %4172 = vmatprep.subr.mxu0 %v2190
    %4173 = vmatpush1.msra.mxu0 %v2189
    %4174 = vmatprep.subr.mxu0 %v2194
    %4175 = vmatpush1.msra.mxu0 %v2193
    %4176 = vmatprep.subr.mxu0 %v2198
    %4177 = vmatpush1.msra.mxu0 %v2197
    %4178 = vmatprep.subr.mxu0 %v2202
    %4179 = vmatpush1.msra.mxu0 %v2201
    %4180 = vmatprep.subr.mxu0 %v2206
    %4181 = vmatpush1.msra.mxu0 %v2205
    %4182 = vmatprep.subr.mxu0 %v2210
    %4183 = vmatpush1.msra.mxu0 %v2209
    %4184 = vmatprep.subr.mxu0 0.0
    %4185 = vmatpush1.msra.mxu0 0.0
    %4186 = vmatprep.subr.mxu0 0.0
    %4187 = vmatpush1.msra.mxu0 0.0
    %4188 = vmatprep.subr.mxu0 0.0
    %4189 = vmatpush1.msra.mxu0 0.0
    %4190 = vmatprep.subr.mxu0 0.0
    %4191 = vmatpush1.msra.mxu0 0.0
    %4192 = vmatprep.subr.mxu0 0.0
    %4193 = vmatpush1.msra.mxu0 0.0
    %4194 = vmatprep.subr.mxu0 0.0
    %4195 = vmatpush1.msra.mxu0 0.0
    %4196 = vmatprep.subr.mxu0 0.0
    %4197 = vmatpush1.msra.mxu0 0.0
    %4198 = vmatprep.subr.mxu0 0.0
    %4199 = vmatpush1.msra.mxu0 0.0
    %4200 = vmatprep.subr.mxu0 0.0
    %4201 = vmatpush1.msra.mxu0 0.0
    %4202 = vmatprep.subr.mxu0 0.0
    %4203 = vmatpush1.msra.mxu0 0.0
    %4204 = vmatprep.subr.mxu0 0.0
    %4205 = vmatpush1.msra.mxu0 0.0
    %4206 = vmatprep.subr.mxu0 0.0
    %4207 = vmatpush1.msra.mxu0 0.0
    %4208 = vmatprep.subr.mxu0 0.0
    %4209 = vmatpush1.msra.mxu0 0.0
    %4210 = vmatprep.subr.mxu0 0.0
    %4211 = vmatpush1.msra.mxu0 0.0
    %4212 = vmatprep.subr.mxu0 0.0
    %4213 = vmatpush1.msra.mxu0 0.0
    %4214 = vmatprep.subr.mxu0 0.0
    %4215 = vmatpush1.msra.mxu0 0.0
    %4216 = vmatprep.mubr.f32.mxu0 0.0
    %4217 = vmatmul.mubr.f32.gmra.mrb[0].mxu0 %v4080
    %v4218 = vpop.f32.mrb[0].mxu0
    %v4219 = vadd.f32 0.0, %v4218
    %v4220 = vpop.f32.mrb[0].mxu0
    %v4221 = vadd.f32 0.0, %v4220
    %4222 = vdwg.mxu0
    %v4223 = vadd.f32 %v1958, %v4148
    %v4224 = vadd.f32 %v1960, %v4150
    %v4225 = vadd.f32 %v2119, %v4219
    %v4226 = vadd.f32 %v2121, %v4221
    %v4227 = vxor.u32 %v4223, 2147483648
    %v4228 = vmul.f32 %v4227, 1.442695
    %v4229 = vpow.pop %v4228
    %v4230 = vadd.f32 %v4229, 1.0
    %v4231 = vrcp.pop %v4230
    %v4232 = vmul.f32 1.0, %v4231
    %v4233 = vxor.u32 %v4224, 2147483648
    %v4234 = vmul.f32 %v4233, 1.442695
    %v4235 = vpow.pop %v4234
    %v4236 = vadd.f32 %v4235, 1.0
    %v4237 = vrcp.pop %v4236
    %v4238 = vmul.f32 1.0, %v4237
    %v4239 = vtanh.pop %v4225
    %v4240 = vxor.u32 %v4226, 2147483648
    %v4241 = vmul.f32 %v4240, 1.442695
    %v4242 = vpow.pop %v4241
    %v4243 = vadd.f32 %v4242, 1.0
    %v4244 = vrcp.pop %v4243
    %v4245 = vmul.f32 1.0, %v4244
    %v4246 = vmul.f32 %v4238, %v4078
    %v4247 = vmul.f32 %v4232, %v4239
    %v4248 = vadd.f32 %v4246, %v4247
    %v4249 = vtanh.pop %v4248
    %v4250 = vmul.f32 %v4245, %v4249
    %4251 = vmatprep.subr.mxu0 %v2148
    %4252 = vmatpush1.msra.mxu0 %v2147
    %4253 = vmatprep.subr.mxu0 %v2152
    %4254 = vmatpush1.msra.mxu0 %v2151
    %4255 = vmatprep.subr.mxu0 %v2156
    %4256 = vmatpush1.msra.mxu0 %v2155
    %4257 = vmatprep.subr.mxu0 %v2160
    %4258 = vmatpush1.msra.mxu0 %v2159
    %4259 = vmatprep.subr.mxu0 %v2164
    %4260 = vmatpush1.msra.mxu0 %v2163
    %4261 = vmatprep.subr.mxu0 %v2168
    %4262 = vmatpush1.msra.mxu0 %v2167
    %4263 = vmatprep.subr.mxu0 %v2172
    %4264 = vmatpush1.msra.mxu0 %v2171
    %4265 = vmatprep.subr.mxu0 %v2176
    %4266 = vmatpush1.msra.mxu0 %v2175
    %4267 = vmatprep.subr.mxu0 %v2180
    %4268 = vmatpush1.msra.mxu0 %v2179
    %4269 = vmatprep.subr.mxu0 %v2184
    %4270 = vmatpush1.msra.mxu0 %v2183
    %4271 = vmatprep.subr.mxu0 %v2188
    %4272 = vmatpush1.msra.mxu0 %v2187
    %4273 = vmatprep.subr.mxu0 %v2192
    %4274 = vmatpush1.msra.mxu0 %v2191
    %4275 = vmatprep.subr.mxu0 %v2196
    %4276 = vmatpush1.msra.mxu0 %v2195
    %4277 = vmatprep.subr.mxu0 %v2200
    %4278 = vmatpush1.msra.mxu0 %v2199
    %4279 = vmatprep.subr.mxu0 %v2204
    %4280 = vmatpush1.msra.mxu0 %v2203
    %4281 = vmatprep.subr.mxu0 %v2208
    %4282 = vmatpush1.msra.mxu0 %v2207
    %4283 = vmatprep.subr.mxu0 0.0
    %4284 = vmatpush1.msra.mxu0 0.0
    %4285 = vmatprep.subr.mxu0 0.0
    %4286 = vmatpush1.msra.mxu0 0.0
    %4287 = vmatprep.subr.mxu0 0.0
    %4288 = vmatpush1.msra.mxu0 0.0
    %4289 = vmatprep.subr.mxu0 0.0
    %4290 = vmatpush1.msra.mxu0 0.0
    %4291 = vmatprep.subr.mxu0 0.0
    %4292 = vmatpush1.msra.mxu0 0.0
    %4293 = vmatprep.subr.mxu0 0.0
    %4294 = vmatpush1.msra.mxu0 0.0
    %4295 = vmatprep.subr.mxu0 0.0
    %4296 = vmatpush1.msra.mxu0 0.0
    %4297 = vmatprep.subr.mxu0 0.0
    %4298 = vmatpush1.msra.mxu0 0.0
    %4299 = vmatprep.subr.mxu0 0.0
    %4300 = vmatpush1.msra.mxu0 0.0
    %4301 = vmatprep.subr.mxu0 0.0
    %4302 = vmatpush1.msra.mxu0 0.0
    %4303 = vmatprep.subr.mxu0 0.0
    %4304 = vmatpush1.msra.mxu0 0.0
    %4305 = vmatprep.subr.mxu0 0.0
    %4306 = vmatpush1.msra.mxu0 0.0
    %4307 = vmatprep.subr.mxu0 0.0
    %4308 = vmatpush1.msra.mxu0 0.0
    %4309 = vmatprep.subr.mxu0 0.0
    %4310 = vmatpush1.msra.mxu0 0.0
    %4311 = vmatprep.subr.mxu0 0.0
    %4312 = vmatpush1.msra.mxu0 0.0
    %4313 = vmatprep.subr.mxu0 0.0
    %4314 = vmatpush1.msra.mxu0 0.0
    %4315 = vmatprep.mubr.f32.mxu0 0.0
    %4316 = vmatmul.mubr.f32.gmra.mrb[0].mxu0 %v4250
    %v4317 = vpop.f32.mrb[0].mxu0
    %v4318 = vadd.f32 0.0, %v4317
    %v4319 = vpop.f32.mrb[0].mxu0
    %v4320 = vadd.f32 0.0, %v4319
    %4321 = vdwg.mxu0
    %4322 = vmatprep.subr.mxu0 %v2150
    %4323 = vmatpush1.msra.mxu0 %v2149
    %4324 = vmatprep.subr.mxu0 %v2154
    %4325 = vmatpush1.msra.mxu0 %v2153
    %4326 = vmatprep.subr.mxu0 %v2158
    %4327 = vmatpush1.msra.mxu0 %v2157
    %4328 = vmatprep.subr.mxu0 %v2162
    %4329 = vmatpush1.msra.mxu0 %v2161
    %4330 = vmatprep.subr.mxu0 %v2166
    %4331 = vmatpush1.msra.mxu0 %v2165
    %4332 = vmatprep.subr.mxu0 %v2170
    %4333 = vmatpush1.msra.mxu0 %v2169
    %4334 = vmatprep.subr.mxu0 %v2174
    %4335 = vmatpush1.msra.mxu0 %v2173
    %4336 = vmatprep.subr.mxu0 %v2178
    %4337 = vmatpush1.msra.mxu0 %v2177
    %4338 = vmatprep.subr.mxu0 %v2182
    %4339 = vmatpush1.msra.mxu0 %v2181
    %4340 = vmatprep.subr.mxu0 %v2186
    %4341 = vmatpush1.msra.mxu0 %v2185
    %4342 = vmatprep.subr.mxu0 %v2190
    %4343 = vmatpush1.msra.mxu0 %v2189
    %4344 = vmatprep.subr.mxu0 %v2194
    %4345 = vmatpush1.msra.mxu0 %v2193
    %4346 = vmatprep.subr.mxu0 %v2198
    %4347 = vmatpush1.msra.mxu0 %v2197
    %4348 = vmatprep.subr.mxu0 %v2202
    %4349 = vmatpush1.msra.mxu0 %v2201
    %4350 = vmatprep.subr.mxu0 %v2206
    %4351 = vmatpush1.msra.mxu0 %v2205
    %4352 = vmatprep.subr.mxu0 %v2210
    %4353 = vmatpush1.msra.mxu0 %v2209
    %4354 = vmatprep.subr.mxu0 0.0
    %4355 = vmatpush1.msra.mxu0 0.0
    %4356 = vmatprep.subr.mxu0 0.0
    %4357 = vmatpush1.msra.mxu0 0.0
    %4358 = vmatprep.subr.mxu0 0.0
    %4359 = vmatpush1.msra.mxu0 0.0
    %4360 = vmatprep.subr.mxu0 0.0
    %4361 = vmatpush1.msra.mxu0 0.0
    %4362 = vmatprep.subr.mxu0 0.0
    %4363 = vmatpush1.msra.mxu0 0.0
    %4364 = vmatprep.subr.mxu0 0.0
    %4365 = vmatpush1.msra.mxu0 0.0
    %4366 = vmatprep.subr.mxu0 0.0
    %4367 = vmatpush1.msra.mxu0 0.0
    %4368 = vmatprep.subr.mxu0 0.0
    %4369 = vmatpush1.msra.mxu0 0.0
    %4370 = vmatprep.subr.mxu0 0.0
    %4371 = vmatpush1.msra.mxu0 0.0
    %4372 = vmatprep.subr.mxu0 0.0
    %4373 = vmatpush1.msra.mxu0 0.0
    %4374 = vmatprep.subr.mxu0 0.0
    %4375 = vmatpush1.msra.mxu0 0.0
    %4376 = vmatprep.subr.mxu0 0.0
    %4377 = vmatpush1.msra.mxu0 0.0
    %4378 = vmatprep.subr.mxu0 0.0
    %4379 = vmatpush1.msra.mxu0 0.0
    %4380 = vmatprep.subr.mxu0 0.0
    %4381 = vmatpush1.msra.mxu0 0.0
    %4382 = vmatprep.subr.mxu0 0.0
    %4383 = vmatpush1.msra.mxu0 0.0
    %4384 = vmatprep.subr.mxu0 0.0
    %4385 = vmatpush1.msra.mxu0 0.0
    %4386 = vmatprep.mubr.f32.mxu0 0.0
    %4387 = vmatmul.mubr.f32.gmra.mrb[0].mxu0 %v4250
    %v4388 = vpop.f32.mrb[0].mxu0
    %v4389 = vadd.f32 0.0, %v4388
    %v4390 = vpop.f32.mrb[0].mxu0
    %v4391 = vadd.f32 0.0, %v4390
    %4392 = vdwg.mxu0
    %v4393 = vadd.f32 %v1964, %v4318
    %v4394 = vadd.f32 %v1966, %v4320
    %v4395 = vadd.f32 %v2125, %v4389
    %v4396 = vadd.f32 %v2127, %v4391
    %v4397 = vxor.u32 %v4393, 2147483648
    %v4398 = vmul.f32 %v4397, 1.442695
    %v4399 = vpow.pop %v4398
    %v4400 = vadd.f32 %v4399, 1.0
    %v4401 = vrcp.pop %v4400
    %v4402 = vmul.f32 1.0, %v4401
    %v4403 = vxor.u32 %v4394, 2147483648
    %v4404 = vmul.f32 %v4403, 1.442695
    %v4405 = vpow.pop %v4404
    %v4406 = vadd.f32 %v4405, 1.0
    %v4407 = vrcp.pop %v4406
    %v4408 = vmul.f32 1.0, %v4407
    %v4409 = vtanh.pop %v4395
    %v4410 = vxor.u32 %v4396, 2147483648
    %v4411 = vmul.f32 %v4410, 1.442695
    %v4412 = vpow.pop %v4411
    %v4413 = vadd.f32 %v4412, 1.0
    %v4414 = vrcp.pop %v4413
    %v4415 = vmul.f32 1.0, %v4414
    %v4416 = vmul.f32 %v4408, %v4248
    %v4417 = vmul.f32 %v4402, %v4409
    %v4418 = vadd.f32 %v4416, %v4417
    %v4419 = vtanh.pop %v4418
    %v4420 = vmul.f32 %v4415, %v4419
    %4421 = vmatprep.subr.mxu0 %v2148
    %4422 = vmatpush1.msra.mxu0 %v2147
    %4423 = vmatprep.subr.mxu0 %v2152
    %4424 = vmatpush1.msra.mxu0 %v2151
    %4425 = vmatprep.subr.mxu0 %v2156
    %4426 = vmatpush1.msra.mxu0 %v2155
    %4427 = vmatprep.subr.mxu0 %v2160
    %4428 = vmatpush1.msra.mxu0 %v2159
    %4429 = vmatprep.subr.mxu0 %v2164
    %4430 = vmatpush1.msra.mxu0 %v2163
    %4431 = vmatprep.subr.mxu0 %v2168
    %4432 = vmatpush1.msra.mxu0 %v2167
    %4433 = vmatprep.subr.mxu0 %v2172
    %4434 = vmatpush1.msra.mxu0 %v2171
    %4435 = vmatprep.subr.mxu0 %v2176
    %4436 = vmatpush1.msra.mxu0 %v2175
    %4437 = vmatprep.subr.mxu0 %v2180
    %4438 = vmatpush1.msra.mxu0 %v2179
    %4439 = vmatprep.subr.mxu0 %v2184
    %4440 = vmatpush1.msra.mxu0 %v2183
    %4441 = vmatprep.subr.mxu0 %v2188
    %4442 = vmatpush1.msra.mxu0 %v2187
    %4443 = vmatprep.subr.mxu0 %v2192
    %4444 = vmatpush1.msra.mxu0 %v2191
    %4445 = vmatprep.subr.mxu0 %v2196
    %4446 = vmatpush1.msra.mxu0 %v2195
    %4447 = vmatprep.subr.mxu0 %v2200
    %4448 = vmatpush1.msra.mxu0 %v2199
    %4449 = vmatprep.subr.mxu0 %v2204
    %4450 = vmatpush1.msra.mxu0 %v2203
    %4451 = vmatprep.subr.mxu0 %v2208
    %4452 = vmatpush1.msra.mxu0 %v2207
    %4453 = vmatprep.subr.mxu0 0.0
    %4454 = vmatpush1.msra.mxu0 0.0
    %4455 = vmatprep.subr.mxu0 0.0
    %4456 = vmatpush1.msra.mxu0 0.0
    %4457 = vmatprep.subr.mxu0 0.0
    %4458 = vmatpush1.msra.mxu0 0.0
    %4459 = vmatprep.subr.mxu0 0.0
    %4460 = vmatpush1.msra.mxu0 0.0
    %4461 = vmatprep.subr.mxu0 0.0
    %4462 = vmatpush1.msra.mxu0 0.0
    %4463 = vmatprep.subr.mxu0 0.0
    %4464 = vmatpush1.msra.mxu0 0.0
    %4465 = vmatprep.subr.mxu0 0.0
    %4466 = vmatpush1.msra.mxu0 0.0
    %4467 = vmatprep.subr.mxu0 0.0
    %4468 = vmatpush1.msra.mxu0 0.0
    %4469 = vmatprep.subr.mxu0 0.0
    %4470 = vmatpush1.msra.mxu0 0.0
    %4471 = vmatprep.subr.mxu0 0.0
    %4472 = vmatpush1.msra.mxu0 0.0
    %4473 = vmatprep.subr.mxu0 0.0
    %4474 = vmatpush1.msra.mxu0 0.0
    %4475 = vmatprep.subr.mxu0 0.0
    %4476 = vmatpush1.msra.mxu0 0.0
    %4477 = vmatprep.subr.mxu0 0.0
    %4478 = vmatpush1.msra.mxu0 0.0
    %4479 = vmatprep.subr.mxu0 0.0
    %4480 = vmatpush1.msra.mxu0 0.0
    %4481 = vmatprep.subr.mxu0 0.0
    %4482 = vmatpush1.msra.mxu0 0.0
    %4483 = vmatprep.subr.mxu0 0.0
    %4484 = vmatpush1.msra.mxu0 0.0
    %4485 = vmatprep.mubr.f32.mxu0 0.0
    %4486 = vmatmul.mubr.f32.gmra.mrb[0].mxu0 %v4420
    %v4487 = vpop.f32.mrb[0].mxu0
    %v4488 = vadd.f32 0.0, %v4487
    %v4489 = vpop.f32.mrb[0].mxu0
    %v4490 = vadd.f32 0.0, %v4489
    %4491 = vdwg.mxu0
    %4492 = vmatprep.subr.mxu0 %v2150
    %4493 = vmatpush1.msra.mxu0 %v2149
    %4494 = vmatprep.subr.mxu0 %v2154
    %4495 = vmatpush1.msra.mxu0 %v2153
    %4496 = vmatprep.subr.mxu0 %v2158
    %4497 = vmatpush1.msra.mxu0 %v2157
    %4498 = vmatprep.subr.mxu0 %v2162
    %4499 = vmatpush1.msra.mxu0 %v2161
    %4500 = vmatprep.subr.mxu0 %v2166
    %4501 = vmatpush1.msra.mxu0 %v2165
    %4502 = vmatprep.subr.mxu0 %v2170
    %4503 = vmatpush1.msra.mxu0 %v2169
    %4504 = vmatprep.subr.mxu0 %v2174
    %4505 = vmatpush1.msra.mxu0 %v2173
    %4506 = vmatprep.subr.mxu0 %v2178
    %4507 = vmatpush1.msra.mxu0 %v2177
    %4508 = vmatprep.subr.mxu0 %v2182
    %4509 = vmatpush1.msra.mxu0 %v2181
    %4510 = vmatprep.subr.mxu0 %v2186
    %4511 = vmatpush1.msra.mxu0 %v2185
    %4512 = vmatprep.subr.mxu0 %v2190
    %4513 = vmatpush1.msra.mxu0 %v2189
    %4514 = vmatprep.subr.mxu0 %v2194
    %4515 = vmatpush1.msra.mxu0 %v2193
    %4516 = vmatprep.subr.mxu0 %v2198
    %4517 = vmatpush1.msra.mxu0 %v2197
    %4518 = vmatprep.subr.mxu0 %v2202
    %4519 = vmatpush1.msra.mxu0 %v2201
    %4520 = vmatprep.subr.mxu0 %v2206
    %4521 = vmatpush1.msra.mxu0 %v2205
    %4522 = vmatprep.subr.mxu0 %v2210
    %4523 = vmatpush1.msra.mxu0 %v2209
    %4524 = vmatprep.subr.mxu0 0.0
    %4525 = vmatpush1.msra.mxu0 0.0
    %4526 = vmatprep.subr.mxu0 0.0
    %4527 = vmatpush1.msra.mxu0 0.0
    %4528 = vmatprep.subr.mxu0 0.0
    %4529 = vmatpush1.msra.mxu0 0.0
    %4530 = vmatprep.subr.mxu0 0.0
    %4531 = vmatpush1.msra.mxu0 0.0
    %4532 = vmatprep.subr.mxu0 0.0
    %4533 = vmatpush1.msra.mxu0 0.0
    %4534 = vmatprep.subr.mxu0 0.0
    %4535 = vmatpush1.msra.mxu0 0.0
    %4536 = vmatprep.subr.mxu0 0.0
    %4537 = vmatpush1.msra.mxu0 0.0
    %4538 = vmatprep.subr.mxu0 0.0
    %4539 = vmatpush1.msra.mxu0 0.0
    %4540 = vmatprep.subr.mxu0 0.0
    %4541 = vmatpush1.msra.mxu0 0.0
    %4542 = vmatprep.subr.mxu0 0.0
    %4543 = vmatpush1.msra.mxu0 0.0
    %4544 = vmatprep.subr.mxu0 0.0
    %4545 = vmatpush1.msra.mxu0 0.0
    %4546 = vmatprep.subr.mxu0 0.0
    %4547 = vmatpush1.msra.mxu0 0.0
    %4548 = vmatprep.subr.mxu0 0.0
    %4549 = vmatpush1.msra.mxu0 0.0
    %4550 = vmatprep.subr.mxu0 0.0
    %4551 = vmatpush1.msra.mxu0 0.0
    %4552 = vmatprep.subr.mxu0 0.0
    %4553 = vmatpush1.msra.mxu0 0.0
    %4554 = vmatprep.subr.mxu0 0.0
    %4555 = vmatpush1.msra.mxu0 0.0
    %4556 = vmatprep.mubr.f32.mxu0 0.0
    %4557 = vmatmul.mubr.f32.gmra.mrb[0].mxu0 %v4420
    %v4558 = vpop.f32.mrb[0].mxu0
    %v4559 = vadd.f32 0.0, %v4558
    %v4560 = vpop.f32.mrb[0].mxu0
    %v4561 = vadd.f32 0.0, %v4560
    %4562 = vdwg.mxu0
    %v4563 = vadd.f32 %v1970, %v4488
    %v4564 = vadd.f32 %v1972, %v4490
    %v4565 = vadd.f32 %v2131, %v4559
    %v4566 = vadd.f32 %v2133, %v4561
    %v4567 = vxor.u32 %v4563, 2147483648
    %v4568 = vmul.f32 %v4567, 1.442695
    %v4569 = vpow.pop %v4568
    %v4570 = vadd.f32 %v4569, 1.0
    %v4571 = vrcp.pop %v4570
    %v4572 = vmul.f32 1.0, %v4571
    %v4573 = vxor.u32 %v4564, 2147483648
    %v4574 = vmul.f32 %v4573, 1.442695
    %v4575 = vpow.pop %v4574
    %v4576 = vadd.f32 %v4575, 1.0
    %v4577 = vrcp.pop %v4576
    %v4578 = vmul.f32 1.0, %v4577
    %v4579 = vtanh.pop %v4565
    %v4580 = vxor.u32 %v4566, 2147483648
    %v4581 = vmul.f32 %v4580, 1.442695
    %v4582 = vpow.pop %v4581
    %v4583 = vadd.f32 %v4582, 1.0
    %v4584 = vrcp.pop %v4583
    %v4585 = vmul.f32 1.0, %v4584
    %v4586 = vmul.f32 %v4578, %v4418
    %v4587 = vmul.f32 %v4572, %v4579
    %v4588 = vadd.f32 %v4586, %v4587
    %v4589 = vtanh.pop %v4588
    %v4590 = vmul.f32 %v4585, %v4589
    %4591 = vmatprep.subr.mxu0 %v2148
    %4592 = vmatpush1.msra.mxu0 %v2147
    %4593 = vmatprep.subr.mxu0 %v2152
    %4594 = vmatpush1.msra.mxu0 %v2151
    %4595 = vmatprep.subr.mxu0 %v2156
    %4596 = vmatpush1.msra.mxu0 %v2155
    %4597 = vmatprep.subr.mxu0 %v2160
    %4598 = vmatpush1.msra.mxu0 %v2159
    %4599 = vmatprep.subr.mxu0 %v2164
    %4600 = vmatpush1.msra.mxu0 %v2163
    %4601 = vmatprep.subr.mxu0 %v2168
    %4602 = vmatpush1.msra.mxu0 %v2167
    %4603 = vmatprep.subr.mxu0 %v2172
    %4604 = vmatpush1.msra.mxu0 %v2171
    %4605 = vmatprep.subr.mxu0 %v2176
    %4606 = vmatpush1.msra.mxu0 %v2175
    %4607 = vmatprep.subr.mxu0 %v2180
    %4608 = vmatpush1.msra.mxu0 %v2179
    %4609 = vmatprep.subr.mxu0 %v2184
    %4610 = vmatpush1.msra.mxu0 %v2183
    %4611 = vmatprep.subr.mxu0 %v2188
    %4612 = vmatpush1.msra.mxu0 %v2187
    %4613 = vmatprep.subr.mxu0 %v2192
    %4614 = vmatpush1.msra.mxu0 %v2191
    %4615 = vmatprep.subr.mxu0 %v2196
    %4616 = vmatpush1.msra.mxu0 %v2195
    %4617 = vmatprep.subr.mxu0 %v2200
    %4618 = vmatpush1.msra.mxu0 %v2199
    %4619 = vmatprep.subr.mxu0 %v2204
    %4620 = vmatpush1.msra.mxu0 %v2203
    %4621 = vmatprep.subr.mxu0 %v2208
    %4622 = vmatpush1.msra.mxu0 %v2207
    %4623 = vmatprep.subr.mxu0 0.0
    %4624 = vmatpush1.msra.mxu0 0.0
    %4625 = vmatprep.subr.mxu0 0.0
    %4626 = vmatpush1.msra.mxu0 0.0
    %4627 = vmatprep.subr.mxu0 0.0
    %4628 = vmatpush1.msra.mxu0 0.0
    %4629 = vmatprep.subr.mxu0 0.0
    %4630 = vmatpush1.msra.mxu0 0.0
    %4631 = vmatprep.subr.mxu0 0.0
    %4632 = vmatpush1.msra.mxu0 0.0
    %4633 = vmatprep.subr.mxu0 0.0
    %4634 = vmatpush1.msra.mxu0 0.0
    %4635 = vmatprep.subr.mxu0 0.0
    %4636 = vmatpush1.msra.mxu0 0.0
    %4637 = vmatprep.subr.mxu0 0.0
    %4638 = vmatpush1.msra.mxu0 0.0
    %4639 = vmatprep.subr.mxu0 0.0
    %4640 = vmatpush1.msra.mxu0 0.0
    %4641 = vmatprep.subr.mxu0 0.0
    %4642 = vmatpush1.msra.mxu0 0.0
    %4643 = vmatprep.subr.mxu0 0.0
    %4644 = vmatpush1.msra.mxu0 0.0
    %4645 = vmatprep.subr.mxu0 0.0
    %4646 = vmatpush1.msra.mxu0 0.0
    %4647 = vmatprep.subr.mxu0 0.0
    %4648 = vmatpush1.msra.mxu0 0.0
    %4649 = vmatprep.subr.mxu0 0.0
    %4650 = vmatpush1.msra.mxu0 0.0
    %4651 = vmatprep.subr.mxu0 0.0
    %4652 = vmatpush1.msra.mxu0 0.0
    %4653 = vmatprep.subr.mxu0 0.0
    %4654 = vmatpush1.msra.mxu0 0.0
    %4655 = vmatprep.mubr.f32.mxu0 0.0
    %4656 = vmatmul.mubr.f32.gmra.mrb[0].mxu0 %v4590
    %v4657 = vpop.f32.mrb[0].mxu0
    %v4658 = vadd.f32 0.0, %v4657
    %v4659 = vpop.f32.mrb[0].mxu0
    %v4660 = vadd.f32 0.0, %v4659
    %4661 = vdwg.mxu0
    %4662 = vmatprep.subr.mxu0 %v2150
    %4663 = vmatpush1.msra.mxu0 %v2149
    %4664 = vmatprep.subr.mxu0 %v2154
    %4665 = vmatpush1.msra.mxu0 %v2153
    %4666 = vmatprep.subr.mxu0 %v2158
    %4667 = vmatpush1.msra.mxu0 %v2157
    %4668 = vmatprep.subr.mxu0 %v2162
    %4669 = vmatpush1.msra.mxu0 %v2161
    %4670 = vmatprep.subr.mxu0 %v2166
    %4671 = vmatpush1.msra.mxu0 %v2165
    %4672 = vmatprep.subr.mxu0 %v2170
    %4673 = vmatpush1.msra.mxu0 %v2169
    %4674 = vmatprep.subr.mxu0 %v2174
    %4675 = vmatpush1.msra.mxu0 %v2173
    %4676 = vmatprep.subr.mxu0 %v2178
    %4677 = vmatpush1.msra.mxu0 %v2177
    %4678 = vmatprep.subr.mxu0 %v2182
    %4679 = vmatpush1.msra.mxu0 %v2181
    %4680 = vmatprep.subr.mxu0 %v2186
    %4681 = vmatpush1.msra.mxu0 %v2185
    %4682 = vmatprep.subr.mxu0 %v2190
    %4683 = vmatpush1.msra.mxu0 %v2189
    %4684 = vmatprep.subr.mxu0 %v2194
    %4685 = vmatpush1.msra.mxu0 %v2193
    %4686 = vmatprep.subr.mxu0 %v2198
    %4687 = vmatpush1.msra.mxu0 %v2197
    %4688 = vmatprep.subr.mxu0 %v2202
    %4689 = vmatpush1.msra.mxu0 %v2201
    %4690 = vmatprep.subr.mxu0 %v2206
    %4691 = vmatpush1.msra.mxu0 %v2205
    %4692 = vmatprep.subr.mxu0 %v2210
    %4693 = vmatpush1.msra.mxu0 %v2209
    %4694 = vmatprep.subr.mxu0 0.0
    %4695 = vmatpush1.msra.mxu0 0.0
    %4696 = vmatprep.subr.mxu0 0.0
    %4697 = vmatpush1.msra.mxu0 0.0
    %4698 = vmatprep.subr.mxu0 0.0
    %4699 = vmatpush1.msra.mxu0 0.0
    %4700 = vmatprep.subr.mxu0 0.0
    %4701 = vmatpush1.msra.mxu0 0.0
    %4702 = vmatprep.subr.mxu0 0.0
    %4703 = vmatpush1.msra.mxu0 0.0
    %4704 = vmatprep.subr.mxu0 0.0
    %4705 = vmatpush1.msra.mxu0 0.0
    %4706 = vmatprep.subr.mxu0 0.0
    %4707 = vmatpush1.msra.mxu0 0.0
    %4708 = vmatprep.subr.mxu0 0.0
    %4709 = vmatpush1.msra.mxu0 0.0
    %4710 = vmatprep.subr.mxu0 0.0
    %4711 = vmatpush1.msra.mxu0 0.0
    %4712 = vmatprep.subr.mxu0 0.0
    %4713 = vmatpush1.msra.mxu0 0.0
    %4714 = vmatprep.subr.mxu0 0.0
    %4715 = vmatpush1.msra.mxu0 0.0
    %4716 = vmatprep.subr.mxu0 0.0
    %4717 = vmatpush1.msra.mxu0 0.0
    %4718 = vmatprep.subr.mxu0 0.0
    %4719 = vmatpush1.msra.mxu0 0.0
    %4720 = vmatprep.subr.mxu0 0.0
    %4721 = vmatpush1.msra.mxu0 0.0
    %4722 = vmatprep.subr.mxu0 0.0
    %4723 = vmatpush1.msra.mxu0 0.0
    %4724 = vmatprep.subr.mxu0 0.0
    %4725 = vmatpush1.msra.mxu0 0.0
    %4726 = vmatprep.mubr.f32.mxu0 0.0
    %4727 = vmatmul.mubr.f32.gmra.mrb[0].mxu0 %v4590
    %v4728 = vpop.f32.mrb[0].mxu0
    %v4729 = vadd.f32 0.0, %v4728
    %v4730 = vpop.f32.mrb[0].mxu0
    %v4731 = vadd.f32 0.0, %v4730
    %4732 = vdwg.mxu0
    %v4733 = vadd.f32 %v1976, %v4658
    %v4734 = vadd.f32 %v1978, %v4660
    %v4735 = vadd.f32 %v2137, %v4729
    %v4736 = vadd.f32 %v2139, %v4731
    %v4737 = vxor.u32 %v4733, 2147483648
    %v4738 = vmul.f32 %v4737, 1.442695
    %v4739 = vpow.pop %v4738
    %v4740 = vadd.f32 %v4739, 1.0
    %v4741 = vrcp.pop %v4740
    %v4742 = vmul.f32 1.0, %v4741
    %v4743 = vxor.u32 %v4734, 2147483648
    %v4744 = vmul.f32 %v4743, 1.442695
    %v4745 = vpow.pop %v4744
    %v4746 = vadd.f32 %v4745, 1.0
    %v4747 = vrcp.pop %v4746
    %v4748 = vmul.f32 1.0, %v4747
    %v4749 = vtanh.pop %v4735
    %v4750 = vxor.u32 %v4736, 2147483648
    %v4751 = vmul.f32 %v4750, 1.442695
    %v4752 = vpow.pop %v4751
    %v4753 = vadd.f32 %v4752, 1.0
    %v4754 = vrcp.pop %v4753
    %v4755 = vmul.f32 1.0, %v4754
    %v4756 = vmul.f32 %v4748, %v4588
    %v4757 = vmul.f32 %v4742, %v4749
    %v4758 = vadd.f32 %v4756, %v4757
    %v4759 = vtanh.pop %v4758
    %v4760 = vmul.f32 %v4755, %v4759
    %4761 = vmatprep.subr.mxu0 %v2148
    %4762 = vmatpush1.msra.mxu0 %v2147
    %4763 = vmatprep.subr.mxu0 %v2152
    %4764 = vmatpush1.msra.mxu0 %v2151
    %4765 = vmatprep.subr.mxu0 %v2156
    %4766 = vmatpush1.msra.mxu0 %v2155
    %4767 = vmatprep.subr.mxu0 %v2160
    %4768 = vmatpush1.msra.mxu0 %v2159
    %4769 = vmatprep.subr.mxu0 %v2164
    %4770 = vmatpush1.msra.mxu0 %v2163
    %4771 = vmatprep.subr.mxu0 %v2168
    %4772 = vmatpush1.msra.mxu0 %v2167
    %4773 = vmatprep.subr.mxu0 %v2172
    %4774 = vmatpush1.msra.mxu0 %v2171
    %4775 = vmatprep.subr.mxu0 %v2176
    %4776 = vmatpush1.msra.mxu0 %v2175
    %4777 = vmatprep.subr.mxu0 %v2180
    %4778 = vmatpush1.msra.mxu0 %v2179
    %4779 = vmatprep.subr.mxu0 %v2184
    %4780 = vmatpush1.msra.mxu0 %v2183
    %4781 = vmatprep.subr.mxu0 %v2188
    %4782 = vmatpush1.msra.mxu0 %v2187
    %4783 = vmatprep.subr.mxu0 %v2192
    %4784 = vmatpush1.msra.mxu0 %v2191
    %4785 = vmatprep.subr.mxu0 %v2196
    %4786 = vmatpush1.msra.mxu0 %v2195
    %4787 = vmatprep.subr.mxu0 %v2200
    %4788 = vmatpush1.msra.mxu0 %v2199
    %4789 = vmatprep.subr.mxu0 %v2204
    %4790 = vmatpush1.msra.mxu0 %v2203
    %4791 = vmatprep.subr.mxu0 %v2208
    %4792 = vmatpush1.msra.mxu0 %v2207
    %4793 = vmatprep.subr.mxu0 0.0
    %4794 = vmatpush1.msra.mxu0 0.0
    %4795 = vmatprep.subr.mxu0 0.0
    %4796 = vmatpush1.msra.mxu0 0.0
    %4797 = vmatprep.subr.mxu0 0.0
    %4798 = vmatpush1.msra.mxu0 0.0
    %4799 = vmatprep.subr.mxu0 0.0
    %4800 = vmatpush1.msra.mxu0 0.0
    %4801 = vmatprep.subr.mxu0 0.0
    %4802 = vmatpush1.msra.mxu0 0.0
    %4803 = vmatprep.subr.mxu0 0.0
    %4804 = vmatpush1.msra.mxu0 0.0
    %4805 = vmatprep.subr.mxu0 0.0
    %4806 = vmatpush1.msra.mxu0 0.0
    %4807 = vmatprep.subr.mxu0 0.0
    %4808 = vmatpush1.msra.mxu0 0.0
    %4809 = vmatprep.subr.mxu0 0.0
    %4810 = vmatpush1.msra.mxu0 0.0
    %4811 = vmatprep.subr.mxu0 0.0
    %4812 = vmatpush1.msra.mxu0 0.0
    %4813 = vmatprep.subr.mxu0 0.0
    %4814 = vmatpush1.msra.mxu0 0.0
    %4815 = vmatprep.subr.mxu0 0.0
    %4816 = vmatpush1.msra.mxu0 0.0
    %4817 = vmatprep.subr.mxu0 0.0
    %4818 = vmatpush1.msra.mxu0 0.0
    %4819 = vmatprep.subr.mxu0 0.0
    %4820 = vmatpush1.msra.mxu0 0.0
    %4821 = vmatprep.subr.mxu0 0.0
    %4822 = vmatpush1.msra.mxu0 0.0
    %4823 = vmatprep.subr.mxu0 0.0
    %4824 = vmatpush1.msra.mxu0 0.0
    %4825 = vmatprep.mubr.f32.mxu0 0.0
    %4826 = vmatmul.mubr.f32.gmra.mrb[0].mxu0 %v4760
    %v4827 = vpop.f32.mrb[0].mxu0
    %v4828 = vadd.f32 0.0, %v4827
    %v4829 = vpop.f32.mrb[0].mxu0
    %v4830 = vadd.f32 0.0, %v4829
    %4831 = vdwg.mxu0
    %4832 = vmatprep.subr.mxu0 %v2150
    %4833 = vmatpush1.msra.mxu0 %v2149
    %4834 = vmatprep.subr.mxu0 %v2154
    %4835 = vmatpush1.msra.mxu0 %v2153
    %4836 = vmatprep.subr.mxu0 %v2158
    %4837 = vmatpush1.msra.mxu0 %v2157
    %4838 = vmatprep.subr.mxu0 %v2162
    %4839 = vmatpush1.msra.mxu0 %v2161
    %4840 = vmatprep.subr.mxu0 %v2166
    %4841 = vmatpush1.msra.mxu0 %v2165
    %4842 = vmatprep.subr.mxu0 %v2170
    %4843 = vmatpush1.msra.mxu0 %v2169
    %4844 = vmatprep.subr.mxu0 %v2174
    %4845 = vmatpush1.msra.mxu0 %v2173
    %4846 = vmatprep.subr.mxu0 %v2178
    %4847 = vmatpush1.msra.mxu0 %v2177
    %4848 = vmatprep.subr.mxu0 %v2182
    %4849 = vmatpush1.msra.mxu0 %v2181
    %4850 = vmatprep.subr.mxu0 %v2186
    %4851 = vmatpush1.msra.mxu0 %v2185
    %4852 = vmatprep.subr.mxu0 %v2190
    %4853 = vmatpush1.msra.mxu0 %v2189
    %4854 = vmatprep.subr.mxu0 %v2194
    %4855 = vmatpush1.msra.mxu0 %v2193
    %4856 = vmatprep.subr.mxu0 %v2198
    %4857 = vmatpush1.msra.mxu0 %v2197
    %4858 = vmatprep.subr.mxu0 %v2202
    %4859 = vmatpush1.msra.mxu0 %v2201
    %4860 = vmatprep.subr.mxu0 %v2206
    %4861 = vmatpush1.msra.mxu0 %v2205
    %4862 = vmatprep.subr.mxu0 %v2210
    %4863 = vmatpush1.msra.mxu0 %v2209
    %4864 = vmatprep.subr.mxu0 0.0
    %4865 = vmatpush1.msra.mxu0 0.0
    %4866 = vmatprep.subr.mxu0 0.0
    %4867 = vmatpush1.msra.mxu0 0.0
    %4868 = vmatprep.subr.mxu0 0.0
    %4869 = vmatpush1.msra.mxu0 0.0
    %4870 = vmatprep.subr.mxu0 0.0
    %4871 = vmatpush1.msra.mxu0 0.0
    %4872 = vmatprep.subr.mxu0 0.0
    %4873 = vmatpush1.msra.mxu0 0.0
    %4874 = vmatprep.subr.mxu0 0.0
    %4875 = vmatpush1.msra.mxu0 0.0
    %4876 = vmatprep.subr.mxu0 0.0
    %4877 = vmatpush1.msra.mxu0 0.0
    %4878 = vmatprep.subr.mxu0 0.0
    %4879 = vmatpush1.msra.mxu0 0.0
    %4880 = vmatprep.subr.mxu0 0.0
    %4881 = vmatpush1.msra.mxu0 0.0
    %4882 = vmatprep.subr.mxu0 0.0
    %4883 = vmatpush1.msra.mxu0 0.0
    %4884 = vmatprep.subr.mxu0 0.0
    %4885 = vmatpush1.msra.mxu0 0.0
    %4886 = vmatprep.subr.mxu0 0.0
    %4887 = vmatpush1.msra.mxu0 0.0
    %4888 = vmatprep.subr.mxu0 0.0
    %4889 = vmatpush1.msra.mxu0 0.0
    %4890 = vmatprep.subr.mxu0 0.0
    %4891 = vmatpush1.msra.mxu0 0.0
    %4892 = vmatprep.subr.mxu0 0.0
    %4893 = vmatpush1.msra.mxu0 0.0
    %4894 = vmatprep.subr.mxu0 0.0
    %4895 = vmatpush1.msra.mxu0 0.0
    %4896 = vmatprep.mubr.f32.mxu0 0.0
    %4897 = vmatmul.mubr.f32.gmra.mrb[0].mxu0 %v4760
    %v4898 = vpop.f32.mrb[0].mxu0
    %v4899 = vadd.f32 0.0, %v4898
    %v4900 = vpop.f32.mrb[0].mxu0
    %v4901 = vadd.f32 0.0, %v4900
    %4902 = vdwg.mxu0
    %v4903 = vadd.f32 %v1982, %v4828
    %v4904 = vadd.f32 %v1984, %v4830
    %v4905 = vadd.f32 %v2143, %v4899
    %v4906 = vadd.f32 %v2145, %v4901
    %v4907 = vxor.u32 %v4903, 2147483648
    %v4908 = vmul.f32 %v4907, 1.442695
    %v4909 = vpow.pop %v4908
    %v4910 = vadd.f32 %v4909, 1.0
    %v4911 = vrcp.pop %v4910
    %v4912 = vmul.f32 1.0, %v4911
    %v4913 = vxor.u32 %v4904, 2147483648
    %v4914 = vmul.f32 %v4913, 1.442695
    %v4915 = vpow.pop %v4914
    %v4916 = vadd.f32 %v4915, 1.0
    %v4917 = vrcp.pop %v4916
    %v4918 = vmul.f32 1.0, %v4917
    %v4919 = vtanh.pop %v4905
    %v4920 = vxor.u32 %v4906, 2147483648
    %v4921 = vmul.f32 %v4920, 1.442695
    %v4922 = vpow.pop %v4921
    %v4923 = vadd.f32 %v4922, 1.0
    %v4924 = vrcp.pop %v4923
    %v4925 = vmul.f32 1.0, %v4924
    %v4926 = vmul.f32 %v4918, %v4758
    %v4927 = vmul.f32 %v4912, %v4919
    %v4928 = vadd.f32 %v4926, %v4927
    %v4929 = vtanh.pop %v4928
    %v4930 = vmul.f32 %v4925, %v4929
    %v4931 = vld [vmem:[#allocation5] sm:$0xff]
    %v4932 = vld [vmem:[#allocation5 + $0x8] sm:$0xff]
    %v4933 = vld [vmem:[#allocation5 + $0x10] sm:$0xff]
    %v4934 = vld [vmem:[#allocation5 + $0x18] sm:$0xff]
    %v4935 = vld [vmem:[#allocation5 + $0x20] sm:$0xff]
    %v4936 = vld [vmem:[#allocation5 + $0x28] sm:$0xff]
    %v4937 = vld [vmem:[#allocation5 + $0x30] sm:$0xff]
    %v4938 = vld [vmem:[#allocation5 + $0x38] sm:$0xff]
    %v4939 = vld [vmem:[#allocation5 + $0x40] sm:$0xff]
    %v4940 = vld [vmem:[#allocation5 + $0x48] sm:$0xff]
    %v4941 = vld [vmem:[#allocation5 + $0x50] sm:$0xff]
    %v4942 = vld [vmem:[#allocation5 + $0x58] sm:$0xff]
    %v4943 = vld [vmem:[#allocation5 + $0x60] sm:$0xff]
    %v4944 = vld [vmem:[#allocation5 + $0x68] sm:$0xff]
    %v4945 = vld [vmem:[#allocation5 + $0x70] sm:$0xff]
    %v4946 = vld [vmem:[#allocation5 + $0x78] sm:$0xff]
    %v4947 = vld [vmem:[%s11] sm:$0x1]
    %v4949 = vlaneseq
    %v4950 = vshrl.u32 %v4949, 7
    %v4951 = vsub.s32 0, %v4950
    %v4952 = vrot.slane %v4947, %v4951
    %4954 = vmatprep.subr.mxu0 0.0
    %4955 = vmatpush1.msra.mxu0 %v4931
    %4956 = vmatprep.subr.mxu0 0.0
    %4957 = vmatpush1.msra.mxu0 %v4932
    %4958 = vmatprep.subr.mxu0 0.0
    %4959 = vmatpush1.msra.mxu0 %v4933
    %4960 = vmatprep.subr.mxu0 0.0
    %4961 = vmatpush1.msra.mxu0 %v4934
    %4962 = vmatprep.subr.mxu0 0.0
    %4963 = vmatpush1.msra.mxu0 %v4935
    %4964 = vmatprep.subr.mxu0 0.0
    %4965 = vmatpush1.msra.mxu0 %v4936
    %4966 = vmatprep.subr.mxu0 0.0
    %4967 = vmatpush1.msra.mxu0 %v4937
    %4968 = vmatprep.subr.mxu0 0.0
    %4969 = vmatpush1.msra.mxu0 %v4938
    %4970 = vmatprep.subr.mxu0 0.0
    %4971 = vmatpush1.msra.mxu0 %v4939
    %4972 = vmatprep.subr.mxu0 0.0
    %4973 = vmatpush1.msra.mxu0 %v4940
    %4974 = vmatprep.subr.mxu0 0.0
    %4975 = vmatpush1.msra.mxu0 %v4941
    %4976 = vmatprep.subr.mxu0 0.0
    %4977 = vmatpush1.msra.mxu0 %v4942
    %4978 = vmatprep.subr.mxu0 0.0
    %4979 = vmatpush1.msra.mxu0 %v4943
    %4980 = vmatprep.subr.mxu0 0.0
    %4981 = vmatpush1.msra.mxu0 %v4944
    %4982 = vmatprep.subr.mxu0 0.0
    %4983 = vmatpush1.msra.mxu0 %v4945
    %4984 = vmatprep.subr.mxu0 0.0
    %4985 = vmatpush1.msra.mxu0 %v4946
    %4986 = vmatprep.subr.mxu0 0.0
    %4987 = vmatpush1.msra.mxu0 0.0
    %4988 = vmatprep.subr.mxu0 0.0
    %4989 = vmatpush1.msra.mxu0 0.0
    %4990 = vmatprep.subr.mxu0 0.0
    %4991 = vmatpush1.msra.mxu0 0.0
    %4992 = vmatprep.subr.mxu0 0.0
    %4993 = vmatpush1.msra.mxu0 0.0
    %4994 = vmatprep.subr.mxu0 0.0
    %4995 = vmatpush1.msra.mxu0 0.0
    %4996 = vmatprep.subr.mxu0 0.0
    %4997 = vmatpush1.msra.mxu0 0.0
    %4998 = vmatprep.subr.mxu0 0.0
    %4999 = vmatpush1.msra.mxu0 0.0
    %5000 = vmatprep.subr.mxu0 0.0
    %5001 = vmatpush1.msra.mxu0 0.0
    %5002 = vmatprep.subr.mxu0 0.0
    %5003 = vmatpush1.msra.mxu0 0.0
    %5004 = vmatprep.subr.mxu0 0.0
    %5005 = vmatpush1.msra.mxu0 0.0
    %5006 = vmatprep.subr.mxu0 0.0
    %5007 = vmatpush1.msra.mxu0 0.0
    %5008 = vmatprep.subr.mxu0 0.0
    %5009 = vmatpush1.msra.mxu0 0.0
    %5010 = vmatprep.subr.mxu0 0.0
    %5011 = vmatpush1.msra.mxu0 0.0
    %5012 = vmatprep.subr.mxu0 0.0
    %5013 = vmatpush1.msra.mxu0 0.0
    %5014 = vmatprep.subr.mxu0 0.0
    %5015 = vmatpush1.msra.mxu0 0.0
    %5016 = vmatprep.subr.mxu0 0.0
    %5017 = vmatpush1.msra.mxu0 0.0
    %5018 = vmatprep.mubr.f32.mxu0 0.0
    %5019 = vmatmul.mubr.f32.gmra.mrb[0].mxu0 %v4930
    %v5020 = vpop.f32.mrb[0].mxu0
    %v5021 = vadd.f32 %v4952, %v5020
    %v5022 = vpop.f32.mrb[0].mxu0
    %5023 = vdwg.mxu0
    %v5024 = vmax.f32 %v5021, 0.0
    %v5025 = vld [vmem:[%s12] sm:$0x1]
    %v5027 = vlaneseq
    %v5028 = vshrl.u32 %v5027, 7
    %v5029 = vsub.s32 0, %v5028
    %v5030 = vrot.slane %v5025, %v5029
    %v5032 = vmul.f32 %v5024, %v5030
    %5033 = vadd.xlane.f32.xlu0 %v5032
    %v5034 = vpop.xlane.xlu0 %5033
    %v5035 = vld [vmem:[#allocation2] sm:$0x1]
    %v5037 = vlaneseq
    %v5038 = vshrl.u32 %v5037, 7
    %v5039 = vsub.s32 0, %v5038
    %v5040 = vrot.slane %v5035, %v5039
    %v5042 = vadd.f32 %v5034, %v5040
    %vm5043 = vcmask 1024
    %5044 = vst.msk [vmem:[%s14] sm:$0x3] %vm5043, %v5042
    // Predicated region
    $region66: #{tpu_custom_call.1} parent=1 // pred_check
      _
    $region67: #{tpu_custom_call.1} parent=1 // pred_check_branch
      %5046 = sbr.rel (0) target = $region69
    $region68: #{tpu_custom_call.1} parent=1 // pred_region
      _
    $region69: #{tpu_custom_call.1} parent=1 // pred_fallthru
      _
    // Predicated region
    $region70: #{tpu_custom_call.1} parent=1 // pred_check
      _
    $region71: #{tpu_custom_call.1} parent=1 // pred_check_branch
      %5048 = sbr.rel (0) target = $region73
    $region72: #{tpu_custom_call.1} parent=1 // pred_region
      _
    $region73: #{tpu_custom_call.1} parent=1 // pred_fallthru
      _
    %5049 = vsyncpa [#allocation4], 1
    %5050 = vsyncpa [#allocation6], 1

</llo_original>
